<compile_context>
chip_gen: v6e
topology: v6e:2x2x1
jax: 0.10.0
libtpu: 0.0.40
codegen_flags: <defaults>
</compile_context>

<pallas_src>
import functools

import numpy as np

import jax
import jax.numpy as jnp
from jax.experimental import pallas as pl
from jax.experimental.pallas import tpu as pltpu


# ------------------------------- in-kernel helpers -------------------------------

def _ln(x, g, b, eps):
    """LayerNorm over the last (lane) axis with f32 statistics."""
    mu = jnp.mean(x, axis=-1, keepdims=True)
    xc = x - mu
    var = jnp.mean(xc * xc, axis=-1, keepdims=True)
    return xc * jax.lax.rsqrt(var + eps) * g + b


def _mm(a, w):
    """bf16 MXU matmul with f32 accumulation (w is stored bf16)."""
    return jnp.dot(a.astype(jnp.bfloat16), w, preferred_element_type=jnp.float32)


# ------------------------------- the fused kernel --------------------------------

def _fsra_kernel(
        # inputs -------------------------------------------------------------
        xp_ref, patch_w_ref, patch_b_ref, cls_pos_ref, pos_rest_ref,
        ln1_g_ref, ln1_b_ref, qkv_w_ref, qkv_b_ref, proj_w_ref, proj_b_ref,
        ln2_g_ref, ln2_b_ref, fc1_w_ref, fc1_b_ref, fc2_w_ref, fc2_b_ref,
        norm_g_ref, norm_b_ref,
        fusion_w_ref, fusion_b_ref, fusion_s_ref, fusion_t_ref,
        cb_lin_w_ref, cb_lin_b_ref, cb_s_ref, cb_t_ref, cb_cls_w_ref, cb_cls_b_ref,
        # outputs ------------------------------------------------------------
        feats_out_ref, logits_out_ref,
        # scratch ------------------------------------------------------------
        tok_sc, feats_sc, logits_sc,
        *, heads, ln_eps, scale, bs, ppb):
    """One grid step = (one image of the packed two-view batch, one transformer block).

    grid = (B, depth); batch is 'parallel', depth is 'arbitrary'.  Tokens live in the
    VMEM scratch `tok_sc` for the whole depth loop.  Patch embedding runs at d == 0 and
    the whole FSRA head (pooling / fusion / classifiers) at d == depth - 1.
    """
    d = pl.program_id(1)
    last = pl.num_programs(1) - 1
    D = tok_sc.shape[-1]
    dh = D // heads

    # ---- d == 0: patch embedding + [cls] token + positional embedding ----
    @pl.when(d == 0)
    def _embed():
        ptok = _mm(xp_ref[0], patch_w_ref[...]) + patch_b_ref[...] + pos_rest_ref[...]
        tok_sc[0:1, :] = cls_pos_ref[...]          # cls token (+ its positional embedding)
        tok_sc[1:, :] = ptok

    # ---- transformer block d (pre-norm ViT block, eval mode) ----
    x = tok_sc[...]                                            # (T, D) f32

    # LN1 + QKV
    h = _ln(x, ln1_g_ref[0], ln1_b_ref[0], ln_eps)
    qkv = _mm(h, qkv_w_ref[0]) + qkv_b_ref[0]                  # (T, 3D)

    # Multi-head self-attention: head split via static lane slices; the output projection
    # is distributed over heads (concat_h(o_h) @ W  ==  sum_h o_h @ W[h*dh:(h+1)*dh, :]).
    pw = proj_w_ref[0]                                         # (D, D) bf16
    attn_proj = proj_b_ref[0]                                  # (1, D) f32
    for hh in range(heads):
        lo, hi = hh * dh, (hh + 1) * dh
        q = qkv[:, lo:hi].astype(jnp.bfloat16)
        k = qkv[:, D + lo:D + hi].astype(jnp.bfloat16)
        v = qkv[:, 2 * D + lo:2 * D + hi].astype(jnp.bfloat16)
        s = jnp.einsum('td,sd->ts', q, k,
                       preferred_element_type=jnp.float32) * scale
        s = s - jnp.max(s, axis=-1, keepdims=True)
        p = jnp.exp(s)
        p = p / jnp.sum(p, axis=-1, keepdims=True)             # attn dropout: identity (eval)
        o_h = jnp.dot(p.astype(jnp.bfloat16), v, preferred_element_type=jnp.float32)
        attn_proj = attn_proj + _mm(o_h, pw[lo:hi, :])
    x = x + attn_proj                                          # DropPath: identity (eval)

    # LN2 + MLP + residual
    h = _ln(x, ln2_g_ref[0], ln2_b_ref[0], ln_eps)
    h1 = _mm(h, fc1_w_ref[0]) + fc1_b_ref[0]
    # TODO(synk): PyTorch/timm nn.GELU is the exact erf form; tanh approximation used for a
    # guaranteed Mosaic lowering (small systematic numeric difference in the MLP path).
    h1 = jax.nn.gelu(h1, approximate=True)
    x = x + _mm(h1, fc2_w_ref[0]) + fc2_b_ref[0]               # DropPath: identity (eval)
    tok_sc[...] = x

    # ---- d == depth-1: final LN + FSRA head (pooling, fusion, all classifiers) ----
    @pl.when(d == last)
    def _head():
        toks = _ln(x, norm_g_ref[...], norm_b_ref[...], ln_eps)     # (T, D)
        nP = toks.shape[0] - 1

        # global token + local block mean-pooling (last block takes the remainder,
        # matching the PyTorch slicing semantics).
        feats_sc[0:1, :] = toks[0:1, :]
        for i in range(bs):
            s0 = i * ppb
            e0 = s0 + ppb if i < bs - 1 else nP
            feats_sc[1 + i:2 + i, :] = jnp.mean(toks[1 + s0:1 + e0, :],
                                                axis=0, keepdims=True)

        # fusion: Linear(concat([global] + locals)) -> BN(eval affine) -> ReLU -> Dropout(id)
        # concat @ W  ==  sum_g feats[g] @ W_g   (fusion_w stored chunked (bs+1, D, D))
        acc = fusion_b_ref[...]
        for g in range(bs + 1):
            acc = acc + _mm(feats_sc[g:g + 1, :], fusion_w_ref[g])
        fused = jnp.maximum(acc * fusion_s_ref[...] + fusion_t_ref[...], 0.0)
        feats_sc[bs + 1:bs + 2, :] = fused
        feats_out_ref[0] = feats_sc[...]

        # all bs+2 classifier heads: Linear -> BN(eval affine) -> Dropout(id) -> Linear
        for g in range(bs + 2):
            hc = _mm(feats_sc[g:g + 1, :], cb_lin_w_ref[g]) + cb_lin_b_ref[g]
            hc = hc * cb_s_ref[g] + cb_t_ref[g]
            logits_sc[g:g + 1, :] = _mm(hc, cb_cls_w_ref[g]) + cb_cls_b_ref[g]
        logits_out_ref[0] = logits_sc[...]


# --------------------------- parameter construction -------------------------

def _bn_affine(gamma, beta, mean, var, eps=1e-5):
    """BatchNorm eval mode -> per-channel (scale, shift), computed in f32."""
    scale = gamma * jax.lax.rsqrt(var + eps)
    return scale, beta - mean * scale


def init_params(key, *, C, patch, n_patches, D, heads, depth, mlp_hidden,
                num_classes, bottleneck, block_size):
    del heads  # layout does not depend on head count
    keys = iter(jax.random.split(key, 64))

    def nrm(shape, dtype=jnp.bfloat16, std=0.02):
        return (std * jax.random.normal(next(keys), shape, jnp.float32)).astype(dtype)

    G = block_size + 2
    p = {}
    # ViT backbone (scaled-down vit_small_patch16_224_fsra); matmul weights stored bf16.
    p["patch_w"] = nrm((C * patch * patch, D))
    p["patch_b"] = nrm((D,), jnp.float32)
    p["cls"] = nrm((1, 1, D), jnp.float32)
    p["pos"] = nrm((1, 1 + n_patches, D), jnp.float32)
    p["ln1_g"] = jnp.ones((depth, 1, D), jnp.float32)
    p["ln1_b"] = jnp.zeros((depth, 1, D), jnp.float32)
    p["qkv_w"] = nrm((depth, D, 3 * D))
    p["qkv_b"] = nrm((depth, 1, 3 * D), jnp.float32)
    p["proj_w"] = nrm((depth, D, D))
    p["proj_b"] = nrm((depth, 1, D), jnp.float32)
    p["ln2_g"] = jnp.ones((depth, 1, D), jnp.float32)
    p["ln2_b"] = jnp.zeros((depth, 1, D), jnp.float32)
    p["fc1_w"] = nrm((depth, D, mlp_hidden))
    p["fc1_b"] = nrm((depth, 1, mlp_hidden), jnp.float32)
    p["fc2_w"] = nrm((depth, mlp_hidden, D))
    p["fc2_b"] = nrm((depth, 1, D), jnp.float32)
    p["norm_g"] = jnp.ones((D,), jnp.float32)
    p["norm_b"] = jnp.zeros((D,), jnp.float32)

    # classifier heads, stacked: 0 = global, 1..block_size = local, block_size+1 = final
    p["cb_lin_w"] = nrm((G, D, bottleneck))
    p["cb_lin_b"] = nrm((G, 1, bottleneck), jnp.float32)
    p["cb_bn_g"] = jnp.ones((G, bottleneck), jnp.float32)
    p["cb_bn_b"] = jnp.zeros((G, bottleneck), jnp.float32)
    p["cb_bn_m"] = nrm((G, bottleneck), jnp.float32)
    p["cb_bn_v"] = jnp.ones((G, bottleneck), jnp.float32)
    p["cb_cls_w"] = nrm((G, bottleneck, num_classes))
    p["cb_cls_b"] = nrm((G, 1, num_classes), jnp.float32)

    # fusion: Linear(D*(block_size+1) -> D) stored chunked as (block_size+1, D, D)
    p["fusion_w"] = nrm((block_size + 1, D, D))
    p["fusion_b"] = nrm((D,), jnp.float32)
    p["fusion_bn_g"] = jnp.ones((D,), jnp.float32)
    p["fusion_bn_b"] = jnp.zeros((D,), jnp.float32)
    p["fusion_bn_m"] = nrm((D,), jnp.float32)
    p["fusion_bn_v"] = jnp.ones((D,), jnp.float32)
    return p


# ------------------------------ forward passes -------------------------------

@functools.partial(jax.jit, static_argnames=("patch", "heads", "block_size"))
def fsra_forward(params, x, *, patch, heads, block_size):
    """FSRAModel forward: x (B, C, H, W) -> (predictions list, features list)."""
    B, C, H, W = x.shape
    D = params["patch_b"].shape[0]
    ph, pw = H // patch, W // patch
    nP = ph * pw
    T = nP + 1
    Cpp = C * patch * patch
    depth = params["qkv_w"].shape[0]
    Hm = params["fc1_w"].shape[-1]
    Kb = params["cb_lin_w"].shape[-1]
    Cc = params["cb_cls_w"].shape[-1]
    bs = min(block_size, nP)
    assert bs == block_size, "fusion layer requires n_patches >= block_size"
    ppb = nP // bs
    G = bs + 2
    dh = D // heads

    # --- XLA-side glue (fused for free under jit): patch extraction + BN folding ---
    xp = x.reshape(B, C, ph, patch, pw, patch).transpose(0, 2, 4, 1, 3, 5)
    xp = xp.reshape(B, nP, Cpp).astype(jnp.float32)

    cls_pos = (params["cls"].reshape(1, D) + params["pos"][0, 0:1]).astype(jnp.float32)
    pos_rest = params["pos"][0, 1:].astype(jnp.float32)

    f_s, f_t = _bn_affine(params["fusion_bn_g"], params["fusion_bn_b"],
                          params["fusion_bn_m"], params["fusion_bn_v"])
    idx = np.array([0] + list(range(1, bs + 1)) + [block_size + 1], np.int32)
    cb_s, cb_t = _bn_affine(params["cb_bn_g"][idx], params["cb_bn_b"][idx],
                            params["cb_bn_m"][idx], params["cb_bn_v"][idx])

    im_b = lambda b, d: (b, 0, 0)      # per-image block, constant over the depth axis
    im_d = lambda b, d: (d, 0, 0)      # per-transformer-block weights, streamed over depth
    im_c2 = lambda b, d: (0, 0)
    im_c3 = lambda b, d: (0, 0, 0)

    in_specs = [
        pl.BlockSpec((1, nP, Cpp), im_b),        # xp
        pl.BlockSpec((Cpp, D), im_c2),           # patch_w
        pl.BlockSpec((1, D), im_c2),             # patch_b
        pl.BlockSpec((1, D), im_c2),             # cls_pos
        pl.BlockSpec((nP, D), im_c2),            # pos_rest
        pl.BlockSpec((1, 1, D), im_d),           # ln1_g
        pl.BlockSpec((1, 1, D), im_d),           # ln1_b
        pl.BlockSpec((1, D, 3 * D), im_d),       # qkv_w
        pl.BlockSpec((1, 1, 3 * D), im_d),       # qkv_b
        pl.BlockSpec((1, D, D), im_d),           # proj_w
        pl.BlockSpec((1, 1, D), im_d),           # proj_b
        pl.BlockSpec((1, 1, D), im_d),           # ln2_g
        pl.BlockSpec((1, 1, D), im_d),           # ln2_b
        pl.BlockSpec((1, D, Hm), im_d),          # fc1_w
        pl.BlockSpec((1, 1, Hm), im_d),          # fc1_b
        pl.BlockSpec((1, Hm, D), im_d),          # fc2_w
        pl.BlockSpec((1, 1, D), im_d),           # fc2_b
        pl.BlockSpec((1, D), im_c2),             # norm_g
        pl.BlockSpec((1, D), im_c2),             # norm_b
        pl.BlockSpec((bs + 1, D, D), im_c3),     # fusion_w (chunked)
        pl.BlockSpec((1, D), im_c2),             # fusion_b
        pl.BlockSpec((1, D), im_c2),             # fusion BN scale
        pl.BlockSpec((1, D), im_c2),             # fusion BN shift
        pl.BlockSpec((G, D, Kb), im_c3),         # cb_lin_w
        pl.BlockSpec((G, 1, Kb), im_c3),         # cb_lin_b
        pl.BlockSpec((G, 1, Kb), im_c3),         # cb BN scale
        pl.BlockSpec((G, 1, Kb), im_c3),         # cb BN shift
        pl.BlockSpec((G, Kb, Cc), im_c3),        # cb_cls_w
        pl.BlockSpec((G, 1, Cc), im_c3),         # cb_cls_b
    ]
    out_specs = [
        pl.BlockSpec((1, G, D), im_b),           # features: [global, locals..., fused]
        pl.BlockSpec((1, G, Cc), im_b),          # logits per classifier head
    ]

    kernel = functools.partial(_fsra_kernel, heads=heads, ln_eps=1e-6,
                               scale=dh ** -0.5, bs=bs, ppb=ppb)

    # TODO(synk): at the full FSRA config (D=768, T=257, mlp=3072, depth=12) add M-tiling
    # over tokens and set vmem_limit_bytes explicitly (v7x: 64 MiB physical VMEM).
    feats_all, logits = pl.pallas_call(
        kernel,
        out_shape=[jax.ShapeDtypeStruct((B, G, D), jnp.float32),
                   jax.ShapeDtypeStruct((B, G, Cc), jnp.float32)],
        grid=(B, depth),
        in_specs=in_specs,
        out_specs=out_specs,
        scratch_shapes=[pltpu.VMEM((T, D), jnp.float32),    # resident tokens
                        pltpu.VMEM((G, D), jnp.float32),    # per-image feature rows
                        pltpu.VMEM((G, Cc), jnp.float32)],  # per-image logit rows
        compiler_params=pltpu.CompilerParams(
            dimension_semantics=("parallel", "arbitrary")),
    )(
        xp, params["patch_w"], params["patch_b"].reshape(1, D),
        cls_pos, pos_rest,
        params["ln1_g"], params["ln1_b"], params["qkv_w"], params["qkv_b"],
        params["proj_w"], params["proj_b"], params["ln2_g"], params["ln2_b"],
        params["fc1_w"], params["fc1_b"], params["fc2_w"], params["fc2_b"],
        params["norm_g"].reshape(1, D), params["norm_b"].reshape(1, D),
        params["fusion_w"], params["fusion_b"].reshape(1, D),
        f_s.reshape(1, D), f_t.reshape(1, D),
        params["cb_lin_w"][idx], params["cb_lin_b"][idx],
        cb_s.reshape(G, 1, Kb), cb_t.reshape(G, 1, Kb),
        params["cb_cls_w"][idx], params["cb_cls_b"][idx],
    )

    predictions = [logits[:, g] for g in range(G)]     # [global, locals..., final]
    features = [feats_all[:, g] for g in range(G)]     # [global, locals..., fused]
    return predictions, features


def two_view_net_forward(params, x1, x2, *, patch, heads, block_size):
    """TwoViewNet with share_weights=True: both views share the same FSRAModel params.
    Both views are packed into one batch so the fused kernel runs once."""
    kw = dict(patch=patch, heads=heads, block_size=block_size)
    if x1 is not None and x2 is not None:
        b1 = x1.shape[0]
        preds, feats = fsra_forward(params, jnp.concatenate([x1, x2], axis=0), **kw)
        y1 = ([p[:b1] for p in preds], [f[:b1] for f in feats])
        y2 = ([p[b1:] for p in preds], [f[b1:] for f in feats])
        return y1, y2
    y1 = None if x1 is None else fsra_forward(params, x1, **kw)
    y2 = None if x2 is None else fsra_forward(params, x2, **kw)
    return y1, y2


# ----------------------------------- main ------------------------------------

if __name__ == "__main__":
    # Small, forward-consistent config (scaled-down from feature_dim=768 / 256x256 images).
    B, C, H, W = 2, 3, 32, 32
    PATCH = 16
    N_PATCHES = (H // PATCH) * (W // PATCH)      # 4 patches -> 1 patch per local block
    D, HEADS, DEPTH, MLP_HIDDEN = 64, 4, 2, 128
    NUM_CLASSES, BOTTLENECK, BLOCK_SIZE = 10, 32, 4

    # TODO(synk): GeM / AdaptiveAvgPool1d are declared in __init__ but unused in forward; omitted.
    # TODO(synk): Dropout / DropPath / BatchNorm use eval-mode (inference) semantics.

    root = jax.random.PRNGKey(0)
    kparam, k1, k2 = jax.random.split(root, 3)

    params = init_params(
        kparam, C=C, patch=PATCH, n_patches=N_PATCHES, D=D, heads=HEADS,
        depth=DEPTH, mlp_hidden=MLP_HIDDEN, num_classes=NUM_CLASSES,
        bottleneck=BOTTLENECK, block_size=BLOCK_SIZE)

    x1 = jax.random.normal(k1, (B, C, H, W), jnp.float32)   # satellite view (NCHW)
    x2 = jax.random.normal(k2, (B, C, H, W), jnp.float32)   # drone view (NCHW)

    (preds1, feats1), (preds2, feats2) = two_view_net_forward(
        params, x1, x2, patch=PATCH, heads=HEADS, block_size=BLOCK_SIZE)

    for t in preds1 + feats1 + preds2 + feats2:
        jax.block_until_ready(t)

    G = BLOCK_SIZE + 2
    assert len(preds1) == G and all(p.shape == (B, NUM_CLASSES) for p in preds1)
    assert len(feats1) == G and all(f.shape == (B, D) for f in feats1)
    assert len(preds2) == G and all(p.shape == (B, NUM_CLASSES) for p in preds2)
    assert len(feats2) == G and all(f.shape == (B, D) for f in feats2)
    assert all(bool(jnp.all(jnp.isfinite(t))) for t in preds1 + feats1 + preds2 + feats2)

    print("KERNEL_OK")
</pallas_src>

<mosaic_0001>
module attributes {stable_mosaic.version = 11 : i64} {
  func.func @_fsra_kernel(%arg0: i32, %arg1: i32, %arg2: memref<1x4x768xf32, #tpu.memory_space<vmem>>, %arg3: memref<768x64xbf16, #tpu.memory_space<vmem>>, %arg4: memref<1x64xf32, #tpu.memory_space<vmem>>, %arg5: memref<1x64xf32, #tpu.memory_space<vmem>>, %arg6: memref<4x64xf32, #tpu.memory_space<vmem>>, %arg7: memref<1x1x64xf32, #tpu.memory_space<vmem>>, %arg8: memref<1x1x64xf32, #tpu.memory_space<vmem>>, %arg9: memref<1x64x192xbf16, #tpu.memory_space<vmem>>, %arg10: memref<1x1x192xf32, #tpu.memory_space<vmem>>, %arg11: memref<1x64x64xbf16, #tpu.memory_space<vmem>>, %arg12: memref<1x1x64xf32, #tpu.memory_space<vmem>>, %arg13: memref<1x1x64xf32, #tpu.memory_space<vmem>>, %arg14: memref<1x1x64xf32, #tpu.memory_space<vmem>>, %arg15: memref<1x64x128xbf16, #tpu.memory_space<vmem>>, %arg16: memref<1x1x128xf32, #tpu.memory_space<vmem>>, %arg17: memref<1x128x64xbf16, #tpu.memory_space<vmem>>, %arg18: memref<1x1x64xf32, #tpu.memory_space<vmem>>, %arg19: memref<1x64xf32, #tpu.memory_space<vmem>>, %arg20: memref<1x64xf32, #tpu.memory_space<vmem>>, %arg21: memref<5x64x64xbf16, #tpu.memory_space<vmem>>, %arg22: memref<1x64xf32, #tpu.memory_space<vmem>>, %arg23: memref<1x64xf32, #tpu.memory_space<vmem>>, %arg24: memref<1x64xf32, #tpu.memory_space<vmem>>, %arg25: memref<6x64x32xbf16, #tpu.memory_space<vmem>>, %arg26: memref<6x1x32xf32, #tpu.memory_space<vmem>>, %arg27: memref<6x1x32xf32, #tpu.memory_space<vmem>>, %arg28: memref<6x1x32xf32, #tpu.memory_space<vmem>>, %arg29: memref<6x32x10xbf16, #tpu.memory_space<vmem>>, %arg30: memref<6x1x10xf32, #tpu.memory_space<vmem>>, %arg31: memref<1x6x64xf32, #tpu.memory_space<vmem>>, %arg32: memref<1x6x10xf32, #tpu.memory_space<vmem>>, %arg33: memref<5x64xf32, #tpu.memory_space<vmem>>, %arg34: memref<6x64xf32, #tpu.memory_space<vmem>>, %arg35: memref<6x10xf32, #tpu.memory_space<vmem>>) attributes {dimension_semantics = [#tpu.dimension_semantics<parallel>, #tpu.dimension_semantics<arbitrary>], iteration_bounds = array<i64: 4, 2>, scalar_prefetch = 0 : i64, scratch_operands = 3 : i64, tpu.core_type = #tpu.core_type<tc>, window_params = [{transform_indices = @transform_0, window_bounds = array<i64: 1, 4, 768>}, {pipeline_mode = #tpu.pipeline_mode<synchronous>, transform_indices = @transform_1, window_bounds = array<i64: 768, 64>}, {pipeline_mode = #tpu.pipeline_mode<synchronous>, transform_indices = @transform_2, window_bounds = array<i64: 1, 64>}, {pipeline_mode = #tpu.pipeline_mode<synchronous>, transform_indices = @transform_3, window_bounds = array<i64: 1, 64>}, {pipeline_mode = #tpu.pipeline_mode<synchronous>, transform_indices = @transform_4, window_bounds = array<i64: 4, 64>}, {transform_indices = @transform_5, window_bounds = array<i64: 1, 1, 64>}, {transform_indices = @transform_6, window_bounds = array<i64: 1, 1, 64>}, {transform_indices = @transform_7, window_bounds = array<i64: 1, 64, 192>}, {transform_indices = @transform_8, window_bounds = array<i64: 1, 1, 192>}, {transform_indices = @transform_9, window_bounds = array<i64: 1, 64, 64>}, {transform_indices = @transform_10, window_bounds = array<i64: 1, 1, 64>}, {transform_indices = @transform_11, window_bounds = array<i64: 1, 1, 64>}, {transform_indices = @transform_12, window_bounds = array<i64: 1, 1, 64>}, {transform_indices = @transform_13, window_bounds = array<i64: 1, 64, 128>}, {transform_indices = @transform_14, window_bounds = array<i64: 1, 1, 128>}, {transform_indices = @transform_15, window_bounds = array<i64: 1, 128, 64>}, {transform_indices = @transform_16, window_bounds = array<i64: 1, 1, 64>}, {pipeline_mode = #tpu.pipeline_mode<synchronous>, transform_indices = @transform_17, window_bounds = array<i64: 1, 64>}, {pipeline_mode = #tpu.pipeline_mode<synchronous>, transform_indices = @transform_18, window_bounds = array<i64: 1, 64>}, {pipeline_mode = #tpu.pipeline_mode<synchronous>, transform_indices = @transform_19, window_bounds = array<i64: 5, 64, 64>}, {pipeline_mode = #tpu.pipeline_mode<synchronous>, transform_indices = @transform_20, window_bounds = array<i64: 1, 64>}, {pipeline_mode = #tpu.pipeline_mode<synchronous>, transform_indices = @transform_21, window_bounds = array<i64: 1, 64>}, {pipeline_mode = #tpu.pipeline_mode<synchronous>, transform_indices = @transform_22, window_bounds = array<i64: 1, 64>}, {pipeline_mode = #tpu.pipeline_mode<synchronous>, transform_indices = @transform_23, window_bounds = array<i64: 6, 64, 32>}, {pipeline_mode = #tpu.pipeline_mode<synchronous>, transform_indices = @transform_24, window_bounds = array<i64: 6, 1, 32>}, {pipeline_mode = #tpu.pipeline_mode<synchronous>, transform_indices = @transform_25, window_bounds = array<i64: 6, 1, 32>}, {pipeline_mode = #tpu.pipeline_mode<synchronous>, transform_indices = @transform_26, window_bounds = array<i64: 6, 1, 32>}, {pipeline_mode = #tpu.pipeline_mode<synchronous>, transform_indices = @transform_27, window_bounds = array<i64: 6, 32, 10>}, {pipeline_mode = #tpu.pipeline_mode<synchronous>, transform_indices = @transform_28, window_bounds = array<i64: 6, 1, 10>}, {transform_indices = @transform_29, window_bounds = array<i64: 1, 6, 64>}, {transform_indices = @transform_30, window_bounds = array<i64: 1, 6, 10>}]} {
    %c0_i32 = arith.constant 0 : i32
    %0 = arith.cmpi eq, %arg1, %c0_i32 : i32
    %1 = arith.extui %0 : i1 to i32
    %c0_i32_0 = arith.constant 0 : i32
    %2 = arith.cmpi ne, %1, %c0_i32_0 : i32
    scf.if %2 {
      %c0_81 = arith.constant 0 : index
      %c0_82 = arith.constant 0 : index
      %c0_83 = arith.constant 0 : index
      %196 = vector.load %arg2[%c0_81, %c0_82, %c0_83] : memref<1x4x768xf32, #tpu.memory_space<vmem>>, vector<1x4x768xf32>
      %197 = vector.shape_cast %196 : vector<1x4x768xf32> to vector<4x768xf32>
      %c0_84 = arith.constant 0 : index
      %c0_85 = arith.constant 0 : index
      %198 = vector.load %arg3[%c0_84, %c0_85] : memref<768x64xbf16, #tpu.memory_space<vmem>>, vector<768x64xbf16>
      %199 = arith.truncf %197 : vector<4x768xf32> to vector<4x768xbf16>
      %cst_86 = arith.constant dense<0.000000e+00> : vector<4x64xf32>
      %200 = tpu.matmul %199, %198, %cst_86 {dimension_numbers = #tpu.dot_dimension_numbers<[1], [0], [0], [1], [0, 0, 1, 1], [], []>} : vector<4x768xbf16>, vector<768x64xbf16>, vector<4x64xf32> -> vector<4x64xf32>
      %c0_87 = arith.constant 0 : index
      %c0_88 = arith.constant 0 : index
      %201 = vector.load %arg4[%c0_87, %c0_88] : memref<1x64xf32, #tpu.memory_space<vmem>>, vector<1x64xf32>
      %202 = vector.broadcast %201 : vector<1x64xf32> to vector<4x64xf32>
      %203 = arith.addf %200, %202 : vector<4x64xf32>
      %c0_89 = arith.constant 0 : index
      %c0_90 = arith.constant 0 : index
      %204 = vector.load %arg6[%c0_89, %c0_90] : memref<4x64xf32, #tpu.memory_space<vmem>>, vector<4x64xf32>
      %205 = arith.addf %203, %204 : vector<4x64xf32>
      %c0_91 = arith.constant 0 : index
      %c0_92 = arith.constant 0 : index
      %206 = vector.load %arg5[%c0_91, %c0_92] : memref<1x64xf32, #tpu.memory_space<vmem>>, vector<1x64xf32>
      %c0_93 = arith.constant 0 : index
      %c0_94 = arith.constant 0 : index
      %207 = vector.load %arg33[%c0_93, %c0_94] : memref<5x64xf32, #tpu.memory_space<vmem>>, vector<1x64xf32>
      tpu.vector_store %arg33[%c0_93, %c0_94], %206 {strides = array<i32>} : memref<5x64xf32, #tpu.memory_space<vmem>>, vector<1x64xf32>,
      %c1 = arith.constant 1 : index
      %c0_95 = arith.constant 0 : index
      %208 = vector.load %arg33[%c1, %c0_95] : memref<5x64xf32, #tpu.memory_space<vmem>>, vector<4x64xf32>
      tpu.vector_store %arg33[%c1, %c0_95], %205 {strides = array<i32>} : memref<5x64xf32, #tpu.memory_space<vmem>>, vector<4x64xf32>,
    } else {
    }
    %c0 = arith.constant 0 : index
    %c0_1 = arith.constant 0 : index
    %3 = vector.load %arg33[%c0, %c0_1] : memref<5x64xf32, #tpu.memory_space<vmem>>, vector<5x64xf32>
    %c0_2 = arith.constant 0 : index
    %c0_3 = arith.constant 0 : index
    %c0_4 = arith.constant 0 : index
    %4 = vector.load %arg7[%c0_2, %c0_3, %c0_4] : memref<1x1x64xf32, #tpu.memory_space<vmem>>, vector<1x1x64xf32>
    %5 = vector.shape_cast %4 : vector<1x1x64xf32> to vector<1x64xf32>
    %c0_5 = arith.constant 0 : index
    %c0_6 = arith.constant 0 : index
    %c0_7 = arith.constant 0 : index
    %6 = vector.load %arg8[%c0_5, %c0_6, %c0_7] : memref<1x1x64xf32, #tpu.memory_space<vmem>>, vector<1x1x64xf32>
    %7 = vector.shape_cast %6 : vector<1x1x64xf32> to vector<1x64xf32>
    %cst = arith.constant dense<0.000000e+00> : vector<5xf32>
    %8 = vector.multi_reduction <add>, %3, %cst [1] : vector<5x64xf32> to vector<5xf32>
    %9 = vector.shape_cast %8 : vector<5xf32> to vector<5x1xf32>
    %cst_8 = arith.constant 6.400000e+01 : f32
    %10 = vector.broadcast %cst_8 : f32 to vector<5x1xf32>
    %11 = arith.divf %9, %10 : vector<5x1xf32>
    %12 = vector.broadcast %11 : vector<5x1xf32> to vector<5x64xf32>
    %13 = arith.subf %3, %12 : vector<5x64xf32>
    %14 = arith.mulf %13, %13 : vector<5x64xf32>
    %cst_9 = arith.constant dense<0.000000e+00> : vector<5xf32>
    %15 = vector.multi_reduction <add>, %14, %cst_9 [1] : vector<5x64xf32> to vector<5xf32>
    %16 = vector.shape_cast %15 : vector<5xf32> to vector<5x1xf32>
    %cst_10 = arith.constant 6.400000e+01 : f32
    %17 = vector.broadcast %cst_10 : f32 to vector<5x1xf32>
    %18 = arith.divf %16, %17 : vector<5x1xf32>
    %cst_11 = arith.constant 9.99999997E-7 : f32
    %19 = vector.broadcast %cst_11 : f32 to vector<5x1xf32>
    %20 = arith.addf %18, %19 : vector<5x1xf32>
    %21 = math.rsqrt %20 : vector<5x1xf32>
    %22 = vector.broadcast %21 : vector<5x1xf32> to vector<5x64xf32>
    %23 = arith.mulf %13, %22 : vector<5x64xf32>
    %24 = vector.broadcast %5 : vector<1x64xf32> to vector<5x64xf32>
    %25 = arith.mulf %23, %24 : vector<5x64xf32>
    %26 = vector.broadcast %7 : vector<1x64xf32> to vector<5x64xf32>
    %27 = arith.addf %25, %26 : vector<5x64xf32>
    %c0_12 = arith.constant 0 : index
    %c0_13 = arith.constant 0 : index
    %c0_14 = arith.constant 0 : index
    %28 = vector.load %arg9[%c0_12, %c0_13, %c0_14] : memref<1x64x192xbf16, #tpu.memory_space<vmem>>, vector<1x64x192xbf16>
    %29 = vector.shape_cast %28 : vector<1x64x192xbf16> to vector<64x192xbf16>
    %30 = arith.truncf %27 : vector<5x64xf32> to vector<5x64xbf16>
    %cst_15 = arith.constant dense<0.000000e+00> : vector<5x192xf32>
    %31 = tpu.matmul %30, %29, %cst_15 {dimension_numbers = #tpu.dot_dimension_numbers<[1], [0], [0], [1], [0, 0, 1, 1], [], []>} : vector<5x64xbf16>, vector<64x192xbf16>, vector<5x192xf32> -> vector<5x192xf32>
    %c0_16 = arith.constant 0 : index
    %c0_17 = arith.constant 0 : index
    %c0_18 = arith.constant 0 : index
    %32 = vector.load %arg10[%c0_16, %c0_17, %c0_18] : memref<1x1x192xf32, #tpu.memory_space<vmem>>, vector<1x1x192xf32>
    %33 = vector.shape_cast %32 : vector<1x1x192xf32> to vector<1x192xf32>
    %34 = vector.broadcast %33 : vector<1x192xf32> to vector<5x192xf32>
    %35 = arith.addf %31, %34 : vector<5x192xf32>
    %c0_19 = arith.constant 0 : index
    %c0_20 = arith.constant 0 : index
    %c0_21 = arith.constant 0 : index
    %36 = vector.load %arg11[%c0_19, %c0_20, %c0_21] : memref<1x64x64xbf16, #tpu.memory_space<vmem>>, vector<1x64x64xbf16>
    %37 = vector.shape_cast %36 : vector<1x64x64xbf16> to vector<64x64xbf16>
    %c0_22 = arith.constant 0 : index
    %c0_23 = arith.constant 0 : index
    %c0_24 = arith.constant 0 : index
    %38 = vector.load %arg12[%c0_22, %c0_23, %c0_24] : memref<1x1x64xf32, #tpu.memory_space<vmem>>, vector<1x1x64xf32>
    %39 = vector.shape_cast %38 : vector<1x1x64xf32> to vector<1x64xf32>
    %40 = vector.extract_strided_slice %35 {offsets = [0, 0], sizes = [5, 16], strides = [1, 1]} : vector<5x192xf32> to vector<5x16xf32>
    %41 = arith.truncf %40 : vector<5x16xf32> to vector<5x16xbf16>
    %42 = vector.extract_strided_slice %35 {offsets = [0, 64], sizes = [5, 16], strides = [1, 1]} : vector<5x192xf32> to vector<5x16xf32>
    %43 = arith.truncf %42 : vector<5x16xf32> to vector<5x16xbf16>
    %44 = vector.extract_strided_slice %35 {offsets = [0, 128], sizes = [5, 16], strides = [1, 1]} : vector<5x192xf32> to vector<5x16xf32>
    %45 = arith.truncf %44 : vector<5x16xf32> to vector<5x16xbf16>
    "tpu.trace_start"() <{level = 10 : i32, message = "td,sd->ts"}> : () -> ()
    %cst_25 = arith.constant dense<0.000000e+00> : vector<5x5xf32>
    %46 = tpu.matmul %41, %43, %cst_25 {dimension_numbers = #tpu.dot_dimension_numbers<[1], [1], [0], [0], [0, 0, 1, 0], [], []>} : vector<5x16xbf16>, vector<5x16xbf16>, vector<5x5xf32> -> vector<5x5xf32>
    "tpu.trace_stop"() : () -> ()
    %cst_26 = arith.constant 2.500000e-01 : f32
    %47 = vector.broadcast %cst_26 : f32 to vector<5x5xf32>
    %48 = arith.mulf %46, %47 : vector<5x5xf32>
    %cst_27 = arith.constant dense<0xFF800000> : vector<5xf32>
    %49 = vector.multi_reduction <maximumf>, %48, %cst_27 [1] : vector<5x5xf32> to vector<5xf32>
    %50 = vector.shape_cast %49 : vector<5xf32> to vector<5x1xf32>
    %51 = vector.broadcast %50 : vector<5x1xf32> to vector<5x5xf32>
    %52 = arith.subf %48, %51 : vector<5x5xf32>
    %53 = math.exp %52 : vector<5x5xf32>
    %cst_28 = arith.constant dense<0.000000e+00> : vector<5xf32>
    %54 = vector.multi_reduction <add>, %53, %cst_28 [1] : vector<5x5xf32> to vector<5xf32>
    %55 = vector.shape_cast %54 : vector<5xf32> to vector<5x1xf32>
    %56 = vector.broadcast %55 : vector<5x1xf32> to vector<5x5xf32>
    %57 = arith.divf %53, %56 : vector<5x5xf32>
    %58 = arith.truncf %57 : vector<5x5xf32> to vector<5x5xbf16>
    %cst_29 = arith.constant dense<0.000000e+00> : vector<5x16xf32>
    %59 = tpu.matmul %58, %45, %cst_29 {dimension_numbers = #tpu.dot_dimension_numbers<[1], [0], [0], [1], [0, 0, 1, 1], [], []>} : vector<5x5xbf16>, vector<5x16xbf16>, vector<5x16xf32> -> vector<5x16xf32>
    %60 = vector.extract_strided_slice %37 {offsets = [0, 0], sizes = [16, 64], strides = [1, 1]} : vector<64x64xbf16> to vector<16x64xbf16>
    %61 = arith.truncf %59 : vector<5x16xf32> to vector<5x16xbf16>
    %cst_30 = arith.constant dense<0.000000e+00> : vector<5x64xf32>
    %62 = tpu.matmul %61, %60, %cst_30 {dimension_numbers = #tpu.dot_dimension_numbers<[1], [0], [0], [1], [0, 0, 1, 1], [], []>} : vector<5x16xbf16>, vector<16x64xbf16>, vector<5x64xf32> -> vector<5x64xf32>
    %63 = vector.broadcast %39 : vector<1x64xf32> to vector<5x64xf32>
    %64 = arith.addf %63, %62 : vector<5x64xf32>
    %65 = vector.extract_strided_slice %35 {offsets = [0, 16], sizes = [5, 16], strides = [1, 1]} : vector<5x192xf32> to vector<5x16xf32>
    %66 = arith.truncf %65 : vector<5x16xf32> to vector<5x16xbf16>
    %67 = vector.extract_strided_slice %35 {offsets = [0, 80], sizes = [5, 16], strides = [1, 1]} : vector<5x192xf32> to vector<5x16xf32>
    %68 = arith.truncf %67 : vector<5x16xf32> to vector<5x16xbf16>
    %69 = vector.extract_strided_slice %35 {offsets = [0, 144], sizes = [5, 16], strides = [1, 1]} : vector<5x192xf32> to vector<5x16xf32>
    %70 = arith.truncf %69 : vector<5x16xf32> to vector<5x16xbf16>
    "tpu.trace_start"() <{level = 10 : i32, message = "td,sd->ts"}> : () -> ()
    %cst_31 = arith.constant dense<0.000000e+00> : vector<5x5xf32>
    %71 = tpu.matmul %66, %68, %cst_31 {dimension_numbers = #tpu.dot_dimension_numbers<[1], [1], [0], [0], [0, 0, 1, 0], [], []>} : vector<5x16xbf16>, vector<5x16xbf16>, vector<5x5xf32> -> vector<5x5xf32>
    "tpu.trace_stop"() : () -> ()
    %cst_32 = arith.constant 2.500000e-01 : f32
    %72 = vector.broadcast %cst_32 : f32 to vector<5x5xf32>
    %73 = arith.mulf %71, %72 : vector<5x5xf32>
    %cst_33 = arith.constant dense<0xFF800000> : vector<5xf32>
    %74 = vector.multi_reduction <maximumf>, %73, %cst_33 [1] : vector<5x5xf32> to vector<5xf32>
    %75 = vector.shape_cast %74 : vector<5xf32> to vector<5x1xf32>
    %76 = vector.broadcast %75 : vector<5x1xf32> to vector<5x5xf32>
    %77 = arith.subf %73, %76 : vector<5x5xf32>
    %78 = math.exp %77 : vector<5x5xf32>
    %cst_34 = arith.constant dense<0.000000e+00> : vector<5xf32>
    %79 = vector.multi_reduction <add>, %78, %cst_34 [1] : vector<5x5xf32> to vector<5xf32>
    %80 = vector.shape_cast %79 : vector<5xf32> to vector<5x1xf32>
    %81 = vector.broadcast %80 : vector<5x1xf32> to vector<5x5xf32>
    %82 = arith.divf %78, %81 : vector<5x5xf32>
    %83 = arith.truncf %82 : vector<5x5xf32> to vector<5x5xbf16>
    %cst_35 = arith.constant dense<0.000000e+00> : vector<5x16xf32>
    %84 = tpu.matmul %83, %70, %cst_35 {dimension_numbers = #tpu.dot_dimension_numbers<[1], [0], [0], [1], [0, 0, 1, 1], [], []>} : vector<5x5xbf16>, vector<5x16xbf16>, vector<5x16xf32> -> vector<5x16xf32>
    %85 = vector.extract_strided_slice %37 {offsets = [16, 0], sizes = [16, 64], strides = [1, 1]} : vector<64x64xbf16> to vector<16x64xbf16>
    %86 = arith.truncf %84 : vector<5x16xf32> to vector<5x16xbf16>
    %cst_36 = arith.constant dense<0.000000e+00> : vector<5x64xf32>
    %87 = tpu.matmul %86, %85, %cst_36 {dimension_numbers = #tpu.dot_dimension_numbers<[1], [0], [0], [1], [0, 0, 1, 1], [], []>} : vector<5x16xbf16>, vector<16x64xbf16>, vector<5x64xf32> -> vector<5x64xf32>
    %88 = arith.addf %64, %87 : vector<5x64xf32>
    %89 = vector.extract_strided_slice %35 {offsets = [0, 32], sizes = [5, 16], strides = [1, 1]} : vector<5x192xf32> to vector<5x16xf32>
    %90 = arith.truncf %89 : vector<5x16xf32> to vector<5x16xbf16>
    %91 = vector.extract_strided_slice %35 {offsets = [0, 96], sizes = [5, 16], strides = [1, 1]} : vector<5x192xf32> to vector<5x16xf32>
    %92 = arith.truncf %91 : vector<5x16xf32> to vector<5x16xbf16>
    %93 = vector.extract_strided_slice %35 {offsets = [0, 160], sizes = [5, 16], strides = [1, 1]} : vector<5x192xf32> to vector<5x16xf32>
    %94 = arith.truncf %93 : vector<5x16xf32> to vector<5x16xbf16>
    "tpu.trace_start"() <{level = 10 : i32, message = "td,sd->ts"}> : () -> ()
    %cst_37 = arith.constant dense<0.000000e+00> : vector<5x5xf32>
    %95 = tpu.matmul %90, %92, %cst_37 {dimension_numbers = #tpu.dot_dimension_numbers<[1], [1], [0], [0], [0, 0, 1, 0], [], []>} : vector<5x16xbf16>, vector<5x16xbf16>, vector<5x5xf32> -> vector<5x5xf32>
    "tpu.trace_stop"() : () -> ()
    %cst_38 = arith.constant 2.500000e-01 : f32
    %96 = vector.broadcast %cst_38 : f32 to vector<5x5xf32>
    %97 = arith.mulf %95, %96 : vector<5x5xf32>
    %cst_39 = arith.constant dense<0xFF800000> : vector<5xf32>
    %98 = vector.multi_reduction <maximumf>, %97, %cst_39 [1] : vector<5x5xf32> to vector<5xf32>
    %99 = vector.shape_cast %98 : vector<5xf32> to vector<5x1xf32>
    %100 = vector.broadcast %99 : vector<5x1xf32> to vector<5x5xf32>
    %101 = arith.subf %97, %100 : vector<5x5xf32>
    %102 = math.exp %101 : vector<5x5xf32>
    %cst_40 = arith.constant dense<0.000000e+00> : vector<5xf32>
    %103 = vector.multi_reduction <add>, %102, %cst_40 [1] : vector<5x5xf32> to vector<5xf32>
    %104 = vector.shape_cast %103 : vector<5xf32> to vector<5x1xf32>
    %105 = vector.broadcast %104 : vector<5x1xf32> to vector<5x5xf32>
    %106 = arith.divf %102, %105 : vector<5x5xf32>
    %107 = arith.truncf %106 : vector<5x5xf32> to vector<5x5xbf16>
    %cst_41 = arith.constant dense<0.000000e+00> : vector<5x16xf32>
    %108 = tpu.matmul %107, %94, %cst_41 {dimension_numbers = #tpu.dot_dimension_numbers<[1], [0], [0], [1], [0, 0, 1, 1], [], []>} : vector<5x5xbf16>, vector<5x16xbf16>, vector<5x16xf32> -> vector<5x16xf32>
    %109 = vector.extract_strided_slice %37 {offsets = [32, 0], sizes = [16, 64], strides = [1, 1]} : vector<64x64xbf16> to vector<16x64xbf16>
    %110 = arith.truncf %108 : vector<5x16xf32> to vector<5x16xbf16>
    %cst_42 = arith.constant dense<0.000000e+00> : vector<5x64xf32>
    %111 = tpu.matmul %110, %109, %cst_42 {dimension_numbers = #tpu.dot_dimension_numbers<[1], [0], [0], [1], [0, 0, 1, 1], [], []>} : vector<5x16xbf16>, vector<16x64xbf16>, vector<5x64xf32> -> vector<5x64xf32>
    %112 = arith.addf %88, %111 : vector<5x64xf32>
    %113 = vector.extract_strided_slice %35 {offsets = [0, 48], sizes = [5, 16], strides = [1, 1]} : vector<5x192xf32> to vector<5x16xf32>
    %114 = arith.truncf %113 : vector<5x16xf32> to vector<5x16xbf16>
    %115 = vector.extract_strided_slice %35 {offsets = [0, 112], sizes = [5, 16], strides = [1, 1]} : vector<5x192xf32> to vector<5x16xf32>
    %116 = arith.truncf %115 : vector<5x16xf32> to vector<5x16xbf16>
    %117 = vector.extract_strided_slice %35 {offsets = [0, 176], sizes = [5, 16], strides = [1, 1]} : vector<5x192xf32> to vector<5x16xf32>
    %118 = arith.truncf %117 : vector<5x16xf32> to vector<5x16xbf16>
    "tpu.trace_start"() <{level = 10 : i32, message = "td,sd->ts"}> : () -> ()
    %cst_43 = arith.constant dense<0.000000e+00> : vector<5x5xf32>
    %119 = tpu.matmul %114, %116, %cst_43 {dimension_numbers = #tpu.dot_dimension_numbers<[1], [1], [0], [0], [0, 0, 1, 0], [], []>} : vector<5x16xbf16>, vector<5x16xbf16>, vector<5x5xf32> -> vector<5x5xf32>
    "tpu.trace_stop"() : () -> ()
    %cst_44 = arith.constant 2.500000e-01 : f32
    %120 = vector.broadcast %cst_44 : f32 to vector<5x5xf32>
    %121 = arith.mulf %119, %120 : vector<5x5xf32>
    %cst_45 = arith.constant dense<0xFF800000> : vector<5xf32>
    %122 = vector.multi_reduction <maximumf>, %121, %cst_45 [1] : vector<5x5xf32> to vector<5xf32>
    %123 = vector.shape_cast %122 : vector<5xf32> to vector<5x1xf32>
    %124 = vector.broadcast %123 : vector<5x1xf32> to vector<5x5xf32>
    %125 = arith.subf %121, %124 : vector<5x5xf32>
    %126 = math.exp %125 : vector<5x5xf32>
    %cst_46 = arith.constant dense<0.000000e+00> : vector<5xf32>
    %127 = vector.multi_reduction <add>, %126, %cst_46 [1] : vector<5x5xf32> to vector<5xf32>
    %128 = vector.shape_cast %127 : vector<5xf32> to vector<5x1xf32>
    %129 = vector.broadcast %128 : vector<5x1xf32> to vector<5x5xf32>
    %130 = arith.divf %126, %129 : vector<5x5xf32>
    %131 = arith.truncf %130 : vector<5x5xf32> to vector<5x5xbf16>
    %cst_47 = arith.constant dense<0.000000e+00> : vector<5x16xf32>
    %132 = tpu.matmul %131, %118, %cst_47 {dimension_numbers = #tpu.dot_dimension_numbers<[1], [0], [0], [1], [0, 0, 1, 1], [], []>} : vector<5x5xbf16>, vector<5x16xbf16>, vector<5x16xf32> -> vector<5x16xf32>
    %133 = vector.extract_strided_slice %37 {offsets = [48, 0], sizes = [16, 64], strides = [1, 1]} : vector<64x64xbf16> to vector<16x64xbf16>
    %134 = arith.truncf %132 : vector<5x16xf32> to vector<5x16xbf16>
    %cst_48 = arith.constant dense<0.000000e+00> : vector<5x64xf32>
    %135 = tpu.matmul %134, %133, %cst_48 {dimension_numbers = #tpu.dot_dimension_numbers<[1], [0], [0], [1], [0, 0, 1, 1], [], []>} : vector<5x16xbf16>, vector<16x64xbf16>, vector<5x64xf32> -> vector<5x64xf32>
    %136 = arith.addf %112, %135 : vector<5x64xf32>
    %137 = arith.addf %3, %136 : vector<5x64xf32>
    %c0_49 = arith.constant 0 : index
    %c0_50 = arith.constant 0 : index
    %c0_51 = arith.constant 0 : index
    %138 = vector.load %arg13[%c0_49, %c0_50, %c0_51] : memref<1x1x64xf32, #tpu.memory_space<vmem>>, vector<1x1x64xf32>
    %139 = vector.shape_cast %138 : vector<1x1x64xf32> to vector<1x64xf32>
    %c0_52 = arith.constant 0 : index
    %c0_53 = arith.constant 0 : index
    %c0_54 = arith.constant 0 : index
    %140 = vector.load %arg14[%c0_52, %c0_53, %c0_54] : memref<1x1x64xf32, #tpu.memory_space<vmem>>, vector<1x1x64xf32>
    %141 = vector.shape_cast %140 : vector<1x1x64xf32> to vector<1x64xf32>
    %cst_55 = arith.constant dense<0.000000e+00> : vector<5xf32>
    %142 = vector.multi_reduction <add>, %137, %cst_55 [1] : vector<5x64xf32> to vector<5xf32>
    %143 = vector.shape_cast %142 : vector<5xf32> to vector<5x1xf32>
    %cst_56 = arith.constant 6.400000e+01 : f32
    %144 = vector.broadcast %cst_56 : f32 to vector<5x1xf32>
    %145 = arith.divf %143, %144 : vector<5x1xf32>
    %146 = vector.broadcast %145 : vector<5x1xf32> to vector<5x64xf32>
    %147 = arith.subf %137, %146 : vector<5x64xf32>
    %148 = arith.mulf %147, %147 : vector<5x64xf32>
    %cst_57 = arith.constant dense<0.000000e+00> : vector<5xf32>
    %149 = vector.multi_reduction <add>, %148, %cst_57 [1] : vector<5x64xf32> to vector<5xf32>
    %150 = vector.shape_cast %149 : vector<5xf32> to vector<5x1xf32>
    %cst_58 = arith.constant 6.400000e+01 : f32
    %151 = vector.broadcast %cst_58 : f32 to vector<5x1xf32>
    %152 = arith.divf %150, %151 : vector<5x1xf32>
    %cst_59 = arith.constant 9.99999997E-7 : f32
    %153 = vector.broadcast %cst_59 : f32 to vector<5x1xf32>
    %154 = arith.addf %152, %153 : vector<5x1xf32>
    %155 = math.rsqrt %154 : vector<5x1xf32>
    %156 = vector.broadcast %155 : vector<5x1xf32> to vector<5x64xf32>
    %157 = arith.mulf %147, %156 : vector<5x64xf32>
    %158 = vector.broadcast %139 : vector<1x64xf32> to vector<5x64xf32>
    %159 = arith.mulf %157, %158 : vector<5x64xf32>
    %160 = vector.broadcast %141 : vector<1x64xf32> to vector<5x64xf32>
    %161 = arith.addf %159, %160 : vector<5x64xf32>
    %c0_60 = arith.constant 0 : index
    %c0_61 = arith.constant 0 : index
    %c0_62 = arith.constant 0 : index
    %162 = vector.load %arg15[%c0_60, %c0_61, %c0_62] : memref<1x64x128xbf16, #tpu.memory_space<vmem>>, vector<1x64x128xbf16>
    %163 = vector.shape_cast %162 : vector<1x64x128xbf16> to vector<64x128xbf16>
    %164 = arith.truncf %161 : vector<5x64xf32> to vector<5x64xbf16>
    %cst_63 = arith.constant dense<0.000000e+00> : vector<5x128xf32>
    %165 = tpu.matmul %164, %163, %cst_63 {dimension_numbers = #tpu.dot_dimension_numbers<[1], [0], [0], [1], [0, 0, 1, 1], [], []>} : vector<5x64xbf16>, vector<64x128xbf16>, vector<5x128xf32> -> vector<5x128xf32>
    %c0_64 = arith.constant 0 : index
    %c0_65 = arith.constant 0 : index
    %c0_66 = arith.constant 0 : index
    %166 = vector.load %arg16[%c0_64, %c0_65, %c0_66] : memref<1x1x128xf32, #tpu.memory_space<vmem>>, vector<1x1x128xf32>
    %167 = vector.shape_cast %166 : vector<1x1x128xf32> to vector<1x128xf32>
    %168 = vector.broadcast %167 : vector<1x128xf32> to vector<5x128xf32>
    %169 = arith.addf %165, %168 : vector<5x128xf32>
    %170 = arith.mulf %169, %169 : vector<5x128xf32>
    %171 = arith.mulf %169, %170 : vector<5x128xf32>
    %cst_67 = arith.constant 4.471500e-02 : f32
    %172 = vector.broadcast %cst_67 : f32 to vector<5x128xf32>
    %173 = arith.mulf %172, %171 : vector<5x128xf32>
    %174 = arith.addf %169, %173 : vector<5x128xf32>
    %cst_68 = arith.constant 0.797884583 : f32
    %175 = vector.broadcast %cst_68 : f32 to vector<5x128xf32>
    %176 = arith.mulf %175, %174 : vector<5x128xf32>
    %177 = math.tanh %176 : vector<5x128xf32>
    %cst_69 = arith.constant 1.000000e+00 : f32
    %178 = vector.broadcast %cst_69 : f32 to vector<5x128xf32>
    %179 = arith.addf %178, %177 : vector<5x128xf32>
    %cst_70 = arith.constant 5.000000e-01 : f32
    %180 = vector.broadcast %cst_70 : f32 to vector<5x128xf32>
    %181 = arith.mulf %180, %179 : vector<5x128xf32>
    %182 = arith.mulf %169, %181 : vector<5x128xf32>
    %c0_71 = arith.constant 0 : index
    %c0_72 = arith.constant 0 : index
    %c0_73 = arith.constant 0 : index
    %183 = vector.load %arg17[%c0_71, %c0_72, %c0_73] : memref<1x128x64xbf16, #tpu.memory_space<vmem>>, vector<1x128x64xbf16>
    %184 = vector.shape_cast %183 : vector<1x128x64xbf16> to vector<128x64xbf16>
    %185 = arith.truncf %182 : vector<5x128xf32> to vector<5x128xbf16>
    %cst_74 = arith.constant dense<0.000000e+00> : vector<5x64xf32>
    %186 = tpu.matmul %185, %184, %cst_74 {dimension_numbers = #tpu.dot_dimension_numbers<[1], [0], [0], [1], [0, 0, 1, 1], [], []>} : vector<5x128xbf16>, vector<128x64xbf16>, vector<5x64xf32> -> vector<5x64xf32>
    %187 = arith.addf %137, %186 : vector<5x64xf32>
    %c0_75 = arith.constant 0 : index
    %c0_76 = arith.constant 0 : index
    %c0_77 = arith.constant 0 : index
    %188 = vector.load %arg18[%c0_75, %c0_76, %c0_77] : memref<1x1x64xf32, #tpu.memory_space<vmem>>, vector<1x1x64xf32>
    %189 = vector.shape_cast %188 : vector<1x1x64xf32> to vector<1x64xf32>
    %190 = vector.broadcast %189 : vector<1x64xf32> to vector<5x64xf32>
    %191 = arith.addf %187, %190 : vector<5x64xf32>
    %c0_78 = arith.constant 0 : index
    %c0_79 = arith.constant 0 : index
    %192 = vector.load %arg33[%c0_78, %c0_79] : memref<5x64xf32, #tpu.memory_space<vmem>>, vector<5x64xf32>
    tpu.vector_store %arg33[%c0_78, %c0_79], %191 {strides = array<i32>} : memref<5x64xf32, #tpu.memory_space<vmem>>, vector<5x64xf32>,
    %c1_i32 = arith.constant 1 : i32
    %193 = arith.cmpi eq, %arg1, %c1_i32 : i32
    %194 = arith.extui %193 : i1 to i32
    %c0_i32_80 = arith.constant 0 : i32
    %195 = arith.cmpi ne, %194, %c0_i32_80 : i32
    scf.if %195 {
      %c0_81 = arith.constant 0 : index
      %c0_82 = arith.constant 0 : index
      %196 = vector.load %arg19[%c0_81, %c0_82] : memref<1x64xf32, #tpu.memory_space<vmem>>, vector<1x64xf32>
      %c0_83 = arith.constant 0 : index
      %c0_84 = arith.constant 0 : index
      %197 = vector.load %arg20[%c0_83, %c0_84] : memref<1x64xf32, #tpu.memory_space<vmem>>, vector<1x64xf32>
      %cst_85 = arith.constant dense<0.000000e+00> : vector<5xf32>
      %198 = vector.multi_reduction <add>, %191, %cst_85 [1] : vector<5x64xf32> to vector<5xf32>
      %199 = vector.shape_cast %198 : vector<5xf32> to vector<5x1xf32>
      %cst_86 = arith.constant 6.400000e+01 : f32
      %200 = vector.broadcast %cst_86 : f32 to vector<5x1xf32>
      %201 = arith.divf %199, %200 : vector<5x1xf32>
      %202 = vector.broadcast %201 : vector<5x1xf32> to vector<5x64xf32>
      %203 = arith.subf %191, %202 : vector<5x64xf32>
      %204 = arith.mulf %203, %203 : vector<5x64xf32>
      %cst_87 = arith.constant dense<0.000000e+00> : vector<5xf32>
      %205 = vector.multi_reduction <add>, %204, %cst_87 [1] : vector<5x64xf32> to vector<5xf32>
      %206 = vector.shape_cast %205 : vector<5xf32> to vector<5x1xf32>
      %cst_88 = arith.constant 6.400000e+01 : f32
      %207 = vector.broadcast %cst_88 : f32 to vector<5x1xf32>
      %208 = arith.divf %206, %207 : vector<5x1xf32>
      %cst_89 = arith.constant 9.99999997E-7 : f32
      %209 = vector.broadcast %cst_89 : f32 to vector<5x1xf32>
      %210 = arith.addf %208, %209 : vector<5x1xf32>
      %211 = math.rsqrt %210 : vector<5x1xf32>
      %212 = vector.broadcast %211 : vector<5x1xf32> to vector<5x64xf32>
      %213 = arith.mulf %203, %212 : vector<5x64xf32>
      %214 = vector.broadcast %196 : vector<1x64xf32> to vector<5x64xf32>
      %215 = arith.mulf %213, %214 : vector<5x64xf32>
      %216 = vector.broadcast %197 : vector<1x64xf32> to vector<5x64xf32>
      %217 = arith.addf %215, %216 : vector<5x64xf32>
      %218 = vector.extract_strided_slice %217 {offsets = [0, 0], sizes = [1, 64], strides = [1, 1]} : vector<5x64xf32> to vector<1x64xf32>
      %c0_90 = arith.constant 0 : index
      %c0_91 = arith.constant 0 : index
      %219 = vector.load %arg34[%c0_90, %c0_91] : memref<6x64xf32, #tpu.memory_space<vmem>>, vector<1x64xf32>
      tpu.vector_store %arg34[%c0_90, %c0_91], %218 {strides = array<i32>} : memref<6x64xf32, #tpu.memory_space<vmem>>, vector<1x64xf32>,
      %220 = vector.extract_strided_slice %217 {offsets = [1, 0], sizes = [1, 64], strides = [1, 1]} : vector<5x64xf32> to vector<1x64xf32>
      %cst_92 = arith.constant dense<0.000000e+00> : vector<64xf32>
      %221 = vector.multi_reduction <add>, %220, %cst_92 [0] : vector<1x64xf32> to vector<64xf32>
      %222 = vector.shape_cast %221 : vector<64xf32> to vector<1x64xf32>
      %cst_93 = arith.constant 1.000000e+00 : f32
      %223 = vector.broadcast %cst_93 : f32 to vector<1x64xf32>
      %224 = arith.divf %222, %223 : vector<1x64xf32>
      %c1 = arith.constant 1 : index
      %c0_94 = arith.constant 0 : index
      %225 = vector.load %arg34[%c1, %c0_94] : memref<6x64xf32, #tpu.memory_space<vmem>>, vector<1x64xf32>
      tpu.vector_store %arg34[%c1, %c0_94], %224 {strides = array<i32>} : memref<6x64xf32, #tpu.memory_space<vmem>>, vector<1x64xf32>,
      %226 = vector.extract_strided_slice %217 {offsets = [2, 0], sizes = [1, 64], strides = [1, 1]} : vector<5x64xf32> to vector<1x64xf32>
      %cst_95 = arith.constant dense<0.000000e+00> : vector<64xf32>
      %227 = vector.multi_reduction <add>, %226, %cst_95 [0] : vector<1x64xf32> to vector<64xf32>
      %228 = vector.shape_cast %227 : vector<64xf32> to vector<1x64xf32>
      %cst_96 = arith.constant 1.000000e+00 : f32
      %229 = vector.broadcast %cst_96 : f32 to vector<1x64xf32>
      %230 = arith.divf %228, %229 : vector<1x64xf32>
      %c2 = arith.constant 2 : index
      %c0_97 = arith.constant 0 : index
      %231 = vector.load %arg34[%c2, %c0_97] : memref<6x64xf32, #tpu.memory_space<vmem>>, vector<1x64xf32>
      tpu.vector_store %arg34[%c2, %c0_97], %230 {strides = array<i32>} : memref<6x64xf32, #tpu.memory_space<vmem>>, vector<1x64xf32>,
      %232 = vector.extract_strided_slice %217 {offsets = [3, 0], sizes = [1, 64], strides = [1, 1]} : vector<5x64xf32> to vector<1x64xf32>
      %cst_98 = arith.constant dense<0.000000e+00> : vector<64xf32>
      %233 = vector.multi_reduction <add>, %232, %cst_98 [0] : vector<1x64xf32> to vector<64xf32>
      %234 = vector.shape_cast %233 : vector<64xf32> to vector<1x64xf32>
      %cst_99 = arith.constant 1.000000e+00 : f32
      %235 = vector.broadcast %cst_99 : f32 to vector<1x64xf32>
      %236 = arith.divf %234, %235 : vector<1x64xf32>
      %c3 = arith.constant 3 : index
      %c0_100 = arith.constant 0 : index
      %237 = vector.load %arg34[%c3, %c0_100] : memref<6x64xf32, #tpu.memory_space<vmem>>, vector<1x64xf32>
      tpu.vector_store %arg34[%c3, %c0_100], %236 {strides = array<i32>} : memref<6x64xf32, #tpu.memory_space<vmem>>, vector<1x64xf32>,
      %238 = vector.extract_strided_slice %217 {offsets = [4, 0], sizes = [1, 64], strides = [1, 1]} : vector<5x64xf32> to vector<1x64xf32>
      %cst_101 = arith.constant dense<0.000000e+00> : vector<64xf32>
      %239 = vector.multi_reduction <add>, %238, %cst_101 [0] : vector<1x64xf32> to vector<64xf32>
      %240 = vector.shape_cast %239 : vector<64xf32> to vector<1x64xf32>
      %cst_102 = arith.constant 1.000000e+00 : f32
      %241 = vector.broadcast %cst_102 : f32 to vector<1x64xf32>
      %242 = arith.divf %240, %241 : vector<1x64xf32>
      %c4 = arith.constant 4 : index
      %c0_103 = arith.constant 0 : index
      %243 = vector.load %arg34[%c4, %c0_103] : memref<6x64xf32, #tpu.memory_space<vmem>>, vector<1x64xf32>
      tpu.vector_store %arg34[%c4, %c0_103], %242 {strides = array<i32>} : memref<6x64xf32, #tpu.memory_space<vmem>>, vector<1x64xf32>,
      %c0_104 = arith.constant 0 : index
      %c0_105 = arith.constant 0 : index
      %244 = vector.load %arg22[%c0_104, %c0_105] : memref<1x64xf32, #tpu.memory_space<vmem>>, vector<1x64xf32>
      %c0_106 = arith.constant 0 : index
      %c0_107 = arith.constant 0 : index
      %245 = vector.load %arg34[%c0_106, %c0_107] : memref<6x64xf32, #tpu.memory_space<vmem>>, vector<1x64xf32>
      %c0_108 = arith.constant 0 : index
      %c0_109 = arith.constant 0 : index
      %c0_110 = arith.constant 0 : index
      %246 = vector.load %arg21[%c0_108, %c0_109, %c0_110] : memref<5x64x64xbf16, #tpu.memory_space<vmem>>, vector<1x64x64xbf16>
      %247 = vector.shape_cast %246 : vector<1x64x64xbf16> to vector<64x64xbf16>
      %248 = arith.truncf %245 : vector<1x64xf32> to vector<1x64xbf16>
      %cst_111 = arith.constant dense<0.000000e+00> : vector<1x64xf32>
      %249 = tpu.matmul %248, %247, %cst_111 {dimension_numbers = #tpu.dot_dimension_numbers<[1], [0], [0], [1], [0, 0, 1, 1], [], []>} : vector<1x64xbf16>, vector<64x64xbf16>, vector<1x64xf32> -> vector<1x64xf32>
      %250 = arith.addf %244, %249 : vector<1x64xf32>
      %c1_112 = arith.constant 1 : index
      %c0_113 = arith.constant 0 : index
      %251 = vector.load %arg34[%c1_112, %c0_113] : memref<6x64xf32, #tpu.memory_space<vmem>>, vector<1x64xf32>
      %c1_114 = arith.constant 1 : index
      %c0_115 = arith.constant 0 : index
      %c0_116 = arith.constant 0 : index
      %252 = vector.load %arg21[%c1_114, %c0_115, %c0_116] : memref<5x64x64xbf16, #tpu.memory_space<vmem>>, vector<1x64x64xbf16>
      %253 = vector.shape_cast %252 : vector<1x64x64xbf16> to vector<64x64xbf16>
      %254 = arith.truncf %251 : vector<1x64xf32> to vector<1x64xbf16>
      %cst_117 = arith.constant dense<0.000000e+00> : vector<1x64xf32>
      %255 = tpu.matmul %254, %253, %cst_117 {dimension_numbers = #tpu.dot_dimension_numbers<[1], [0], [0], [1], [0, 0, 1, 1], [], []>} : vector<1x64xbf16>, vector<64x64xbf16>, vector<1x64xf32> -> vector<1x64xf32>
      %256 = arith.addf %250, %255 : vector<1x64xf32>
      %c2_118 = arith.constant 2 : index
      %c0_119 = arith.constant 0 : index
      %257 = vector.load %arg34[%c2_118, %c0_119] : memref<6x64xf32, #tpu.memory_space<vmem>>, vector<1x64xf32>
      %c2_120 = arith.constant 2 : index
      %c0_121 = arith.constant 0 : index
      %c0_122 = arith.constant 0 : index
      %258 = vector.load %arg21[%c2_120, %c0_121, %c0_122] : memref<5x64x64xbf16, #tpu.memory_space<vmem>>, vector<1x64x64xbf16>
      %259 = vector.shape_cast %258 : vector<1x64x64xbf16> to vector<64x64xbf16>
      %260 = arith.truncf %257 : vector<1x64xf32> to vector<1x64xbf16>
      %cst_123 = arith.constant dense<0.000000e+00> : vector<1x64xf32>
      %261 = tpu.matmul %260, %259, %cst_123 {dimension_numbers = #tpu.dot_dimension_numbers<[1], [0], [0], [1], [0, 0, 1, 1], [], []>} : vector<1x64xbf16>, vector<64x64xbf16>, vector<1x64xf32> -> vector<1x64xf32>
      %262 = arith.addf %256, %261 : vector<1x64xf32>
      %c3_124 = arith.constant 3 : index
      %c0_125 = arith.constant 0 : index
      %263 = vector.load %arg34[%c3_124, %c0_125] : memref<6x64xf32, #tpu.memory_space<vmem>>, vector<1x64xf32>
      %c3_126 = arith.constant 3 : index
      %c0_127 = arith.constant 0 : index
      %c0_128 = arith.constant 0 : index
      %264 = vector.load %arg21[%c3_126, %c0_127, %c0_128] : memref<5x64x64xbf16, #tpu.memory_space<vmem>>, vector<1x64x64xbf16>
      %265 = vector.shape_cast %264 : vector<1x64x64xbf16> to vector<64x64xbf16>
      %266 = arith.truncf %263 : vector<1x64xf32> to vector<1x64xbf16>
      %cst_129 = arith.constant dense<0.000000e+00> : vector<1x64xf32>
      %267 = tpu.matmul %266, %265, %cst_129 {dimension_numbers = #tpu.dot_dimension_numbers<[1], [0], [0], [1], [0, 0, 1, 1], [], []>} : vector<1x64xbf16>, vector<64x64xbf16>, vector<1x64xf32> -> vector<1x64xf32>
      %268 = arith.addf %262, %267 : vector<1x64xf32>
      %c4_130 = arith.constant 4 : index
      %c0_131 = arith.constant 0 : index
      %269 = vector.load %arg34[%c4_130, %c0_131] : memref<6x64xf32, #tpu.memory_space<vmem>>, vector<1x64xf32>
      %c4_132 = arith.constant 4 : index
      %c0_133 = arith.constant 0 : index
      %c0_134 = arith.constant 0 : index
      %270 = vector.load %arg21[%c4_132, %c0_133, %c0_134] : memref<5x64x64xbf16, #tpu.memory_space<vmem>>, vector<1x64x64xbf16>
      %271 = vector.shape_cast %270 : vector<1x64x64xbf16> to vector<64x64xbf16>
      %272 = arith.truncf %269 : vector<1x64xf32> to vector<1x64xbf16>
      %cst_135 = arith.constant dense<0.000000e+00> : vector<1x64xf32>
      %273 = tpu.matmul %272, %271, %cst_135 {dimension_numbers = #tpu.dot_dimension_numbers<[1], [0], [0], [1], [0, 0, 1, 1], [], []>} : vector<1x64xbf16>, vector<64x64xbf16>, vector<1x64xf32> -> vector<1x64xf32>
      %274 = arith.addf %268, %273 : vector<1x64xf32>
      %c0_136 = arith.constant 0 : index
      %c0_137 = arith.constant 0 : index
      %275 = vector.load %arg23[%c0_136, %c0_137] : memref<1x64xf32, #tpu.memory_space<vmem>>, vector<1x64xf32>
      %276 = arith.mulf %274, %275 : vector<1x64xf32>
      %c0_138 = arith.constant 0 : index
      %c0_139 = arith.constant 0 : index
      %277 = vector.load %arg24[%c0_138, %c0_139] : memref<1x64xf32, #tpu.memory_space<vmem>>, vector<1x64xf32>
      %278 = arith.addf %276, %277 : vector<1x64xf32>
      %cst_140 = arith.constant 0.000000e+00 : f32
      %279 = vector.broadcast %cst_140 : f32 to vector<1x64xf32>
      %280 = arith.maximumf %278, %279 : vector<1x64xf32>
      %c5 = arith.constant 5 : index
      %c0_141 = arith.constant 0 : index
      %281 = vector.load %arg34[%c5, %c0_141] : memref<6x64xf32, #tpu.memory_space<vmem>>, vector<1x64xf32>
      tpu.vector_store %arg34[%c5, %c0_141], %280 {strides = array<i32>} : memref<6x64xf32, #tpu.memory_space<vmem>>, vector<1x64xf32>,
      %c0_142 = arith.constant 0 : index
      %c0_143 = arith.constant 0 : index
      %282 = vector.load %arg34[%c0_142, %c0_143] : memref<6x64xf32, #tpu.memory_space<vmem>>, vector<6x64xf32>
      %c0_144 = arith.constant 0 : index
      %c0_145 = arith.constant 0 : index
      %c0_146 = arith.constant 0 : index
      %283 = vector.load %arg31[%c0_144, %c0_145, %c0_146] : memref<1x6x64xf32, #tpu.memory_space<vmem>>, vector<1x6x64xf32>
      %284 = vector.shape_cast %283 : vector<1x6x64xf32> to vector<6x64xf32>
      %285 = vector.shape_cast %282 : vector<6x64xf32> to vector<1x6x64xf32>
      tpu.vector_store %arg31[%c0_144, %c0_145, %c0_146], %285 {strides = array<i32>} : memref<1x6x64xf32, #tpu.memory_space<vmem>>, vector<1x6x64xf32>,
      %c0_147 = arith.constant 0 : index
      %c0_148 = arith.constant 0 : index
      %286 = vector.load %arg34[%c0_147, %c0_148] : memref<6x64xf32, #tpu.memory_space<vmem>>, vector<1x64xf32>
      %c0_149 = arith.constant 0 : index
      %c0_150 = arith.constant 0 : index
      %c0_151 = arith.constant 0 : index
      %287 = vector.load %arg25[%c0_149, %c0_150, %c0_151] : memref<6x64x32xbf16, #tpu.memory_space<vmem>>, vector<1x64x32xbf16>
      %288 = vector.shape_cast %287 : vector<1x64x32xbf16> to vector<64x32xbf16>
      %289 = arith.truncf %286 : vector<1x64xf32> to vector<1x64xbf16>
      %cst_152 = arith.constant dense<0.000000e+00> : vector<1x32xf32>
      %290 = tpu.matmul %289, %288, %cst_152 {dimension_numbers = #tpu.dot_dimension_numbers<[1], [0], [0], [1], [0, 0, 1, 1], [], []>} : vector<1x64xbf16>, vector<64x32xbf16>, vector<1x32xf32> -> vector<1x32xf32>
      %c0_153 = arith.constant 0 : index
      %c0_154 = arith.constant 0 : index
      %c0_155 = arith.constant 0 : index
      %291 = vector.load %arg26[%c0_153, %c0_154, %c0_155] : memref<6x1x32xf32, #tpu.memory_space<vmem>>, vector<1x1x32xf32>
      %292 = vector.shape_cast %291 : vector<1x1x32xf32> to vector<1x32xf32>
      %293 = arith.addf %290, %292 : vector<1x32xf32>
      %c0_156 = arith.constant 0 : index
      %c0_157 = arith.constant 0 : index
      %c0_158 = arith.constant 0 : index
      %294 = vector.load %arg27[%c0_156, %c0_157, %c0_158] : memref<6x1x32xf32, #tpu.memory_space<vmem>>, vector<1x1x32xf32>
      %295 = vector.shape_cast %294 : vector<1x1x32xf32> to vector<1x32xf32>
      %296 = arith.mulf %293, %295 : vector<1x32xf32>
      %c0_159 = arith.constant 0 : index
      %c0_160 = arith.constant 0 : index
      %c0_161 = arith.constant 0 : index
      %297 = vector.load %arg28[%c0_159, %c0_160, %c0_161] : memref<6x1x32xf32, #tpu.memory_space<vmem>>, vector<1x1x32xf32>
      %298 = vector.shape_cast %297 : vector<1x1x32xf32> to vector<1x32xf32>
      %299 = arith.addf %296, %298 : vector<1x32xf32>
      %c0_162 = arith.constant 0 : index
      %c0_163 = arith.constant 0 : index
      %c0_164 = arith.constant 0 : index
      %300 = vector.load %arg29[%c0_162, %c0_163, %c0_164] : memref<6x32x10xbf16, #tpu.memory_space<vmem>>, vector<1x32x10xbf16>
      %301 = vector.shape_cast %300 : vector<1x32x10xbf16> to vector<32x10xbf16>
      %302 = arith.truncf %299 : vector<1x32xf32> to vector<1x32xbf16>
      %cst_165 = arith.constant dense<0.000000e+00> : vector<1x10xf32>
      %303 = tpu.matmul %302, %301, %cst_165 {dimension_numbers = #tpu.dot_dimension_numbers<[1], [0], [0], [1], [0, 0, 1, 1], [], []>} : vector<1x32xbf16>, vector<32x10xbf16>, vector<1x10xf32> -> vector<1x10xf32>
      %c0_166 = arith.constant 0 : index
      %c0_167 = arith.constant 0 : index
      %c0_168 = arith.constant 0 : index
      %304 = vector.load %arg30[%c0_166, %c0_167, %c0_168] : memref<6x1x10xf32, #tpu.memory_space<vmem>>, vector<1x1x10xf32>
      %305 = vector.shape_cast %304 : vector<1x1x10xf32> to vector<1x10xf32>
      %306 = arith.addf %303, %305 : vector<1x10xf32>
      %c0_169 = arith.constant 0 : index
      %c0_170 = arith.constant 0 : index
      %307 = vector.load %arg35[%c0_169, %c0_170] : memref<6x10xf32, #tpu.memory_space<vmem>>, vector<1x10xf32>
      tpu.vector_store %arg35[%c0_169, %c0_170], %306 {strides = array<i32>} : memref<6x10xf32, #tpu.memory_space<vmem>>, vector<1x10xf32>,
      %c1_171 = arith.constant 1 : index
      %c0_172 = arith.constant 0 : index
      %308 = vector.load %arg34[%c1_171, %c0_172] : memref<6x64xf32, #tpu.memory_space<vmem>>, vector<1x64xf32>
      %c1_173 = arith.constant 1 : index
      %c0_174 = arith.constant 0 : index
      %c0_175 = arith.constant 0 : index
      %309 = vector.load %arg25[%c1_173, %c0_174, %c0_175] : memref<6x64x32xbf16, #tpu.memory_space<vmem>>, vector<1x64x32xbf16>
      %310 = vector.shape_cast %309 : vector<1x64x32xbf16> to vector<64x32xbf16>
      %311 = arith.truncf %308 : vector<1x64xf32> to vector<1x64xbf16>
      %cst_176 = arith.constant dense<0.000000e+00> : vector<1x32xf32>
      %312 = tpu.matmul %311, %310, %cst_176 {dimension_numbers = #tpu.dot_dimension_numbers<[1], [0], [0], [1], [0, 0, 1, 1], [], []>} : vector<1x64xbf16>, vector<64x32xbf16>, vector<1x32xf32> -> vector<1x32xf32>
      %c1_177 = arith.constant 1 : index
      %c0_178 = arith.constant 0 : index
      %c0_179 = arith.constant 0 : index
      %313 = vector.load %arg26[%c1_177, %c0_178, %c0_179] : memref<6x1x32xf32, #tpu.memory_space<vmem>>, vector<1x1x32xf32>
      %314 = vector.shape_cast %313 : vector<1x1x32xf32> to vector<1x32xf32>
      %315 = arith.addf %312, %314 : vector<1x32xf32>
      %c1_180 = arith.constant 1 : index
      %c0_181 = arith.constant 0 : index
      %c0_182 = arith.constant 0 : index
      %316 = vector.load %arg27[%c1_180, %c0_181, %c0_182] : memref<6x1x32xf32, #tpu.memory_space<vmem>>, vector<1x1x32xf32>
      %317 = vector.shape_cast %316 : vector<1x1x32xf32> to vector<1x32xf32>
      %318 = arith.mulf %315, %317 : vector<1x32xf32>
      %c1_183 = arith.constant 1 : index
      %c0_184 = arith.constant 0 : index
      %c0_185 = arith.constant 0 : index
      %319 = vector.load %arg28[%c1_183, %c0_184, %c0_185] : memref<6x1x32xf32, #tpu.memory_space<vmem>>, vector<1x1x32xf32>
      %320 = vector.shape_cast %319 : vector<1x1x32xf32> to vector<1x32xf32>
      %321 = arith.addf %318, %320 : vector<1x32xf32>
      %c1_186 = arith.constant 1 : index
      %c0_187 = arith.constant 0 : index
      %c0_188 = arith.constant 0 : index
      %322 = vector.load %arg29[%c1_186, %c0_187, %c0_188] : memref<6x32x10xbf16, #tpu.memory_space<vmem>>, vector<1x32x10xbf16>
      %323 = vector.shape_cast %322 : vector<1x32x10xbf16> to vector<32x10xbf16>
      %324 = arith.truncf %321 : vector<1x32xf32> to vector<1x32xbf16>
      %cst_189 = arith.constant dense<0.000000e+00> : vector<1x10xf32>
      %325 = tpu.matmul %324, %323, %cst_189 {dimension_numbers = #tpu.dot_dimension_numbers<[1], [0], [0], [1], [0, 0, 1, 1], [], []>} : vector<1x32xbf16>, vector<32x10xbf16>, vector<1x10xf32> -> vector<1x10xf32>
      %c1_190 = arith.constant 1 : index
      %c0_191 = arith.constant 0 : index
      %c0_192 = arith.constant 0 : index
      %326 = vector.load %arg30[%c1_190, %c0_191, %c0_192] : memref<6x1x10xf32, #tpu.memory_space<vmem>>, vector<1x1x10xf32>
      %327 = vector.shape_cast %326 : vector<1x1x10xf32> to vector<1x10xf32>
      %328 = arith.addf %325, %327 : vector<1x10xf32>
      %c1_193 = arith.constant 1 : index
      %c0_194 = arith.constant 0 : index
      %329 = vector.load %arg35[%c1_193, %c0_194] : memref<6x10xf32, #tpu.memory_space<vmem>>, vector<1x10xf32>
      tpu.vector_store %arg35[%c1_193, %c0_194], %328 {strides = array<i32>} : memref<6x10xf32, #tpu.memory_space<vmem>>, vector<1x10xf32>,
      %c2_195 = arith.constant 2 : index
      %c0_196 = arith.constant 0 : index
      %330 = vector.load %arg34[%c2_195, %c0_196] : memref<6x64xf32, #tpu.memory_space<vmem>>, vector<1x64xf32>
      %c2_197 = arith.constant 2 : index
      %c0_198 = arith.constant 0 : index
      %c0_199 = arith.constant 0 : index
      %331 = vector.load %arg25[%c2_197, %c0_198, %c0_199] : memref<6x64x32xbf16, #tpu.memory_space<vmem>>, vector<1x64x32xbf16>
      %332 = vector.shape_cast %331 : vector<1x64x32xbf16> to vector<64x32xbf16>
      %333 = arith.truncf %330 : vector<1x64xf32> to vector<1x64xbf16>
      %cst_200 = arith.constant dense<0.000000e+00> : vector<1x32xf32>
      %334 = tpu.matmul %333, %332, %cst_200 {dimension_numbers = #tpu.dot_dimension_numbers<[1], [0], [0], [1], [0, 0, 1, 1], [], []>} : vector<1x64xbf16>, vector<64x32xbf16>, vector<1x32xf32> -> vector<1x32xf32>
      %c2_201 = arith.constant 2 : index
      %c0_202 = arith.constant 0 : index
      %c0_203 = arith.constant 0 : index
      %335 = vector.load %arg26[%c2_201, %c0_202, %c0_203] : memref<6x1x32xf32, #tpu.memory_space<vmem>>, vector<1x1x32xf32>
      %336 = vector.shape_cast %335 : vector<1x1x32xf32> to vector<1x32xf32>
      %337 = arith.addf %334, %336 : vector<1x32xf32>
      %c2_204 = arith.constant 2 : index
      %c0_205 = arith.constant 0 : index
      %c0_206 = arith.constant 0 : index
      %338 = vector.load %arg27[%c2_204, %c0_205, %c0_206] : memref<6x1x32xf32, #tpu.memory_space<vmem>>, vector<1x1x32xf32>
      %339 = vector.shape_cast %338 : vector<1x1x32xf32> to vector<1x32xf32>
      %340 = arith.mulf %337, %339 : vector<1x32xf32>
      %c2_207 = arith.constant 2 : index
      %c0_208 = arith.constant 0 : index
      %c0_209 = arith.constant 0 : index
      %341 = vector.load %arg28[%c2_207, %c0_208, %c0_209] : memref<6x1x32xf32, #tpu.memory_space<vmem>>, vector<1x1x32xf32>
      %342 = vector.shape_cast %341 : vector<1x1x32xf32> to vector<1x32xf32>
      %343 = arith.addf %340, %342 : vector<1x32xf32>
      %c2_210 = arith.constant 2 : index
      %c0_211 = arith.constant 0 : index
      %c0_212 = arith.constant 0 : index
      %344 = vector.load %arg29[%c2_210, %c0_211, %c0_212] : memref<6x32x10xbf16, #tpu.memory_space<vmem>>, vector<1x32x10xbf16>
      %345 = vector.shape_cast %344 : vector<1x32x10xbf16> to vector<32x10xbf16>
      %346 = arith.truncf %343 : vector<1x32xf32> to vector<1x32xbf16>
      %cst_213 = arith.constant dense<0.000000e+00> : vector<1x10xf32>
      %347 = tpu.matmul %346, %345, %cst_213 {dimension_numbers = #tpu.dot_dimension_numbers<[1], [0], [0], [1], [0, 0, 1, 1], [], []>} : vector<1x32xbf16>, vector<32x10xbf16>, vector<1x10xf32> -> vector<1x10xf32>
      %c2_214 = arith.constant 2 : index
      %c0_215 = arith.constant 0 : index
      %c0_216 = arith.constant 0 : index
      %348 = vector.load %arg30[%c2_214, %c0_215, %c0_216] : memref<6x1x10xf32, #tpu.memory_space<vmem>>, vector<1x1x10xf32>
      %349 = vector.shape_cast %348 : vector<1x1x10xf32> to vector<1x10xf32>
      %350 = arith.addf %347, %349 : vector<1x10xf32>
      %c2_217 = arith.constant 2 : index
      %c0_218 = arith.constant 0 : index
      %351 = vector.load %arg35[%c2_217, %c0_218] : memref<6x10xf32, #tpu.memory_space<vmem>>, vector<1x10xf32>
      tpu.vector_store %arg35[%c2_217, %c0_218], %350 {strides = array<i32>} : memref<6x10xf32, #tpu.memory_space<vmem>>, vector<1x10xf32>,
      %c3_219 = arith.constant 3 : index
      %c0_220 = arith.constant 0 : index
      %352 = vector.load %arg34[%c3_219, %c0_220] : memref<6x64xf32, #tpu.memory_space<vmem>>, vector<1x64xf32>
      %c3_221 = arith.constant 3 : index
      %c0_222 = arith.constant 0 : index
      %c0_223 = arith.constant 0 : index
      %353 = vector.load %arg25[%c3_221, %c0_222, %c0_223] : memref<6x64x32xbf16, #tpu.memory_space<vmem>>, vector<1x64x32xbf16>
      %354 = vector.shape_cast %353 : vector<1x64x32xbf16> to vector<64x32xbf16>
      %355 = arith.truncf %352 : vector<1x64xf32> to vector<1x64xbf16>
      %cst_224 = arith.constant dense<0.000000e+00> : vector<1x32xf32>
      %356 = tpu.matmul %355, %354, %cst_224 {dimension_numbers = #tpu.dot_dimension_numbers<[1], [0], [0], [1], [0, 0, 1, 1], [], []>} : vector<1x64xbf16>, vector<64x32xbf16>, vector<1x32xf32> -> vector<1x32xf32>
      %c3_225 = arith.constant 3 : index
      %c0_226 = arith.constant 0 : index
      %c0_227 = arith.constant 0 : index
      %357 = vector.load %arg26[%c3_225, %c0_226, %c0_227] : memref<6x1x32xf32, #tpu.memory_space<vmem>>, vector<1x1x32xf32>
      %358 = vector.shape_cast %357 : vector<1x1x32xf32> to vector<1x32xf32>
      %359 = arith.addf %356, %358 : vector<1x32xf32>
      %c3_228 = arith.constant 3 : index
      %c0_229 = arith.constant 0 : index
      %c0_230 = arith.constant 0 : index
      %360 = vector.load %arg27[%c3_228, %c0_229, %c0_230] : memref<6x1x32xf32, #tpu.memory_space<vmem>>, vector<1x1x32xf32>
      %361 = vector.shape_cast %360 : vector<1x1x32xf32> to vector<1x32xf32>
      %362 = arith.mulf %359, %361 : vector<1x32xf32>
      %c3_231 = arith.constant 3 : index
      %c0_232 = arith.constant 0 : index
      %c0_233 = arith.constant 0 : index
      %363 = vector.load %arg28[%c3_231, %c0_232, %c0_233] : memref<6x1x32xf32, #tpu.memory_space<vmem>>, vector<1x1x32xf32>
      %364 = vector.shape_cast %363 : vector<1x1x32xf32> to vector<1x32xf32>
      %365 = arith.addf %362, %364 : vector<1x32xf32>
      %c3_234 = arith.constant 3 : index
      %c0_235 = arith.constant 0 : index
      %c0_236 = arith.constant 0 : index
      %366 = vector.load %arg29[%c3_234, %c0_235, %c0_236] : memref<6x32x10xbf16, #tpu.memory_space<vmem>>, vector<1x32x10xbf16>
      %367 = vector.shape_cast %366 : vector<1x32x10xbf16> to vector<32x10xbf16>
      %368 = arith.truncf %365 : vector<1x32xf32> to vector<1x32xbf16>
      %cst_237 = arith.constant dense<0.000000e+00> : vector<1x10xf32>
      %369 = tpu.matmul %368, %367, %cst_237 {dimension_numbers = #tpu.dot_dimension_numbers<[1], [0], [0], [1], [0, 0, 1, 1], [], []>} : vector<1x32xbf16>, vector<32x10xbf16>, vector<1x10xf32> -> vector<1x10xf32>
      %c3_238 = arith.constant 3 : index
      %c0_239 = arith.constant 0 : index
      %c0_240 = arith.constant 0 : index
      %370 = vector.load %arg30[%c3_238, %c0_239, %c0_240] : memref<6x1x10xf32, #tpu.memory_space<vmem>>, vector<1x1x10xf32>
      %371 = vector.shape_cast %370 : vector<1x1x10xf32> to vector<1x10xf32>
      %372 = arith.addf %369, %371 : vector<1x10xf32>
      %c3_241 = arith.constant 3 : index
      %c0_242 = arith.constant 0 : index
      %373 = vector.load %arg35[%c3_241, %c0_242] : memref<6x10xf32, #tpu.memory_space<vmem>>, vector<1x10xf32>
      tpu.vector_store %arg35[%c3_241, %c0_242], %372 {strides = array<i32>} : memref<6x10xf32, #tpu.memory_space<vmem>>, vector<1x10xf32>,
      %c4_243 = arith.constant 4 : index
      %c0_244 = arith.constant 0 : index
      %374 = vector.load %arg34[%c4_243, %c0_244] : memref<6x64xf32, #tpu.memory_space<vmem>>, vector<1x64xf32>
      %c4_245 = arith.constant 4 : index
      %c0_246 = arith.constant 0 : index
      %c0_247 = arith.constant 0 : index
      %375 = vector.load %arg25[%c4_245, %c0_246, %c0_247] : memref<6x64x32xbf16, #tpu.memory_space<vmem>>, vector<1x64x32xbf16>
      %376 = vector.shape_cast %375 : vector<1x64x32xbf16> to vector<64x32xbf16>
      %377 = arith.truncf %374 : vector<1x64xf32> to vector<1x64xbf16>
      %cst_248 = arith.constant dense<0.000000e+00> : vector<1x32xf32>
      %378 = tpu.matmul %377, %376, %cst_248 {dimension_numbers = #tpu.dot_dimension_numbers<[1], [0], [0], [1], [0, 0, 1, 1], [], []>} : vector<1x64xbf16>, vector<64x32xbf16>, vector<1x32xf32> -> vector<1x32xf32>
      %c4_249 = arith.constant 4 : index
      %c0_250 = arith.constant 0 : index
      %c0_251 = arith.constant 0 : index
      %379 = vector.load %arg26[%c4_249, %c0_250, %c0_251] : memref<6x1x32xf32, #tpu.memory_space<vmem>>, vector<1x1x32xf32>
      %380 = vector.shape_cast %379 : vector<1x1x32xf32> to vector<1x32xf32>
      %381 = arith.addf %378, %380 : vector<1x32xf32>
      %c4_252 = arith.constant 4 : index
      %c0_253 = arith.constant 0 : index
      %c0_254 = arith.constant 0 : index
      %382 = vector.load %arg27[%c4_252, %c0_253, %c0_254] : memref<6x1x32xf32, #tpu.memory_space<vmem>>, vector<1x1x32xf32>
      %383 = vector.shape_cast %382 : vector<1x1x32xf32> to vector<1x32xf32>
      %384 = arith.mulf %381, %383 : vector<1x32xf32>
      %c4_255 = arith.constant 4 : index
      %c0_256 = arith.constant 0 : index
      %c0_257 = arith.constant 0 : index
      %385 = vector.load %arg28[%c4_255, %c0_256, %c0_257] : memref<6x1x32xf32, #tpu.memory_space<vmem>>, vector<1x1x32xf32>
      %386 = vector.shape_cast %385 : vector<1x1x32xf32> to vector<1x32xf32>
      %387 = arith.addf %384, %386 : vector<1x32xf32>
      %c4_258 = arith.constant 4 : index
      %c0_259 = arith.constant 0 : index
      %c0_260 = arith.constant 0 : index
      %388 = vector.load %arg29[%c4_258, %c0_259, %c0_260] : memref<6x32x10xbf16, #tpu.memory_space<vmem>>, vector<1x32x10xbf16>
      %389 = vector.shape_cast %388 : vector<1x32x10xbf16> to vector<32x10xbf16>
      %390 = arith.truncf %387 : vector<1x32xf32> to vector<1x32xbf16>
      %cst_261 = arith.constant dense<0.000000e+00> : vector<1x10xf32>
      %391 = tpu.matmul %390, %389, %cst_261 {dimension_numbers = #tpu.dot_dimension_numbers<[1], [0], [0], [1], [0, 0, 1, 1], [], []>} : vector<1x32xbf16>, vector<32x10xbf16>, vector<1x10xf32> -> vector<1x10xf32>
      %c4_262 = arith.constant 4 : index
      %c0_263 = arith.constant 0 : index
      %c0_264 = arith.constant 0 : index
      %392 = vector.load %arg30[%c4_262, %c0_263, %c0_264] : memref<6x1x10xf32, #tpu.memory_space<vmem>>, vector<1x1x10xf32>
      %393 = vector.shape_cast %392 : vector<1x1x10xf32> to vector<1x10xf32>
      %394 = arith.addf %391, %393 : vector<1x10xf32>
      %c4_265 = arith.constant 4 : index
      %c0_266 = arith.constant 0 : index
      %395 = vector.load %arg35[%c4_265, %c0_266] : memref<6x10xf32, #tpu.memory_space<vmem>>, vector<1x10xf32>
      tpu.vector_store %arg35[%c4_265, %c0_266], %394 {strides = array<i32>} : memref<6x10xf32, #tpu.memory_space<vmem>>, vector<1x10xf32>,
      %c5_267 = arith.constant 5 : index
      %c0_268 = arith.constant 0 : index
      %396 = vector.load %arg34[%c5_267, %c0_268] : memref<6x64xf32, #tpu.memory_space<vmem>>, vector<1x64xf32>
      %c5_269 = arith.constant 5 : index
      %c0_270 = arith.constant 0 : index
      %c0_271 = arith.constant 0 : index
      %397 = vector.load %arg25[%c5_269, %c0_270, %c0_271] : memref<6x64x32xbf16, #tpu.memory_space<vmem>>, vector<1x64x32xbf16>
      %398 = vector.shape_cast %397 : vector<1x64x32xbf16> to vector<64x32xbf16>
      %399 = arith.truncf %396 : vector<1x64xf32> to vector<1x64xbf16>
      %cst_272 = arith.constant dense<0.000000e+00> : vector<1x32xf32>
      %400 = tpu.matmul %399, %398, %cst_272 {dimension_numbers = #tpu.dot_dimension_numbers<[1], [0], [0], [1], [0, 0, 1, 1], [], []>} : vector<1x64xbf16>, vector<64x32xbf16>, vector<1x32xf32> -> vector<1x32xf32>
      %c5_273 = arith.constant 5 : index
      %c0_274 = arith.constant 0 : index
      %c0_275 = arith.constant 0 : index
      %401 = vector.load %arg26[%c5_273, %c0_274, %c0_275] : memref<6x1x32xf32, #tpu.memory_space<vmem>>, vector<1x1x32xf32>
      %402 = vector.shape_cast %401 : vector<1x1x32xf32> to vector<1x32xf32>
      %403 = arith.addf %400, %402 : vector<1x32xf32>
      %c5_276 = arith.constant 5 : index
      %c0_277 = arith.constant 0 : index
      %c0_278 = arith.constant 0 : index
      %404 = vector.load %arg27[%c5_276, %c0_277, %c0_278] : memref<6x1x32xf32, #tpu.memory_space<vmem>>, vector<1x1x32xf32>
      %405 = vector.shape_cast %404 : vector<1x1x32xf32> to vector<1x32xf32>
      %406 = arith.mulf %403, %405 : vector<1x32xf32>
      %c5_279 = arith.constant 5 : index
      %c0_280 = arith.constant 0 : index
      %c0_281 = arith.constant 0 : index
      %407 = vector.load %arg28[%c5_279, %c0_280, %c0_281] : memref<6x1x32xf32, #tpu.memory_space<vmem>>, vector<1x1x32xf32>
      %408 = vector.shape_cast %407 : vector<1x1x32xf32> to vector<1x32xf32>
      %409 = arith.addf %406, %408 : vector<1x32xf32>
      %c5_282 = arith.constant 5 : index
      %c0_283 = arith.constant 0 : index
      %c0_284 = arith.constant 0 : index
      %410 = vector.load %arg29[%c5_282, %c0_283, %c0_284] : memref<6x32x10xbf16, #tpu.memory_space<vmem>>, vector<1x32x10xbf16>
      %411 = vector.shape_cast %410 : vector<1x32x10xbf16> to vector<32x10xbf16>
      %412 = arith.truncf %409 : vector<1x32xf32> to vector<1x32xbf16>
      %cst_285 = arith.constant dense<0.000000e+00> : vector<1x10xf32>
      %413 = tpu.matmul %412, %411, %cst_285 {dimension_numbers = #tpu.dot_dimension_numbers<[1], [0], [0], [1], [0, 0, 1, 1], [], []>} : vector<1x32xbf16>, vector<32x10xbf16>, vector<1x10xf32> -> vector<1x10xf32>
      %c5_286 = arith.constant 5 : index
      %c0_287 = arith.constant 0 : index
      %c0_288 = arith.constant 0 : index
      %414 = vector.load %arg30[%c5_286, %c0_287, %c0_288] : memref<6x1x10xf32, #tpu.memory_space<vmem>>, vector<1x1x10xf32>
      %415 = vector.shape_cast %414 : vector<1x1x10xf32> to vector<1x10xf32>
      %416 = arith.addf %413, %415 : vector<1x10xf32>
      %c5_289 = arith.constant 5 : index
      %c0_290 = arith.constant 0 : index
      %417 = vector.load %arg35[%c5_289, %c0_290] : memref<6x10xf32, #tpu.memory_space<vmem>>, vector<1x10xf32>
      tpu.vector_store %arg35[%c5_289, %c0_290], %416 {strides = array<i32>} : memref<6x10xf32, #tpu.memory_space<vmem>>, vector<1x10xf32>,
      %c0_291 = arith.constant 0 : index
      %c0_292 = arith.constant 0 : index
      %418 = vector.load %arg35[%c0_291, %c0_292] : memref<6x10xf32, #tpu.memory_space<vmem>>, vector<6x10xf32>
      %c0_293 = arith.constant 0 : index
      %c0_294 = arith.constant 0 : index
      %c0_295 = arith.constant 0 : index
      %419 = vector.load %arg32[%c0_293, %c0_294, %c0_295] : memref<1x6x10xf32, #tpu.memory_space<vmem>>, vector<1x6x10xf32>
      %420 = vector.shape_cast %419 : vector<1x6x10xf32> to vector<6x10xf32>
      %421 = vector.shape_cast %418 : vector<6x10xf32> to vector<1x6x10xf32>
      tpu.vector_store %arg32[%c0_293, %c0_294, %c0_295], %421 {strides = array<i32>} : memref<1x6x10xf32, #tpu.memory_space<vmem>>, vector<1x6x10xf32>,
    } else {
    }
    return
  }
  func.func @transform_0(%arg0: i32, %arg1: i32) -> (i32, i32, i32) {
    %c0_i32 = arith.constant 0 : i32
    %c0_i32_0 = arith.constant 0 : i32
    %c0_i32_1 = arith.constant 0 : i32
    return %arg0, %c0_i32, %c0_i32_0 : i32, i32, i32
  }
  func.func @transform_1(%arg0: i32, %arg1: i32) -> (i32, i32) {
    %c0_i32 = arith.constant 0 : i32
    %c0_i32_0 = arith.constant 0 : i32
    %c0_i32_1 = arith.constant 0 : i32
    return %c0_i32, %c0_i32_0 : i32, i32
  }
  func.func @transform_2(%arg0: i32, %arg1: i32) -> (i32, i32) {
    %c0_i32 = arith.constant 0 : i32
    %c0_i32_0 = arith.constant 0 : i32
    %c0_i32_1 = arith.constant 0 : i32
    return %c0_i32, %c0_i32_0 : i32, i32
  }
  func.func @transform_3(%arg0: i32, %arg1: i32) -> (i32, i32) {
    %c0_i32 = arith.constant 0 : i32
    %c0_i32_0 = arith.constant 0 : i32
    %c0_i32_1 = arith.constant 0 : i32
    return %c0_i32, %c0_i32_0 : i32, i32
  }
  func.func @transform_4(%arg0: i32, %arg1: i32) -> (i32, i32) {
    %c0_i32 = arith.constant 0 : i32
    %c0_i32_0 = arith.constant 0 : i32
    %c0_i32_1 = arith.constant 0 : i32
    return %c0_i32, %c0_i32_0 : i32, i32
  }
  func.func @transform_5(%arg0: i32, %arg1: i32) -> (i32, i32, i32) {
    %c0_i32 = arith.constant 0 : i32
    %c0_i32_0 = arith.constant 0 : i32
    %c0_i32_1 = arith.constant 0 : i32
    return %arg1, %c0_i32, %c0_i32_0 : i32, i32, i32
  }
  func.func @transform_6(%arg0: i32, %arg1: i32) -> (i32, i32, i32) {
    %c0_i32 = arith.constant 0 : i32
    %c0_i32_0 = arith.constant 0 : i32
    %c0_i32_1 = arith.constant 0 : i32
    return %arg1, %c0_i32, %c0_i32_0 : i32, i32, i32
  }
  func.func @transform_7(%arg0: i32, %arg1: i32) -> (i32, i32, i32) {
    %c0_i32 = arith.constant 0 : i32
    %c0_i32_0 = arith.constant 0 : i32
    %c0_i32_1 = arith.constant 0 : i32
    return %arg1, %c0_i32, %c0_i32_0 : i32, i32, i32
  }
  func.func @transform_8(%arg0: i32, %arg1: i32) -> (i32, i32, i32) {
    %c0_i32 = arith.constant 0 : i32
    %c0_i32_0 = arith.constant 0 : i32
    %c0_i32_1 = arith.constant 0 : i32
    return %arg1, %c0_i32, %c0_i32_0 : i32, i32, i32
  }
  func.func @transform_9(%arg0: i32, %arg1: i32) -> (i32, i32, i32) {
    %c0_i32 = arith.constant 0 : i32
    %c0_i32_0 = arith.constant 0 : i32
    %c0_i32_1 = arith.constant 0 : i32
    return %arg1, %c0_i32, %c0_i32_0 : i32, i32, i32
  }
  func.func @transform_10(%arg0: i32, %arg1: i32) -> (i32, i32, i32) {
    %c0_i32 = arith.constant 0 : i32
    %c0_i32_0 = arith.constant 0 : i32
    %c0_i32_1 = arith.constant 0 : i32
    return %arg1, %c0_i32, %c0_i32_0 : i32, i32, i32
  }
  func.func @transform_11(%arg0: i32, %arg1: i32) -> (i32, i32, i32) {
    %c0_i32 = arith.constant 0 : i32
    %c0_i32_0 = arith.constant 0 : i32
    %c0_i32_1 = arith.constant 0 : i32
    return %arg1, %c0_i32, %c0_i32_0 : i32, i32, i32
  }
  func.func @transform_12(%arg0: i32, %arg1: i32) -> (i32, i32, i32) {
    %c0_i32 = arith.constant 0 : i32
    %c0_i32_0 = arith.constant 0 : i32
    %c0_i32_1 = arith.constant 0 : i32
    return %arg1, %c0_i32, %c0_i32_0 : i32, i32, i32
  }
  func.func @transform_13(%arg0: i32, %arg1: i32) -> (i32, i32, i32) {
    %c0_i32 = arith.constant 0 : i32
    %c0_i32_0 = arith.constant 0 : i32
    %c0_i32_1 = arith.constant 0 : i32
    return %arg1, %c0_i32, %c0_i32_0 : i32, i32, i32
  }
  func.func @transform_14(%arg0: i32, %arg1: i32) -> (i32, i32, i32) {
    %c0_i32 = arith.constant 0 : i32
    %c0_i32_0 = arith.constant 0 : i32
    %c0_i32_1 = arith.constant 0 : i32
    return %arg1, %c0_i32, %c0_i32_0 : i32, i32, i32
  }
  func.func @transform_15(%arg0: i32, %arg1: i32) -> (i32, i32, i32) {
    %c0_i32 = arith.constant 0 : i32
    %c0_i32_0 = arith.constant 0 : i32
    %c0_i32_1 = arith.constant 0 : i32
    return %arg1, %c0_i32, %c0_i32_0 : i32, i32, i32
  }
  func.func @transform_16(%arg0: i32, %arg1: i32) -> (i32, i32, i32) {
    %c0_i32 = arith.constant 0 : i32
    %c0_i32_0 = arith.constant 0 : i32
    %c0_i32_1 = arith.constant 0 : i32
    return %arg1, %c0_i32, %c0_i32_0 : i32, i32, i32
  }
  func.func @transform_17(%arg0: i32, %arg1: i32) -> (i32, i32) {
    %c0_i32 = arith.constant 0 : i32
    %c0_i32_0 = arith.constant 0 : i32
    %c0_i32_1 = arith.constant 0 : i32
    return %c0_i32, %c0_i32_0 : i32, i32
  }
  func.func @transform_18(%arg0: i32, %arg1: i32) -> (i32, i32) {
    %c0_i32 = arith.constant 0 : i32
    %c0_i32_0 = arith.constant 0 : i32
    %c0_i32_1 = arith.constant 0 : i32
    return %c0_i32, %c0_i32_0 : i32, i32
  }
  func.func @transform_19(%arg0: i32, %arg1: i32) -> (i32, i32, i32) {
    %c0_i32 = arith.constant 0 : i32
    %c0_i32_0 = arith.constant 0 : i32
    %c0_i32_1 = arith.constant 0 : i32
    %c0_i32_2 = arith.constant 0 : i32
    return %c0_i32, %c0_i32_0, %c0_i32_1 : i32, i32, i32
  }
  func.func @transform_20(%arg0: i32, %arg1: i32) -> (i32, i32) {
    %c0_i32 = arith.constant 0 : i32
    %c0_i32_0 = arith.constant 0 : i32
    %c0_i32_1 = arith.constant 0 : i32
    return %c0_i32, %c0_i32_0 : i32, i32
  }
  func.func @transform_21(%arg0: i32, %arg1: i32) -> (i32, i32) {
    %c0_i32 = arith.constant 0 : i32
    %c0_i32_0 = arith.constant 0 : i32
    %c0_i32_1 = arith.constant 0 : i32
    return %c0_i32, %c0_i32_0 : i32, i32
  }
  func.func @transform_22(%arg0: i32, %arg1: i32) -> (i32, i32) {
    %c0_i32 = arith.constant 0 : i32
    %c0_i32_0 = arith.constant 0 : i32
    %c0_i32_1 = arith.constant 0 : i32
    return %c0_i32, %c0_i32_0 : i32, i32
  }
  func.func @transform_23(%arg0: i32, %arg1: i32) -> (i32, i32, i32) {
    %c0_i32 = arith.constant 0 : i32
    %c0_i32_0 = arith.constant 0 : i32
    %c0_i32_1 = arith.constant 0 : i32
    %c0_i32_2 = arith.constant 0 : i32
    return %c0_i32, %c0_i32_0, %c0_i32_1 : i32, i32, i32
  }
  func.func @transform_24(%arg0: i32, %arg1: i32) -> (i32, i32, i32) {
    %c0_i32 = arith.constant 0 : i32
    %c0_i32_0 = arith.constant 0 : i32
    %c0_i32_1 = arith.constant 0 : i32
    %c0_i32_2 = arith.constant 0 : i32
    return %c0_i32, %c0_i32_0, %c0_i32_1 : i32, i32, i32
  }
  func.func @transform_25(%arg0: i32, %arg1: i32) -> (i32, i32, i32) {
    %c0_i32 = arith.constant 0 : i32
    %c0_i32_0 = arith.constant 0 : i32
    %c0_i32_1 = arith.constant 0 : i32
    %c0_i32_2 = arith.constant 0 : i32
    return %c0_i32, %c0_i32_0, %c0_i32_1 : i32, i32, i32
  }
  func.func @transform_26(%arg0: i32, %arg1: i32) -> (i32, i32, i32) {
    %c0_i32 = arith.constant 0 : i32
    %c0_i32_0 = arith.constant 0 : i32
    %c0_i32_1 = arith.constant 0 : i32
    %c0_i32_2 = arith.constant 0 : i32
    return %c0_i32, %c0_i32_0, %c0_i32_1 : i32, i32, i32
  }
  func.func @transform_27(%arg0: i32, %arg1: i32) -> (i32, i32, i32) {
    %c0_i32 = arith.constant 0 : i32
    %c0_i32_0 = arith.constant 0 : i32
    %c0_i32_1 = arith.constant 0 : i32
    %c0_i32_2 = arith.constant 0 : i32
    return %c0_i32, %c0_i32_0, %c0_i32_1 : i32, i32, i32
  }
  func.func @transform_28(%arg0: i32, %arg1: i32) -> (i32, i32, i32) {
    %c0_i32 = arith.constant 0 : i32
    %c0_i32_0 = arith.constant 0 : i32
    %c0_i32_1 = arith.constant 0 : i32
    %c0_i32_2 = arith.constant 0 : i32
    return %c0_i32, %c0_i32_0, %c0_i32_1 : i32, i32, i32
  }
  func.func @transform_29(%arg0: i32, %arg1: i32) -> (i32, i32, i32) {
    %c0_i32 = arith.constant 0 : i32
    %c0_i32_0 = arith.constant 0 : i32
    %c0_i32_1 = arith.constant 0 : i32
    return %arg0, %c0_i32, %c0_i32_0 : i32, i32, i32
  }
  func.func @transform_30(%arg0: i32, %arg1: i32) -> (i32, i32, i32) {
    %c0_i32 = arith.constant 0 : i32
    %c0_i32_0 = arith.constant 0 : i32
    %c0_i32_1 = arith.constant 0 : i32
    return %arg0, %c0_i32, %c0_i32_0 : i32, i32, i32
  }
}

</mosaic_0001>

<llo_original>
// kernel: fsra_forward.1
$region0: #{fsra_forward.1}
  #allocation0 [shape = 'u32[]', space=smem, size = 0x4, offset = 0x4, fixed_abs, tag = 'smem constant byte address 0x4 - core index']
  #allocation1 [shape = 'u32[144,128]{1,0:T(1,128)}', space=vmem, size = 0x12000, scoped, tag = 'internal scratch']
  #allocation2 [shape = 'f32[5,64]{1,0:T(8,128)}', space=vmem, size = 0x1000, scoped, tag = 'scratch operand']
  #allocation3 [shape = 'f32[6,64]{1,0:T(8,128)}', space=vmem, size = 0x1000, scoped, tag = 'scratch operand']
  #allocation4 [shape = 'f32[6,10]{1,0:T(8,128)}', space=vmem, size = 0x1000, scoped, tag = 'scratch operand']
  %s0 = inlined_call_operand.smem [shape: u32[31], index: -1, kind: input, shape index: {}]
  %s1 = sld [smem:[%s0]]
  %s2 = scalar_lea.smem %s0, 1
  %s3 = sld [smem:[%s2]]
  %s4 = scalar_lea.smem %s0, 2
  %s5 = sld [smem:[%s4]]
  %s6 = scalar_lea.smem %s0, 3
  %s7 = sld [smem:[%s6]]
  %s8 = scalar_lea.smem %s0, 4
  %s9 = sld [smem:[%s8]]
  %s10 = scalar_lea.smem %s0, 5
  %s11 = sld [smem:[%s10]]
  %s12 = scalar_lea.smem %s0, 6
  %s13 = sld [smem:[%s12]]
  %s14 = scalar_lea.smem %s0, 7
  %s15 = sld [smem:[%s14]]
  %s16 = scalar_lea.smem %s0, 8
  %s17 = sld [smem:[%s16]]
  %s18 = scalar_lea.smem %s0, 9
  %s19 = sld [smem:[%s18]]
  %s20 = scalar_lea.smem %s0, 10
  %s21 = sld [smem:[%s20]]
  %s22 = scalar_lea.smem %s0, 11
  %s23 = sld [smem:[%s22]]
  %s24 = scalar_lea.smem %s0, 12
  %s25 = sld [smem:[%s24]]
  %s26 = scalar_lea.smem %s0, 13
  %s27 = sld [smem:[%s26]]
  %s28 = scalar_lea.smem %s0, 14
  %s29 = sld [smem:[%s28]]
  %s30 = scalar_lea.smem %s0, 15
  %s31 = sld [smem:[%s30]]
  %s32 = scalar_lea.smem %s0, 16
  %s33 = sld [smem:[%s32]]
  %s34 = scalar_lea.smem %s0, 17
  %s35 = sld [smem:[%s34]]
  %s36 = scalar_lea.smem %s0, 18
  %s37 = sld [smem:[%s36]]
  %s38 = scalar_lea.smem %s0, 19
  %s39 = sld [smem:[%s38]]
  %s40 = scalar_lea.smem %s0, 20
  %s41 = sld [smem:[%s40]]
  %s42 = scalar_lea.smem %s0, 21
  %s43 = sld [smem:[%s42]]
  %s44 = scalar_lea.smem %s0, 22
  %s45 = sld [smem:[%s44]]
  %s46 = scalar_lea.smem %s0, 23
  %s47 = sld [smem:[%s46]]
  %s48 = scalar_lea.smem %s0, 24
  %s49 = sld [smem:[%s48]]
  %s50 = scalar_lea.smem %s0, 25
  %s51 = sld [smem:[%s50]]
  %s52 = scalar_lea.smem %s0, 26
  %s53 = sld [smem:[%s52]]
  %s54 = scalar_lea.smem %s0, 27
  %s55 = sld [smem:[%s54]]
  %s56 = scalar_lea.smem %s0, 28
  %s57 = sld [smem:[%s56]]
  %s58 = scalar_lea.smem %s0, 29
  %s59 = sld [smem:[%s58]]
  %s60 = scalar_lea.smem %s0, 30
  %s61 = sld [smem:[%s60]]
  %62 = xla_tuple %s59, %s61
  %s63 = sld [smem:[#allocation0]]
  $region165: #{fsra_forward.1} parent=0
    _
  %s65 = ssub.s32 1, %s63
  %s66 = scalar_select 0, %s65, %s63
  loop: start=0, step=1, limit=10
  $region2: #{fsra_forward.1} parent=0 // loop_pre_header
    _
  $region3: #{fsra_forward.1} parent=0 // loop_header
    %s68 = sphi 0, %s72
    %p69 = scmp.ge.s32.totalorder %s68, 10
    %s75 = sphi 0, %s87
    %s76 = sphi 0, %s83
    %s77 = sphi 0, %s75
    %s78 = sphi 0, %s76
    %s79 = sphi 0, %s77
    %s80 = sphi 0, %s78
    %s90 = sphi 0, %s92
    %s93 = sphi 0, %s90
    %s94 = sphi 0, %s93
    %s110 = sphi 0, %s94
    %s114 = sphi 0, %s114
    %s116 = sphi 0, %s114
    %s117 = sphi 0, %s116
    %s131 = sphi 0, %s117
    %s135 = sphi 0, %s135
    %s137 = sphi 0, %s135
    %s138 = sphi 0, %s137
    %s152 = sphi 0, %s138
    %s156 = sphi 0, %s156
    %s158 = sphi 0, %s156
    %s159 = sphi 0, %s158
    %s173 = sphi 0, %s159
    %s177 = sphi 0, %s177
    %s179 = sphi 0, %s177
    %s180 = sphi 0, %s179
    %s194 = sphi 0, %s180
    %s200 = sphi 0, %s202
    %s203 = sphi 0, %s200
    %s204 = sphi 0, %s203
    %s220 = sphi 0, %s204
    %s226 = sphi 0, %s228
    %s229 = sphi 0, %s226
    %s230 = sphi 0, %s229
    %s246 = sphi 0, %s230
    %s252 = sphi 0, %s254
    %s255 = sphi 0, %s252
    %s256 = sphi 0, %s255
    %s272 = sphi 0, %s256
    %s278 = sphi 0, %s280
    %s281 = sphi 0, %s278
    %s282 = sphi 0, %s281
    %s298 = sphi 0, %s282
    %s304 = sphi 0, %s306
    %s307 = sphi 0, %s304
    %s308 = sphi 0, %s307
    %s324 = sphi 0, %s308
    %s330 = sphi 0, %s332
    %s333 = sphi 0, %s330
    %s334 = sphi 0, %s333
    %s350 = sphi 0, %s334
    %s356 = sphi 0, %s358
    %s359 = sphi 0, %s356
    %s360 = sphi 0, %s359
    %s376 = sphi 0, %s360
    %s382 = sphi 0, %s384
    %s385 = sphi 0, %s382
    %s386 = sphi 0, %s385
    %s402 = sphi 0, %s386
    %s408 = sphi 0, %s410
    %s411 = sphi 0, %s408
    %s412 = sphi 0, %s411
    %s428 = sphi 0, %s412
    %s434 = sphi 0, %s436
    %s437 = sphi 0, %s434
    %s438 = sphi 0, %s437
    %s454 = sphi 0, %s438
    %s460 = sphi 0, %s462
    %s463 = sphi 0, %s460
    %s464 = sphi 0, %s463
    %s480 = sphi 0, %s464
    %s486 = sphi 0, %s488
    %s489 = sphi 0, %s486
    %s490 = sphi 0, %s489
    %s506 = sphi 0, %s490
    %s510 = sphi 0, %s510
    %s512 = sphi 0, %s510
    %s513 = sphi 0, %s512
    %s527 = sphi 0, %s513
    %s531 = sphi 0, %s531
    %s533 = sphi 0, %s531
    %s534 = sphi 0, %s533
    %s548 = sphi 0, %s534
    %s552 = sphi 0, %s552
    %s554 = sphi 0, %s552
    %s555 = sphi 0, %s554
    %s569 = sphi 0, %s555
    %s573 = sphi 0, %s573
    %s575 = sphi 0, %s573
    %s576 = sphi 0, %s575
    %s590 = sphi 0, %s576
    %s594 = sphi 0, %s594
    %s596 = sphi 0, %s594
    %s597 = sphi 0, %s596
    %s611 = sphi 0, %s597
    %s615 = sphi 0, %s615
    %s617 = sphi 0, %s615
    %s618 = sphi 0, %s617
    %s632 = sphi 0, %s618
    %s636 = sphi 0, %s636
    %s638 = sphi 0, %s636
    %s639 = sphi 0, %s638
    %s653 = sphi 0, %s639
    %s657 = sphi 0, %s657
    %s659 = sphi 0, %s657
    %s660 = sphi 0, %s659
    %s674 = sphi 0, %s660
    %s678 = sphi 0, %s678
    %s680 = sphi 0, %s678
    %s681 = sphi 0, %s680
    %s695 = sphi 0, %s681
    %s699 = sphi 0, %s699
    %s701 = sphi 0, %s699
    %s702 = sphi 0, %s701
    %s716 = sphi 0, %s702
    %s720 = sphi 0, %s720
    %s722 = sphi 0, %s720
    %s723 = sphi 0, %s722
    %s737 = sphi 0, %s723
    %s741 = sphi 0, %s741
    %s743 = sphi 0, %s741
    %s744 = sphi 0, %s743
    %s758 = sphi 0, %s744
    %s764 = sphi 0, %s766
    %s767 = sphi 0, %s764
    %s768 = sphi 0, %s767
    %s784 = sphi 0, %s768
    %s790 = sphi 0, %s792
    %s793 = sphi 0, %s790
    %s794 = sphi 0, %s793
    %s810 = sphi 0, %s794
  $region4: #{fsra_forward.1} parent=0 // loop_header_branch
    %71 = sbr.rel (%p69) target = $region8
  $region5: #{fsra_forward.1} parent=0 // loop_body
    %s73 = ssub.s32 %s68, 1
    %s74 = ssub.s32 %s68, 2
    %s81 = sadd.s32 1, %s76
    %p82 = scmp.ge.s32.totalorder %s81, 2
    %s83 = scalar_select %p82, 0, %s81
    %s84 = sadd.s32 1, %s75
    %s85 = scalar_select %p82, %s84, %s75
    %p86 = scmp.ge.s32.totalorder %s85, 4
    %s87 = scalar_select %p86, 0, %s85
    %s88 = ssub.s32 %s75, %s87
    %p89 = scmp.eq.s32.totalorder %s88, 0
    %s91 = sadd.s32 %s90, 1
    %s92 = scalar_select %p89, %s90, %s91
    %p95 = pneg %p89
    %p96 = scmp.eq.s32.totalorder %s68, 7
    %p97 = por %p95, %p96
    %p98 = scmp.ne.s32.totalorder %s90, %s93
    %p99 = scmp.eq.s32.totalorder %s68, 0
    %p100 = por %p98, %p99
    %p101 = scmp.ne.s32.totalorder %s90, %s93
    %p102 = scmp.eq.s32.totalorder %s73, 7
    %p103 = por %p101, %p102
    %p104 = scmp.ne.s32.totalorder %s93, %s94
    %p105 = scmp.eq.s32.totalorder %s73, 0
    %p106 = por %p104, %p105
    %p107 = scmp.ne.s32.totalorder %s93, %s94
    %p108 = scmp.eq.s32.totalorder %s74, 7
    %p109 = por %p107, %p108
    %p111 = scmp.ne.s32.totalorder %s94, %s110
    %p112 = scmp.eq.s32.totalorder %s74, 0
    %p113 = por %p111, %p112
    %s115 = sadd.s32 %s114, 1
    %p118 = scmp.eq.s32.totalorder %s68, 7
    %p119 = scmp.ne.s32.totalorder %s114, %s116
    %p120 = scmp.eq.s32.totalorder %s68, 0
    %p121 = por %p119, %p120
    %p122 = scmp.ne.s32.totalorder %s114, %s116
    %p123 = scmp.eq.s32.totalorder %s73, 7
    %p124 = por %p122, %p123
    %p125 = scmp.ne.s32.totalorder %s116, %s117
    %p126 = scmp.eq.s32.totalorder %s73, 0
    %p127 = por %p125, %p126
    %p128 = scmp.ne.s32.totalorder %s116, %s117
    %p129 = scmp.eq.s32.totalorder %s74, 7
    %p130 = por %p128, %p129
    %p132 = scmp.ne.s32.totalorder %s117, %s131
    %p133 = scmp.eq.s32.totalorder %s74, 0
    %p134 = por %p132, %p133
    %s136 = sadd.s32 %s135, 1
    %p139 = scmp.eq.s32.totalorder %s68, 7
    %p140 = scmp.ne.s32.totalorder %s135, %s137
    %p141 = scmp.eq.s32.totalorder %s68, 0
    %p142 = por %p140, %p141
    %p143 = scmp.ne.s32.totalorder %s135, %s137
    %p144 = scmp.eq.s32.totalorder %s73, 7
    %p145 = por %p143, %p144
    %p146 = scmp.ne.s32.totalorder %s137, %s138
    %p147 = scmp.eq.s32.totalorder %s73, 0
    %p148 = por %p146, %p147
    %p149 = scmp.ne.s32.totalorder %s137, %s138
    %p150 = scmp.eq.s32.totalorder %s74, 7
    %p151 = por %p149, %p150
    %p153 = scmp.ne.s32.totalorder %s138, %s152
    %p154 = scmp.eq.s32.totalorder %s74, 0
    %p155 = por %p153, %p154
    %s157 = sadd.s32 %s156, 1
    %p160 = scmp.eq.s32.totalorder %s68, 7
    %p161 = scmp.ne.s32.totalorder %s156, %s158
    %p162 = scmp.eq.s32.totalorder %s68, 0
    %p163 = por %p161, %p162
    %p164 = scmp.ne.s32.totalorder %s156, %s158
    %p165 = scmp.eq.s32.totalorder %s73, 7
    %p166 = por %p164, %p165
    %p167 = scmp.ne.s32.totalorder %s158, %s159
    %p168 = scmp.eq.s32.totalorder %s73, 0
    %p169 = por %p167, %p168
    %p170 = scmp.ne.s32.totalorder %s158, %s159
    %p171 = scmp.eq.s32.totalorder %s74, 7
    %p172 = por %p170, %p171
    %p174 = scmp.ne.s32.totalorder %s159, %s173
    %p175 = scmp.eq.s32.totalorder %s74, 0
    %p176 = por %p174, %p175
    %s178 = sadd.s32 %s177, 1
    %p181 = scmp.eq.s32.totalorder %s68, 7
    %p182 = scmp.ne.s32.totalorder %s177, %s179
    %p183 = scmp.eq.s32.totalorder %s68, 0
    %p184 = por %p182, %p183
    %p185 = scmp.ne.s32.totalorder %s177, %s179
    %p186 = scmp.eq.s32.totalorder %s73, 7
    %p187 = por %p185, %p186
    %p188 = scmp.ne.s32.totalorder %s179, %s180
    %p189 = scmp.eq.s32.totalorder %s73, 0
    %p190 = por %p188, %p189
    %p191 = scmp.ne.s32.totalorder %s179, %s180
    %p192 = scmp.eq.s32.totalorder %s74, 7
    %p193 = por %p191, %p192
    %p195 = scmp.ne.s32.totalorder %s180, %s194
    %p196 = scmp.eq.s32.totalorder %s74, 0
    %p197 = por %p195, %p196
    %s198 = ssub.s32 %s76, %s83
    %p199 = scmp.eq.s32.totalorder %s198, 0
    %s201 = sadd.s32 %s200, 1
    %s202 = scalar_select %p199, %s200, %s201
    %p205 = pneg %p199
    %p206 = scmp.eq.s32.totalorder %s68, 7
    %p207 = por %p205, %p206
    %p208 = scmp.ne.s32.totalorder %s200, %s203
    %p209 = scmp.eq.s32.totalorder %s68, 0
    %p210 = por %p208, %p209
    %p211 = scmp.ne.s32.totalorder %s200, %s203
    %p212 = scmp.eq.s32.totalorder %s73, 7
    %p213 = por %p211, %p212
    %p214 = scmp.ne.s32.totalorder %s203, %s204
    %p215 = scmp.eq.s32.totalorder %s73, 0
    %p216 = por %p214, %p215
    %p217 = scmp.ne.s32.totalorder %s203, %s204
    %p218 = scmp.eq.s32.totalorder %s74, 7
    %p219 = por %p217, %p218
    %p221 = scmp.ne.s32.totalorder %s204, %s220
    %p222 = scmp.eq.s32.totalorder %s74, 0
    %p223 = por %p221, %p222
    %s224 = ssub.s32 %s76, %s83
    %p225 = scmp.eq.s32.totalorder %s224, 0
    %s227 = sadd.s32 %s226, 1
    %s228 = scalar_select %p225, %s226, %s227
    %p231 = pneg %p225
    %p232 = scmp.eq.s32.totalorder %s68, 7
    %p233 = por %p231, %p232
    %p234 = scmp.ne.s32.totalorder %s226, %s229
    %p235 = scmp.eq.s32.totalorder %s68, 0
    %p236 = por %p234, %p235
    %p237 = scmp.ne.s32.totalorder %s226, %s229
    %p238 = scmp.eq.s32.totalorder %s73, 7
    %p239 = por %p237, %p238
    %p240 = scmp.ne.s32.totalorder %s229, %s230
    %p241 = scmp.eq.s32.totalorder %s73, 0
    %p242 = por %p240, %p241
    %p243 = scmp.ne.s32.totalorder %s229, %s230
    %p244 = scmp.eq.s32.totalorder %s74, 7
    %p245 = por %p243, %p244
    %p247 = scmp.ne.s32.totalorder %s230, %s246
    %p248 = scmp.eq.s32.totalorder %s74, 0
    %p249 = por %p247, %p248
    %s250 = ssub.s32 %s76, %s83
    %p251 = scmp.eq.s32.totalorder %s250, 0
    %s253 = sadd.s32 %s252, 1
    %s254 = scalar_select %p251, %s252, %s253
    %p257 = pneg %p251
    %p258 = scmp.eq.s32.totalorder %s68, 7
    %p259 = por %p257, %p258
    %p260 = scmp.ne.s32.totalorder %s252, %s255
    %p261 = scmp.eq.s32.totalorder %s68, 0
    %p262 = por %p260, %p261
    %p263 = scmp.ne.s32.totalorder %s252, %s255
    %p264 = scmp.eq.s32.totalorder %s73, 7
    %p265 = por %p263, %p264
    %p266 = scmp.ne.s32.totalorder %s255, %s256
    %p267 = scmp.eq.s32.totalorder %s73, 0
    %p268 = por %p266, %p267
    %p269 = scmp.ne.s32.totalorder %s255, %s256
    %p270 = scmp.eq.s32.totalorder %s74, 7
    %p271 = por %p269, %p270
    %p273 = scmp.ne.s32.totalorder %s256, %s272
    %p274 = scmp.eq.s32.totalorder %s74, 0
    %p275 = por %p273, %p274
    %s276 = ssub.s32 %s76, %s83
    %p277 = scmp.eq.s32.totalorder %s276, 0
    %s279 = sadd.s32 %s278, 1
    %s280 = scalar_select %p277, %s278, %s279
    %p283 = pneg %p277
    %p284 = scmp.eq.s32.totalorder %s68, 7
    %p285 = por %p283, %p284
    %p286 = scmp.ne.s32.totalorder %s278, %s281
    %p287 = scmp.eq.s32.totalorder %s68, 0
    %p288 = por %p286, %p287
    %p289 = scmp.ne.s32.totalorder %s278, %s281
    %p290 = scmp.eq.s32.totalorder %s73, 7
    %p291 = por %p289, %p290
    %p292 = scmp.ne.s32.totalorder %s281, %s282
    %p293 = scmp.eq.s32.totalorder %s73, 0
    %p294 = por %p292, %p293
    %p295 = scmp.ne.s32.totalorder %s281, %s282
    %p296 = scmp.eq.s32.totalorder %s74, 7
    %p297 = por %p295, %p296
    %p299 = scmp.ne.s32.totalorder %s282, %s298
    %p300 = scmp.eq.s32.totalorder %s74, 0
    %p301 = por %p299, %p300
    %s302 = ssub.s32 %s76, %s83
    %p303 = scmp.eq.s32.totalorder %s302, 0
    %s305 = sadd.s32 %s304, 1
    %s306 = scalar_select %p303, %s304, %s305
    %p309 = pneg %p303
    %p310 = scmp.eq.s32.totalorder %s68, 7
    %p311 = por %p309, %p310
    %p312 = scmp.ne.s32.totalorder %s304, %s307
    %p313 = scmp.eq.s32.totalorder %s68, 0
    %p314 = por %p312, %p313
    %p315 = scmp.ne.s32.totalorder %s304, %s307
    %p316 = scmp.eq.s32.totalorder %s73, 7
    %p317 = por %p315, %p316
    %p318 = scmp.ne.s32.totalorder %s307, %s308
    %p319 = scmp.eq.s32.totalorder %s73, 0
    %p320 = por %p318, %p319
    %p321 = scmp.ne.s32.totalorder %s307, %s308
    %p322 = scmp.eq.s32.totalorder %s74, 7
    %p323 = por %p321, %p322
    %p325 = scmp.ne.s32.totalorder %s308, %s324
    %p326 = scmp.eq.s32.totalorder %s74, 0
    %p327 = por %p325, %p326
    %s328 = ssub.s32 %s76, %s83
    %p329 = scmp.eq.s32.totalorder %s328, 0
    %s331 = sadd.s32 %s330, 1
    %s332 = scalar_select %p329, %s330, %s331
    %p335 = pneg %p329
    %p336 = scmp.eq.s32.totalorder %s68, 7
    %p337 = por %p335, %p336
    %p338 = scmp.ne.s32.totalorder %s330, %s333
    %p339 = scmp.eq.s32.totalorder %s68, 0
    %p340 = por %p338, %p339
    %p341 = scmp.ne.s32.totalorder %s330, %s333
    %p342 = scmp.eq.s32.totalorder %s73, 7
    %p343 = por %p341, %p342
    %p344 = scmp.ne.s32.totalorder %s333, %s334
    %p345 = scmp.eq.s32.totalorder %s73, 0
    %p346 = por %p344, %p345
    %p347 = scmp.ne.s32.totalorder %s333, %s334
    %p348 = scmp.eq.s32.totalorder %s74, 7
    %p349 = por %p347, %p348
    %p351 = scmp.ne.s32.totalorder %s334, %s350
    %p352 = scmp.eq.s32.totalorder %s74, 0
    %p353 = por %p351, %p352
    %s354 = ssub.s32 %s76, %s83
    %p355 = scmp.eq.s32.totalorder %s354, 0
    %s357 = sadd.s32 %s356, 1
    %s358 = scalar_select %p355, %s356, %s357
    %p361 = pneg %p355
    %p362 = scmp.eq.s32.totalorder %s68, 7
    %p363 = por %p361, %p362
    %p364 = scmp.ne.s32.totalorder %s356, %s359
    %p365 = scmp.eq.s32.totalorder %s68, 0
    %p366 = por %p364, %p365
    %p367 = scmp.ne.s32.totalorder %s356, %s359
    %p368 = scmp.eq.s32.totalorder %s73, 7
    %p369 = por %p367, %p368
    %p370 = scmp.ne.s32.totalorder %s359, %s360
    %p371 = scmp.eq.s32.totalorder %s73, 0
    %p372 = por %p370, %p371
    %p373 = scmp.ne.s32.totalorder %s359, %s360
    %p374 = scmp.eq.s32.totalorder %s74, 7
    %p375 = por %p373, %p374
    %p377 = scmp.ne.s32.totalorder %s360, %s376
    %p378 = scmp.eq.s32.totalorder %s74, 0
    %p379 = por %p377, %p378
    %s380 = ssub.s32 %s76, %s83
    %p381 = scmp.eq.s32.totalorder %s380, 0
    %s383 = sadd.s32 %s382, 1
    %s384 = scalar_select %p381, %s382, %s383
    %p387 = pneg %p381
    %p388 = scmp.eq.s32.totalorder %s68, 7
    %p389 = por %p387, %p388
    %p390 = scmp.ne.s32.totalorder %s382, %s385
    %p391 = scmp.eq.s32.totalorder %s68, 0
    %p392 = por %p390, %p391
    %p393 = scmp.ne.s32.totalorder %s382, %s385
    %p394 = scmp.eq.s32.totalorder %s73, 7
    %p395 = por %p393, %p394
    %p396 = scmp.ne.s32.totalorder %s385, %s386
    %p397 = scmp.eq.s32.totalorder %s73, 0
    %p398 = por %p396, %p397
    %p399 = scmp.ne.s32.totalorder %s385, %s386
    %p400 = scmp.eq.s32.totalorder %s74, 7
    %p401 = por %p399, %p400
    %p403 = scmp.ne.s32.totalorder %s386, %s402
    %p404 = scmp.eq.s32.totalorder %s74, 0
    %p405 = por %p403, %p404
    %s406 = ssub.s32 %s76, %s83
    %p407 = scmp.eq.s32.totalorder %s406, 0
    %s409 = sadd.s32 %s408, 1
    %s410 = scalar_select %p407, %s408, %s409
    %p413 = pneg %p407
    %p414 = scmp.eq.s32.totalorder %s68, 7
    %p415 = por %p413, %p414
    %p416 = scmp.ne.s32.totalorder %s408, %s411
    %p417 = scmp.eq.s32.totalorder %s68, 0
    %p418 = por %p416, %p417
    %p419 = scmp.ne.s32.totalorder %s408, %s411
    %p420 = scmp.eq.s32.totalorder %s73, 7
    %p421 = por %p419, %p420
    %p422 = scmp.ne.s32.totalorder %s411, %s412
    %p423 = scmp.eq.s32.totalorder %s73, 0
    %p424 = por %p422, %p423
    %p425 = scmp.ne.s32.totalorder %s411, %s412
    %p426 = scmp.eq.s32.totalorder %s74, 7
    %p427 = por %p425, %p426
    %p429 = scmp.ne.s32.totalorder %s412, %s428
    %p430 = scmp.eq.s32.totalorder %s74, 0
    %p431 = por %p429, %p430
    %s432 = ssub.s32 %s76, %s83
    %p433 = scmp.eq.s32.totalorder %s432, 0
    %s435 = sadd.s32 %s434, 1
    %s436 = scalar_select %p433, %s434, %s435
    %p439 = pneg %p433
    %p440 = scmp.eq.s32.totalorder %s68, 7
    %p441 = por %p439, %p440
    %p442 = scmp.ne.s32.totalorder %s434, %s437
    %p443 = scmp.eq.s32.totalorder %s68, 0
    %p444 = por %p442, %p443
    %p445 = scmp.ne.s32.totalorder %s434, %s437
    %p446 = scmp.eq.s32.totalorder %s73, 7
    %p447 = por %p445, %p446
    %p448 = scmp.ne.s32.totalorder %s437, %s438
    %p449 = scmp.eq.s32.totalorder %s73, 0
    %p450 = por %p448, %p449
    %p451 = scmp.ne.s32.totalorder %s437, %s438
    %p452 = scmp.eq.s32.totalorder %s74, 7
    %p453 = por %p451, %p452
    %p455 = scmp.ne.s32.totalorder %s438, %s454
    %p456 = scmp.eq.s32.totalorder %s74, 0
    %p457 = por %p455, %p456
    %s458 = ssub.s32 %s76, %s83
    %p459 = scmp.eq.s32.totalorder %s458, 0
    %s461 = sadd.s32 %s460, 1
    %s462 = scalar_select %p459, %s460, %s461
    %p465 = pneg %p459
    %p466 = scmp.eq.s32.totalorder %s68, 7
    %p467 = por %p465, %p466
    %p468 = scmp.ne.s32.totalorder %s460, %s463
    %p469 = scmp.eq.s32.totalorder %s68, 0
    %p470 = por %p468, %p469
    %p471 = scmp.ne.s32.totalorder %s460, %s463
    %p472 = scmp.eq.s32.totalorder %s73, 7
    %p473 = por %p471, %p472
    %p474 = scmp.ne.s32.totalorder %s463, %s464
    %p475 = scmp.eq.s32.totalorder %s73, 0
    %p476 = por %p474, %p475
    %p477 = scmp.ne.s32.totalorder %s463, %s464
    %p478 = scmp.eq.s32.totalorder %s74, 7
    %p479 = por %p477, %p478
    %p481 = scmp.ne.s32.totalorder %s464, %s480
    %p482 = scmp.eq.s32.totalorder %s74, 0
    %p483 = por %p481, %p482
    %s484 = ssub.s32 %s76, %s83
    %p485 = scmp.eq.s32.totalorder %s484, 0
    %s487 = sadd.s32 %s486, 1
    %s488 = scalar_select %p485, %s486, %s487
    %p491 = pneg %p485
    %p492 = scmp.eq.s32.totalorder %s68, 7
    %p493 = por %p491, %p492
    %p494 = scmp.ne.s32.totalorder %s486, %s489
    %p495 = scmp.eq.s32.totalorder %s68, 0
    %p496 = por %p494, %p495
    %p497 = scmp.ne.s32.totalorder %s486, %s489
    %p498 = scmp.eq.s32.totalorder %s73, 7
    %p499 = por %p497, %p498
    %p500 = scmp.ne.s32.totalorder %s489, %s490
    %p501 = scmp.eq.s32.totalorder %s73, 0
    %p502 = por %p500, %p501
    %p503 = scmp.ne.s32.totalorder %s489, %s490
    %p504 = scmp.eq.s32.totalorder %s74, 7
    %p505 = por %p503, %p504
    %p507 = scmp.ne.s32.totalorder %s490, %s506
    %p508 = scmp.eq.s32.totalorder %s74, 0
    %p509 = por %p507, %p508
    %s511 = sadd.s32 %s510, 1
    %p514 = scmp.eq.s32.totalorder %s68, 7
    %p515 = scmp.ne.s32.totalorder %s510, %s512
    %p516 = scmp.eq.s32.totalorder %s68, 0
    %p517 = por %p515, %p516
    %p518 = scmp.ne.s32.totalorder %s510, %s512
    %p519 = scmp.eq.s32.totalorder %s73, 7
    %p520 = por %p518, %p519
    %p521 = scmp.ne.s32.totalorder %s512, %s513
    %p522 = scmp.eq.s32.totalorder %s73, 0
    %p523 = por %p521, %p522
    %p524 = scmp.ne.s32.totalorder %s512, %s513
    %p525 = scmp.eq.s32.totalorder %s74, 7
    %p526 = por %p524, %p525
    %p528 = scmp.ne.s32.totalorder %s513, %s527
    %p529 = scmp.eq.s32.totalorder %s74, 0
    %p530 = por %p528, %p529
    %s532 = sadd.s32 %s531, 1
    %p535 = scmp.eq.s32.totalorder %s68, 7
    %p536 = scmp.ne.s32.totalorder %s531, %s533
    %p537 = scmp.eq.s32.totalorder %s68, 0
    %p538 = por %p536, %p537
    %p539 = scmp.ne.s32.totalorder %s531, %s533
    %p540 = scmp.eq.s32.totalorder %s73, 7
    %p541 = por %p539, %p540
    %p542 = scmp.ne.s32.totalorder %s533, %s534
    %p543 = scmp.eq.s32.totalorder %s73, 0
    %p544 = por %p542, %p543
    %p545 = scmp.ne.s32.totalorder %s533, %s534
    %p546 = scmp.eq.s32.totalorder %s74, 7
    %p547 = por %p545, %p546
    %p549 = scmp.ne.s32.totalorder %s534, %s548
    %p550 = scmp.eq.s32.totalorder %s74, 0
    %p551 = por %p549, %p550
    %s553 = sadd.s32 %s552, 1
    %p556 = scmp.eq.s32.totalorder %s68, 7
    %p557 = scmp.ne.s32.totalorder %s552, %s554
    %p558 = scmp.eq.s32.totalorder %s68, 0
    %p559 = por %p557, %p558
    %p560 = scmp.ne.s32.totalorder %s552, %s554
    %p561 = scmp.eq.s32.totalorder %s73, 7
    %p562 = por %p560, %p561
    %p563 = scmp.ne.s32.totalorder %s554, %s555
    %p564 = scmp.eq.s32.totalorder %s73, 0
    %p565 = por %p563, %p564
    %p566 = scmp.ne.s32.totalorder %s554, %s555
    %p567 = scmp.eq.s32.totalorder %s74, 7
    %p568 = por %p566, %p567
    %p570 = scmp.ne.s32.totalorder %s555, %s569
    %p571 = scmp.eq.s32.totalorder %s74, 0
    %p572 = por %p570, %p571
    %s574 = sadd.s32 %s573, 1
    %p577 = scmp.eq.s32.totalorder %s68, 7
    %p578 = scmp.ne.s32.totalorder %s573, %s575
    %p579 = scmp.eq.s32.totalorder %s68, 0
    %p580 = por %p578, %p579
    %p581 = scmp.ne.s32.totalorder %s573, %s575
    %p582 = scmp.eq.s32.totalorder %s73, 7
    %p583 = por %p581, %p582
    %p584 = scmp.ne.s32.totalorder %s575, %s576
    %p585 = scmp.eq.s32.totalorder %s73, 0
    %p586 = por %p584, %p585
    %p587 = scmp.ne.s32.totalorder %s575, %s576
    %p588 = scmp.eq.s32.totalorder %s74, 7
    %p589 = por %p587, %p588
    %p591 = scmp.ne.s32.totalorder %s576, %s590
    %p592 = scmp.eq.s32.totalorder %s74, 0
    %p593 = por %p591, %p592
    %s595 = sadd.s32 %s594, 1
    %p598 = scmp.eq.s32.totalorder %s68, 7
    %p599 = scmp.ne.s32.totalorder %s594, %s596
    %p600 = scmp.eq.s32.totalorder %s68, 0
    %p601 = por %p599, %p600
    %p602 = scmp.ne.s32.totalorder %s594, %s596
    %p603 = scmp.eq.s32.totalorder %s73, 7
    %p604 = por %p602, %p603
    %p605 = scmp.ne.s32.totalorder %s596, %s597
    %p606 = scmp.eq.s32.totalorder %s73, 0
    %p607 = por %p605, %p606
    %p608 = scmp.ne.s32.totalorder %s596, %s597
    %p609 = scmp.eq.s32.totalorder %s74, 7
    %p610 = por %p608, %p609
    %p612 = scmp.ne.s32.totalorder %s597, %s611
    %p613 = scmp.eq.s32.totalorder %s74, 0
    %p614 = por %p612, %p613
    %s616 = sadd.s32 %s615, 1
    %p619 = scmp.eq.s32.totalorder %s68, 7
    %p620 = scmp.ne.s32.totalorder %s615, %s617
    %p621 = scmp.eq.s32.totalorder %s68, 0
    %p622 = por %p620, %p621
    %p623 = scmp.ne.s32.totalorder %s615, %s617
    %p624 = scmp.eq.s32.totalorder %s73, 7
    %p625 = por %p623, %p624
    %p626 = scmp.ne.s32.totalorder %s617, %s618
    %p627 = scmp.eq.s32.totalorder %s73, 0
    %p628 = por %p626, %p627
    %p629 = scmp.ne.s32.totalorder %s617, %s618
    %p630 = scmp.eq.s32.totalorder %s74, 7
    %p631 = por %p629, %p630
    %p633 = scmp.ne.s32.totalorder %s618, %s632
    %p634 = scmp.eq.s32.totalorder %s74, 0
    %p635 = por %p633, %p634
    %s637 = sadd.s32 %s636, 1
    %p640 = scmp.eq.s32.totalorder %s68, 7
    %p641 = scmp.ne.s32.totalorder %s636, %s638
    %p642 = scmp.eq.s32.totalorder %s68, 0
    %p643 = por %p641, %p642
    %p644 = scmp.ne.s32.totalorder %s636, %s638
    %p645 = scmp.eq.s32.totalorder %s73, 7
    %p646 = por %p644, %p645
    %p647 = scmp.ne.s32.totalorder %s638, %s639
    %p648 = scmp.eq.s32.totalorder %s73, 0
    %p649 = por %p647, %p648
    %p650 = scmp.ne.s32.totalorder %s638, %s639
    %p651 = scmp.eq.s32.totalorder %s74, 7
    %p652 = por %p650, %p651
    %p654 = scmp.ne.s32.totalorder %s639, %s653
    %p655 = scmp.eq.s32.totalorder %s74, 0
    %p656 = por %p654, %p655
    %s658 = sadd.s32 %s657, 1
    %p661 = scmp.eq.s32.totalorder %s68, 7
    %p662 = scmp.ne.s32.totalorder %s657, %s659
    %p663 = scmp.eq.s32.totalorder %s68, 0
    %p664 = por %p662, %p663
    %p665 = scmp.ne.s32.totalorder %s657, %s659
    %p666 = scmp.eq.s32.totalorder %s73, 7
    %p667 = por %p665, %p666
    %p668 = scmp.ne.s32.totalorder %s659, %s660
    %p669 = scmp.eq.s32.totalorder %s73, 0
    %p670 = por %p668, %p669
    %p671 = scmp.ne.s32.totalorder %s659, %s660
    %p672 = scmp.eq.s32.totalorder %s74, 7
    %p673 = por %p671, %p672
    %p675 = scmp.ne.s32.totalorder %s660, %s674
    %p676 = scmp.eq.s32.totalorder %s74, 0
    %p677 = por %p675, %p676
    %s679 = sadd.s32 %s678, 1
    %p682 = scmp.eq.s32.totalorder %s68, 7
    %p683 = scmp.ne.s32.totalorder %s678, %s680
    %p684 = scmp.eq.s32.totalorder %s68, 0
    %p685 = por %p683, %p684
    %p686 = scmp.ne.s32.totalorder %s678, %s680
    %p687 = scmp.eq.s32.totalorder %s73, 7
    %p688 = por %p686, %p687
    %p689 = scmp.ne.s32.totalorder %s680, %s681
    %p690 = scmp.eq.s32.totalorder %s73, 0
    %p691 = por %p689, %p690
    %p692 = scmp.ne.s32.totalorder %s680, %s681
    %p693 = scmp.eq.s32.totalorder %s74, 7
    %p694 = por %p692, %p693
    %p696 = scmp.ne.s32.totalorder %s681, %s695
    %p697 = scmp.eq.s32.totalorder %s74, 0
    %p698 = por %p696, %p697
    %s700 = sadd.s32 %s699, 1
    %p703 = scmp.eq.s32.totalorder %s68, 7
    %p704 = scmp.ne.s32.totalorder %s699, %s701
    %p705 = scmp.eq.s32.totalorder %s68, 0
    %p706 = por %p704, %p705
    %p707 = scmp.ne.s32.totalorder %s699, %s701
    %p708 = scmp.eq.s32.totalorder %s73, 7
    %p709 = por %p707, %p708
    %p710 = scmp.ne.s32.totalorder %s701, %s702
    %p711 = scmp.eq.s32.totalorder %s73, 0
    %p712 = por %p710, %p711
    %p713 = scmp.ne.s32.totalorder %s701, %s702
    %p714 = scmp.eq.s32.totalorder %s74, 7
    %p715 = por %p713, %p714
    %p717 = scmp.ne.s32.totalorder %s702, %s716
    %p718 = scmp.eq.s32.totalorder %s74, 0
    %p719 = por %p717, %p718
    %s721 = sadd.s32 %s720, 1
    %p724 = scmp.eq.s32.totalorder %s68, 7
    %p725 = scmp.ne.s32.totalorder %s720, %s722
    %p726 = scmp.eq.s32.totalorder %s68, 0
    %p727 = por %p725, %p726
    %p728 = scmp.ne.s32.totalorder %s720, %s722
    %p729 = scmp.eq.s32.totalorder %s73, 7
    %p730 = por %p728, %p729
    %p731 = scmp.ne.s32.totalorder %s722, %s723
    %p732 = scmp.eq.s32.totalorder %s73, 0
    %p733 = por %p731, %p732
    %p734 = scmp.ne.s32.totalorder %s722, %s723
    %p735 = scmp.eq.s32.totalorder %s74, 7
    %p736 = por %p734, %p735
    %p738 = scmp.ne.s32.totalorder %s723, %s737
    %p739 = scmp.eq.s32.totalorder %s74, 0
    %p740 = por %p738, %p739
    %s742 = sadd.s32 %s741, 1
    %p745 = scmp.eq.s32.totalorder %s68, 7
    %p746 = scmp.ne.s32.totalorder %s741, %s743
    %p747 = scmp.eq.s32.totalorder %s68, 0
    %p748 = por %p746, %p747
    %p749 = scmp.ne.s32.totalorder %s741, %s743
    %p750 = scmp.eq.s32.totalorder %s73, 7
    %p751 = por %p749, %p750
    %p752 = scmp.ne.s32.totalorder %s743, %s744
    %p753 = scmp.eq.s32.totalorder %s73, 0
    %p754 = por %p752, %p753
    %p755 = scmp.ne.s32.totalorder %s743, %s744
    %p756 = scmp.eq.s32.totalorder %s74, 7
    %p757 = por %p755, %p756
    %p759 = scmp.ne.s32.totalorder %s744, %s758
    %p760 = scmp.eq.s32.totalorder %s74, 0
    %p761 = por %p759, %p760
    %s762 = ssub.s32 %s75, %s87
    %p763 = scmp.eq.s32.totalorder %s762, 0
    %s765 = sadd.s32 %s764, 1
    %s766 = scalar_select %p763, %s764, %s765
    %p769 = pneg %p763
    %p770 = scmp.eq.s32.totalorder %s68, 7
    %p771 = por %p769, %p770
    %p772 = scmp.ne.s32.totalorder %s764, %s767
    %p773 = scmp.eq.s32.totalorder %s68, 0
    %p774 = por %p772, %p773
    %p775 = scmp.ne.s32.totalorder %s764, %s767
    %p776 = scmp.eq.s32.totalorder %s73, 7
    %p777 = por %p775, %p776
    %p778 = scmp.ne.s32.totalorder %s767, %s768
    %p779 = scmp.eq.s32.totalorder %s73, 0
    %p780 = por %p778, %p779
    %p781 = scmp.ne.s32.totalorder %s767, %s768
    %p782 = scmp.eq.s32.totalorder %s74, 7
    %p783 = por %p781, %p782
    %p785 = scmp.ne.s32.totalorder %s768, %s784
    %p786 = scmp.eq.s32.totalorder %s74, 0
    %p787 = por %p785, %p786
    %s788 = ssub.s32 %s75, %s87
    %p789 = scmp.eq.s32.totalorder %s788, 0
    %s791 = sadd.s32 %s790, 1
    %s792 = scalar_select %p789, %s790, %s791
    %p795 = pneg %p789
    %p796 = scmp.eq.s32.totalorder %s68, 7
    %p797 = por %p795, %p796
    %p798 = scmp.ne.s32.totalorder %s790, %s793
    %p799 = scmp.eq.s32.totalorder %s68, 0
    %p800 = por %p798, %p799
    %p801 = scmp.ne.s32.totalorder %s790, %s793
    %p802 = scmp.eq.s32.totalorder %s73, 7
    %p803 = por %p801, %p802
    %p804 = scmp.ne.s32.totalorder %s793, %s794
    %p805 = scmp.eq.s32.totalorder %s73, 0
    %p806 = por %p804, %p805
    %p807 = scmp.ne.s32.totalorder %s793, %s794
    %p808 = scmp.eq.s32.totalorder %s74, 7
    %p809 = por %p807, %p808
    %p811 = scmp.ne.s32.totalorder %s794, %s810
    %p812 = scmp.eq.s32.totalorder %s74, 0
    %p813 = por %p811, %p812
    %p814 = scmp.le.s32.totalorder 1, %s68
    %p815 = scmp.lt.s32.totalorder %s68, 9
    %p816 = pnand %p814, %p815
    %p817 = pneg %p816
    // Predicated region
    $region9: #{fsra_forward.1} parent=5 // pred_check
      _
    $region10: #{fsra_forward.1} parent=5 // pred_check_branch
      %819 = sbr.rel (%p816) target = $region12
    $region11: #{fsra_forward.1} parent=5 // pred_region
      %s820 = ssub.s32 %s68, 1
      // Predicated region
      $region13: #{fsra_forward.1} parent=11 // pred_check
        %p821 = pneg %p127
      $region14: #{fsra_forward.1} parent=11 // pred_check_branch
        %823 = sbr.rel (%p821) target = $region16
      $region15: #{fsra_forward.1} parent=11 // pred_region
        _
      $region16: #{fsra_forward.1} parent=11 // pred_fallthru
        _
      // Predicated region
      $region17: #{fsra_forward.1} parent=11 // pred_check
        %p824 = pneg %p148
      $region18: #{fsra_forward.1} parent=11 // pred_check_branch
        %826 = sbr.rel (%p824) target = $region20
      $region19: #{fsra_forward.1} parent=11 // pred_region
        _
      $region20: #{fsra_forward.1} parent=11 // pred_fallthru
        _
      // Predicated region
      $region21: #{fsra_forward.1} parent=11 // pred_check
        %p827 = pneg %p169
      $region22: #{fsra_forward.1} parent=11 // pred_check_branch
        %829 = sbr.rel (%p827) target = $region24
      $region23: #{fsra_forward.1} parent=11 // pred_region
        _
      $region24: #{fsra_forward.1} parent=11 // pred_fallthru
        _
      // Predicated region
      $region25: #{fsra_forward.1} parent=11 // pred_check
        %p830 = pneg %p190
      $region26: #{fsra_forward.1} parent=11 // pred_check_branch
        %832 = sbr.rel (%p830) target = $region28
      $region27: #{fsra_forward.1} parent=11 // pred_region
        _
      $region28: #{fsra_forward.1} parent=11 // pred_fallthru
        _
      // Predicated region
      $region29: #{fsra_forward.1} parent=11 // pred_check
        %p833 = pneg %p523
      $region30: #{fsra_forward.1} parent=11 // pred_check_branch
        %835 = sbr.rel (%p833) target = $region32
      $region31: #{fsra_forward.1} parent=11 // pred_region
        _
      $region32: #{fsra_forward.1} parent=11 // pred_fallthru
        _
      // Predicated region
      $region33: #{fsra_forward.1} parent=11 // pred_check
        %p836 = pneg %p544
      $region34: #{fsra_forward.1} parent=11 // pred_check_branch
        %838 = sbr.rel (%p836) target = $region36
      $region35: #{fsra_forward.1} parent=11 // pred_region
        _
      $region36: #{fsra_forward.1} parent=11 // pred_fallthru
        _
      // Predicated region
      $region37: #{fsra_forward.1} parent=11 // pred_check
        %p839 = pneg %p565
      $region38: #{fsra_forward.1} parent=11 // pred_check_branch
        %841 = sbr.rel (%p839) target = $region40
      $region39: #{fsra_forward.1} parent=11 // pred_region
        _
      $region40: #{fsra_forward.1} parent=11 // pred_fallthru
        _
      // Predicated region
      $region41: #{fsra_forward.1} parent=11 // pred_check
        %p842 = pneg %p586
      $region42: #{fsra_forward.1} parent=11 // pred_check_branch
        %844 = sbr.rel (%p842) target = $region44
      $region43: #{fsra_forward.1} parent=11 // pred_region
        _
      $region44: #{fsra_forward.1} parent=11 // pred_fallthru
        _
      // Predicated region
      $region45: #{fsra_forward.1} parent=11 // pred_check
        %p845 = pneg %p607
      $region46: #{fsra_forward.1} parent=11 // pred_check_branch
        %847 = sbr.rel (%p845) target = $region48
      $region47: #{fsra_forward.1} parent=11 // pred_region
        _
      $region48: #{fsra_forward.1} parent=11 // pred_fallthru
        _
      // Predicated region
      $region49: #{fsra_forward.1} parent=11 // pred_check
        %p848 = pneg %p628
      $region50: #{fsra_forward.1} parent=11 // pred_check_branch
        %850 = sbr.rel (%p848) target = $region52
      $region51: #{fsra_forward.1} parent=11 // pred_region
        _
      $region52: #{fsra_forward.1} parent=11 // pred_fallthru
        _
      // Predicated region
      $region53: #{fsra_forward.1} parent=11 // pred_check
        %p851 = pneg %p649
      $region54: #{fsra_forward.1} parent=11 // pred_check_branch
        %853 = sbr.rel (%p851) target = $region56
      $region55: #{fsra_forward.1} parent=11 // pred_region
        _
      $region56: #{fsra_forward.1} parent=11 // pred_fallthru
        _
      // Predicated region
      $region57: #{fsra_forward.1} parent=11 // pred_check
        %p854 = pneg %p670
      $region58: #{fsra_forward.1} parent=11 // pred_check_branch
        %856 = sbr.rel (%p854) target = $region60
      $region59: #{fsra_forward.1} parent=11 // pred_region
        _
      $region60: #{fsra_forward.1} parent=11 // pred_fallthru
        _
      // Predicated region
      $region61: #{fsra_forward.1} parent=11 // pred_check
        %p857 = pneg %p691
      $region62: #{fsra_forward.1} parent=11 // pred_check_branch
        %859 = sbr.rel (%p857) target = $region64
      $region63: #{fsra_forward.1} parent=11 // pred_region
        _
      $region64: #{fsra_forward.1} parent=11 // pred_fallthru
        _
      // Predicated region
      $region65: #{fsra_forward.1} parent=11 // pred_check
        %p860 = pneg %p712
      $region66: #{fsra_forward.1} parent=11 // pred_check_branch
        %862 = sbr.rel (%p860) target = $region68
      $region67: #{fsra_forward.1} parent=11 // pred_region
        _
      $region68: #{fsra_forward.1} parent=11 // pred_fallthru
        _
      // Predicated region
      $region69: #{fsra_forward.1} parent=11 // pred_check
        %p863 = pneg %p733
      $region70: #{fsra_forward.1} parent=11 // pred_check_branch
        %865 = sbr.rel (%p863) target = $region72
      $region71: #{fsra_forward.1} parent=11 // pred_region
        _
      $region72: #{fsra_forward.1} parent=11 // pred_fallthru
        _
      // Predicated region
      $region73: #{fsra_forward.1} parent=11 // pred_check
        %p866 = pneg %p754
      $region74: #{fsra_forward.1} parent=11 // pred_check_branch
        %868 = sbr.rel (%p866) target = $region76
      $region75: #{fsra_forward.1} parent=11 // pred_region
        _
      $region76: #{fsra_forward.1} parent=11 // pred_fallthru
        _
    $region12: #{fsra_forward.1} parent=5 // pred_fallthru
      _
    %p869 = scmp.lt.s32.totalorder %s68, 8
    // Predicated region
    $region77: #{fsra_forward.1} parent=5 // pred_check
      %p870 = pneg %p869
    $region78: #{fsra_forward.1} parent=5 // pred_check_branch
      %872 = sbr.rel (%p870) target = $region80
    $region79: #{fsra_forward.1} parent=5 // pred_region
      // Predicated region
      $region81: #{fsra_forward.1} parent=79 // pred_check
        %p873 = pneg %p100
      $region82: #{fsra_forward.1} parent=79 // pred_check_branch
        %875 = sbr.rel (%p873) target = $region84
      $region83: #{fsra_forward.1} parent=79 // pred_region
        %p876 = scmp.lt.s32.totalorder %s75, 3
        %s877 = scalar_select %p876, %s75, 3
        %s878 = smul.addr %s877, 6
        %s879 = smul.addr %s878, 4
        %s880 = scalar_lea.vmem %s1, %s879
      $region84: #{fsra_forward.1} parent=79 // pred_fallthru
        _
      // Predicated region
      $region85: #{fsra_forward.1} parent=79 // pred_check
        %p881 = pneg %p210
      $region86: #{fsra_forward.1} parent=79 // pred_check_branch
        %883 = sbr.rel (%p881) target = $region88
      $region87: #{fsra_forward.1} parent=79 // pred_region
        %p884 = scmp.lt.s32.totalorder %s76, 1
        %s885 = scalar_select %p884, %s76, 1
        %s886 = scalar_lea.vmem %s11, %s885
      $region88: #{fsra_forward.1} parent=79 // pred_fallthru
        _
      // Predicated region
      $region89: #{fsra_forward.1} parent=79 // pred_check
        %p887 = pneg %p236
      $region90: #{fsra_forward.1} parent=79 // pred_check_branch
        %889 = sbr.rel (%p887) target = $region92
      $region91: #{fsra_forward.1} parent=79 // pred_region
        %p890 = scmp.lt.s32.totalorder %s76, 1
        %s891 = scalar_select %p890, %s76, 1
        %s892 = scalar_lea.vmem %s13, %s891
      $region92: #{fsra_forward.1} parent=79 // pred_fallthru
        _
      // Predicated region
      $region93: #{fsra_forward.1} parent=79 // pred_check
        %p893 = pneg %p262
      $region94: #{fsra_forward.1} parent=79 // pred_check_branch
        %895 = sbr.rel (%p893) target = $region96
      $region95: #{fsra_forward.1} parent=79 // pred_region
        %p896 = scmp.lt.s32.totalorder %s76, 1
        %s897 = scalar_select %p896, %s76, 1
        %s898 = smul.addr %s897, 16
        %s899 = smul.addr %s898, 4
        %s900 = scalar_lea.vmem %s15, %s899
      $region96: #{fsra_forward.1} parent=79 // pred_fallthru
        _
      // Predicated region
      $region97: #{fsra_forward.1} parent=79 // pred_check
        %p901 = pneg %p288
      $region98: #{fsra_forward.1} parent=79 // pred_check_branch
        %903 = sbr.rel (%p901) target = $region100
      $region99: #{fsra_forward.1} parent=79 // pred_region
        %p904 = scmp.lt.s32.totalorder %s76, 1
        %s905 = scalar_select %p904, %s76, 1
        %s906 = smul.addr %s905, 2
        %s907 = scalar_lea.vmem %s17, %s906
      $region100: #{fsra_forward.1} parent=79 // pred_fallthru
        _
      // Predicated region
      $region101: #{fsra_forward.1} parent=79 // pred_check
        %p908 = pneg %p314
      $region102: #{fsra_forward.1} parent=79 // pred_check_branch
        %910 = sbr.rel (%p908) target = $region104
      $region103: #{fsra_forward.1} parent=79 // pred_region
        %p911 = scmp.lt.s32.totalorder %s76, 1
        %s912 = scalar_select %p911, %s76, 1
        %s913 = smul.addr %s912, 8
        %s914 = smul.addr %s913, 4
        %s915 = scalar_lea.vmem %s19, %s914
      $region104: #{fsra_forward.1} parent=79 // pred_fallthru
        _
      // Predicated region
      $region105: #{fsra_forward.1} parent=79 // pred_check
        %p916 = pneg %p340
      $region106: #{fsra_forward.1} parent=79 // pred_check_branch
        %918 = sbr.rel (%p916) target = $region108
      $region107: #{fsra_forward.1} parent=79 // pred_region
        %p919 = scmp.lt.s32.totalorder %s76, 1
        %s920 = scalar_select %p919, %s76, 1
        %s921 = scalar_lea.vmem %s21, %s920
      $region108: #{fsra_forward.1} parent=79 // pred_fallthru
        _
      // Predicated region
      $region109: #{fsra_forward.1} parent=79 // pred_check
        %p922 = pneg %p366
      $region110: #{fsra_forward.1} parent=79 // pred_check_branch
        %924 = sbr.rel (%p922) target = $region112
      $region111: #{fsra_forward.1} parent=79 // pred_region
        %p925 = scmp.lt.s32.totalorder %s76, 1
        %s926 = scalar_select %p925, %s76, 1
        %s927 = scalar_lea.vmem %s23, %s926
      $region112: #{fsra_forward.1} parent=79 // pred_fallthru
        _
      // Predicated region
      $region113: #{fsra_forward.1} parent=79 // pred_check
        %p928 = pneg %p392
      $region114: #{fsra_forward.1} parent=79 // pred_check_branch
        %930 = sbr.rel (%p928) target = $region116
      $region115: #{fsra_forward.1} parent=79 // pred_region
        %p931 = scmp.lt.s32.totalorder %s76, 1
        %s932 = scalar_select %p931, %s76, 1
        %s933 = scalar_lea.vmem %s25, %s932
      $region116: #{fsra_forward.1} parent=79 // pred_fallthru
        _
      // Predicated region
      $region117: #{fsra_forward.1} parent=79 // pred_check
        %p934 = pneg %p418
      $region118: #{fsra_forward.1} parent=79 // pred_check_branch
        %936 = sbr.rel (%p934) target = $region120
      $region119: #{fsra_forward.1} parent=79 // pred_region
        %p937 = scmp.lt.s32.totalorder %s76, 1
        %s938 = scalar_select %p937, %s76, 1
        %s939 = smul.addr %s938, 8
        %s940 = smul.addr %s939, 4
        %s941 = scalar_lea.vmem %s27, %s940
      $region120: #{fsra_forward.1} parent=79 // pred_fallthru
        _
      // Predicated region
      $region121: #{fsra_forward.1} parent=79 // pred_check
        %p942 = pneg %p444
      $region122: #{fsra_forward.1} parent=79 // pred_check_branch
        %944 = sbr.rel (%p942) target = $region124
      $region123: #{fsra_forward.1} parent=79 // pred_region
        %p945 = scmp.lt.s32.totalorder %s76, 1
        %s946 = scalar_select %p945, %s76, 1
        %s947 = scalar_lea.vmem %s29, %s946
      $region124: #{fsra_forward.1} parent=79 // pred_fallthru
        _
      // Predicated region
      $region125: #{fsra_forward.1} parent=79 // pred_check
        %p948 = pneg %p470
      $region126: #{fsra_forward.1} parent=79 // pred_check_branch
        %950 = sbr.rel (%p948) target = $region128
      $region127: #{fsra_forward.1} parent=79 // pred_region
        %p951 = scmp.lt.s32.totalorder %s76, 1
        %s952 = scalar_select %p951, %s76, 1
        %s953 = smul.addr %s952, 16
        %s954 = smul.addr %s953, 4
        %s955 = scalar_lea.vmem %s31, %s954
      $region128: #{fsra_forward.1} parent=79 // pred_fallthru
        _
      // Predicated region
      $region129: #{fsra_forward.1} parent=79 // pred_check
        %p956 = pneg %p496
      $region130: #{fsra_forward.1} parent=79 // pred_check_branch
        %958 = sbr.rel (%p956) target = $region132
      $region131: #{fsra_forward.1} parent=79 // pred_region
        %p959 = scmp.lt.s32.totalorder %s76, 1
        %s960 = scalar_select %p959, %s76, 1
        %s961 = scalar_lea.vmem %s33, %s960
      $region132: #{fsra_forward.1} parent=79 // pred_fallthru
        _
    $region80: #{fsra_forward.1} parent=5 // pred_fallthru
      _
    %p962 = scmp.le.s32.totalorder 1, %s68
    %p963 = scmp.lt.s32.totalorder %s68, 9
    %p964 = pnand %p962, %p963
    %p965 = pneg %p964
    // Predicated region
    $region133: #{fsra_forward.1} parent=5 // pred_check
      _
    $region134: #{fsra_forward.1} parent=5 // pred_check_branch
      %967 = sbr.rel (%p964) target = $region136
    $region135: #{fsra_forward.1} parent=5 // pred_region
      %s968 = ssub.s32 %s68, 1
      %p969 = scmp.lt.s32.totalorder %s77, 3
      %s970 = scalar_select %p969, %s77, 3
      %s971 = smul.addr %s970, 6
      %s972 = smul.addr %s971, 4
      %s973 = scalar_lea.vmem %s1, %s972
      %p974 = pneg %p106
      %p975 = pneg %p103
      %p976 = pneg %p127
      %p977 = pneg %p124
      %p978 = pneg %p148
      %p979 = pneg %p145
      %p980 = pneg %p169
      %p981 = pneg %p166
      %p982 = pneg %p190
      %p983 = pneg %p187
      %p984 = scmp.lt.s32.totalorder %s78, 1
      %s985 = scalar_select %p984, %s78, 1
      %s986 = scalar_lea.vmem %s11, %s985
      %p987 = pneg %p216
      %p988 = pneg %p213
      %p989 = scmp.lt.s32.totalorder %s78, 1
      %s990 = scalar_select %p989, %s78, 1
      %s991 = scalar_lea.vmem %s13, %s990
      %p992 = pneg %p242
      %p993 = pneg %p239
      %p994 = scmp.lt.s32.totalorder %s78, 1
      %s995 = scalar_select %p994, %s78, 1
      %s996 = smul.addr %s995, 16
      %s997 = smul.addr %s996, 4
      %s998 = scalar_lea.vmem %s15, %s997
      %p999 = pneg %p268
      %p1000 = pneg %p265
      %p1001 = scmp.lt.s32.totalorder %s78, 1
      %s1002 = scalar_select %p1001, %s78, 1
      %s1003 = smul.addr %s1002, 2
      %s1004 = scalar_lea.vmem %s17, %s1003
      %p1005 = pneg %p294
      %p1006 = pneg %p291
      %p1007 = scmp.lt.s32.totalorder %s78, 1
      %s1008 = scalar_select %p1007, %s78, 1
      %s1009 = smul.addr %s1008, 8
      %s1010 = smul.addr %s1009, 4
      %s1011 = scalar_lea.vmem %s19, %s1010
      %p1012 = pneg %p320
      %p1013 = pneg %p317
      %p1014 = scmp.lt.s32.totalorder %s78, 1
      %s1015 = scalar_select %p1014, %s78, 1
      %s1016 = scalar_lea.vmem %s21, %s1015
      %p1017 = pneg %p346
      %p1018 = pneg %p343
      %p1019 = scmp.lt.s32.totalorder %s78, 1
      %s1020 = scalar_select %p1019, %s78, 1
      %s1021 = scalar_lea.vmem %s23, %s1020
      %p1022 = pneg %p372
      %p1023 = pneg %p369
      %p1024 = scmp.lt.s32.totalorder %s78, 1
      %s1025 = scalar_select %p1024, %s78, 1
      %s1026 = scalar_lea.vmem %s25, %s1025
      %p1027 = pneg %p398
      %p1028 = pneg %p395
      %p1029 = scmp.lt.s32.totalorder %s78, 1
      %s1030 = scalar_select %p1029, %s78, 1
      %s1031 = smul.addr %s1030, 8
      %s1032 = smul.addr %s1031, 4
      %s1033 = scalar_lea.vmem %s27, %s1032
      %p1034 = pneg %p424
      %p1035 = pneg %p421
      %p1036 = scmp.lt.s32.totalorder %s78, 1
      %s1037 = scalar_select %p1036, %s78, 1
      %s1038 = scalar_lea.vmem %s29, %s1037
      %p1039 = pneg %p450
      %p1040 = pneg %p447
      %p1041 = scmp.lt.s32.totalorder %s78, 1
      %s1042 = scalar_select %p1041, %s78, 1
      %s1043 = smul.addr %s1042, 16
      %s1044 = smul.addr %s1043, 4
      %s1045 = scalar_lea.vmem %s31, %s1044
      %p1046 = pneg %p476
      %p1047 = pneg %p473
      %p1048 = scmp.lt.s32.totalorder %s78, 1
      %s1049 = scalar_select %p1048, %s78, 1
      %s1050 = scalar_lea.vmem %s33, %s1049
      %p1051 = pneg %p502
      %p1052 = pneg %p499
      %p1053 = pneg %p523
      %p1054 = pneg %p520
      %p1055 = pneg %p544
      %p1056 = pneg %p541
      %p1057 = pneg %p565
      %p1058 = pneg %p562
      %p1059 = pneg %p586
      %p1060 = pneg %p583
      %p1061 = pneg %p607
      %p1062 = pneg %p604
      %p1063 = pneg %p628
      %p1064 = pneg %p625
      %p1065 = pneg %p649
      %p1066 = pneg %p646
      %p1067 = pneg %p670
      %p1068 = pneg %p667
      %p1069 = pneg %p691
      %p1070 = pneg %p688
      %p1071 = pneg %p712
      %p1072 = pneg %p709
      %p1073 = pneg %p733
      %p1074 = pneg %p730
      %p1075 = pneg %p754
      %p1076 = pneg %p751
      %p1077 = pneg %p780
      %p1078 = pneg %p777
      %p1079 = scmp.lt.s32.totalorder %s77, 3
      %s1080 = scalar_select %p1079, %s77, 3
      %s1081 = smul.addr %s1080, 8
      %s1082 = scalar_lea.vmem %s59, %s1081
      %p1083 = pneg %p806
      %p1084 = pneg %p803
      %p1085 = scmp.lt.s32.totalorder %s77, 3
      %s1086 = scalar_select %p1085, %s77, 3
      %s1087 = smul.addr %s1086, 8
      %s1088 = scalar_lea.vmem %s61, %s1087
      %p1089 = scmp.lt.s32.totalorder %s77, 3
      %s1090 = scalar_select %p1089, %s77, 3
      %s1091 = smul.addr %s1090, 6
      %s1092 = smul.addr %s1091, 4
      %s1093 = scalar_lea.vmem %s1, %s1092
      %p1094 = scmp.lt.s32.totalorder %s78, 1
      %s1095 = scalar_select %p1094, %s78, 1
      %s1096 = scalar_lea.vmem %s11, %s1095
      %p1097 = scmp.lt.s32.totalorder %s78, 1
      %s1098 = scalar_select %p1097, %s78, 1
      %s1099 = scalar_lea.vmem %s13, %s1098
      %p1100 = scmp.lt.s32.totalorder %s78, 1
      %s1101 = scalar_select %p1100, %s78, 1
      %s1102 = smul.addr %s1101, 16
      %s1103 = smul.addr %s1102, 4
      %s1104 = scalar_lea.vmem %s15, %s1103
      %p1105 = scmp.lt.s32.totalorder %s78, 1
      %s1106 = scalar_select %p1105, %s78, 1
      %s1107 = smul.addr %s1106, 2
      %s1108 = scalar_lea.vmem %s17, %s1107
      %p1109 = scmp.lt.s32.totalorder %s78, 1
      %s1110 = scalar_select %p1109, %s78, 1
      %s1111 = smul.addr %s1110, 8
      %s1112 = smul.addr %s1111, 4
      %s1113 = scalar_lea.vmem %s19, %s1112
      %p1114 = scmp.lt.s32.totalorder %s78, 1
      %s1115 = scalar_select %p1114, %s78, 1
      %s1116 = scalar_lea.vmem %s21, %s1115
      %p1117 = scmp.lt.s32.totalorder %s78, 1
      %s1118 = scalar_select %p1117, %s78, 1
      %s1119 = scalar_lea.vmem %s23, %s1118
      %p1120 = scmp.lt.s32.totalorder %s78, 1
      %s1121 = scalar_select %p1120, %s78, 1
      %s1122 = scalar_lea.vmem %s25, %s1121
      %p1123 = scmp.lt.s32.totalorder %s78, 1
      %s1124 = scalar_select %p1123, %s78, 1
      %s1125 = smul.addr %s1124, 8
      %s1126 = smul.addr %s1125, 4
      %s1127 = scalar_lea.vmem %s27, %s1126
      %p1128 = scmp.lt.s32.totalorder %s78, 1
      %s1129 = scalar_select %p1128, %s78, 1
      %s1130 = scalar_lea.vmem %s29, %s1129
      %p1131 = scmp.lt.s32.totalorder %s78, 1
      %s1132 = scalar_select %p1131, %s78, 1
      %s1133 = smul.addr %s1132, 16
      %s1134 = smul.addr %s1133, 4
      %s1135 = scalar_lea.vmem %s31, %s1134
      %p1136 = scmp.lt.s32.totalorder %s78, 1
      %s1137 = scalar_select %p1136, %s78, 1
      %s1138 = scalar_lea.vmem %s33, %s1137
      %p1139 = scmp.lt.s32.totalorder %s77, 3
      %s1140 = scalar_select %p1139, %s77, 3
      %s1141 = smul.addr %s1140, 8
      %s1142 = scalar_lea.vmem %s59, %s1141
      %p1143 = scmp.lt.s32.totalorder %s77, 3
      %s1144 = scalar_select %p1143, %s77, 3
      %s1145 = smul.addr %s1144, 8
      %s1146 = scalar_lea.vmem %s61, %s1145
      %p1148 = scmp.eq.s32.totalorder %s78, 0
      // Predicated region
      $region137: #{fsra_forward.1} parent=135 // pred_check
        %p1149 = pneg %p1148
      $region138: #{fsra_forward.1} parent=135 // pred_check_branch
        %1151 = sbr.rel (%p1149) target = $region140
      $region139: #{fsra_forward.1} parent=135 // pred_region
        %v1152 = vld [vmem:[%s1093] sm:$0xff]
        %v1153 = vld [vmem:[%s1093 + $0x8] sm:$0xff]
        %v1154 = vld [vmem:[%s1093 + $0x10] sm:$0xff]
        %v1155 = vld [vmem:[%s3] sm:$0xf]
        %v1156 = vld [vmem:[%s3 + $0x4] sm:$0xf]
        %v1157 = vld [vmem:[%s3 + $0x8] sm:$0xf]
        %v1158 = vld [vmem:[%s3 + $0xc] sm:$0xf]
        %v1159 = vld [vmem:[%s3 + $0x10] sm:$0xf]
        %v1160 = vld [vmem:[%s3 + $0x14] sm:$0xf]
        %v1161 = vld [vmem:[%s3 + $0x18] sm:$0xf]
        %v1162 = vld [vmem:[%s3 + $0x1c] sm:$0xf]
        %v1163 = vld [vmem:[%s3 + $0x20] sm:$0xf]
        %v1164 = vld [vmem:[%s3 + $0x24] sm:$0xf]
        %v1165 = vld [vmem:[%s3 + $0x28] sm:$0xf]
        %v1166 = vld [vmem:[%s3 + $0x2c] sm:$0xf]
        %v1167 = vld [vmem:[%s3 + $0x30] sm:$0xf]
        %v1168 = vld [vmem:[%s3 + $0x34] sm:$0xf]
        %v1169 = vld [vmem:[%s3 + $0x38] sm:$0xf]
        %v1170 = vld [vmem:[%s3 + $0x3c] sm:$0xf]
        %v1171 = vld [vmem:[%s3 + $0x40] sm:$0xf]
        %v1172 = vld [vmem:[%s3 + $0x44] sm:$0xf]
        %v1173 = vld [vmem:[%s3 + $0x48] sm:$0xf]
        %v1174 = vld [vmem:[%s3 + $0x4c] sm:$0xf]
        %v1175 = vld [vmem:[%s3 + $0x50] sm:$0xf]
        %v1176 = vld [vmem:[%s3 + $0x54] sm:$0xf]
        %v1177 = vld [vmem:[%s3 + $0x58] sm:$0xf]
        %v1178 = vld [vmem:[%s3 + $0x5c] sm:$0xf]
        %v1179 = vld [vmem:[%s3 + $0x60] sm:$0xf]
        %v1180 = vld [vmem:[%s3 + $0x64] sm:$0xf]
        %v1181 = vld [vmem:[%s3 + $0x68] sm:$0xf]
        %v1182 = vld [vmem:[%s3 + $0x6c] sm:$0xf]
        %v1183 = vld [vmem:[%s3 + $0x70] sm:$0xf]
        %v1184 = vld [vmem:[%s3 + $0x74] sm:$0xf]
        %v1185 = vld [vmem:[%s3 + $0x78] sm:$0xf]
        %v1186 = vld [vmem:[%s3 + $0x7c] sm:$0xf]
        %v1187 = vld [vmem:[%s3 + $0x80] sm:$0xf]
        %v1188 = vld [vmem:[%s3 + $0x84] sm:$0xf]
        %v1189 = vld [vmem:[%s3 + $0x88] sm:$0xf]
        %v1190 = vld [vmem:[%s3 + $0x8c] sm:$0xf]
        %v1191 = vld [vmem:[%s3 + $0x90] sm:$0xf]
        %v1192 = vld [vmem:[%s3 + $0x94] sm:$0xf]
        %v1193 = vld [vmem:[%s3 + $0x98] sm:$0xf]
        %v1194 = vld [vmem:[%s3 + $0x9c] sm:$0xf]
        %v1195 = vld [vmem:[%s3 + $0xa0] sm:$0xf]
        %v1196 = vld [vmem:[%s3 + $0xa4] sm:$0xf]
        %v1197 = vld [vmem:[%s3 + $0xa8] sm:$0xf]
        %v1198 = vld [vmem:[%s3 + $0xac] sm:$0xf]
        %v1199 = vld [vmem:[%s3 + $0xb0] sm:$0xf]
        %v1200 = vld [vmem:[%s3 + $0xb4] sm:$0xf]
        %v1201 = vld [vmem:[%s3 + $0xb8] sm:$0xf]
        %v1202 = vld [vmem:[%s3 + $0xbc] sm:$0xf]
        %v1203 = vld [vmem:[%s3 + $0xc0] sm:$0xf]
        %v1204 = vld [vmem:[%s3 + $0xc4] sm:$0xf]
        %v1205 = vld [vmem:[%s3 + $0xc8] sm:$0xf]
        %v1206 = vld [vmem:[%s3 + $0xcc] sm:$0xf]
        %v1207 = vld [vmem:[%s3 + $0xd0] sm:$0xf]
        %v1208 = vld [vmem:[%s3 + $0xd4] sm:$0xf]
        %v1209 = vld [vmem:[%s3 + $0xd8] sm:$0xf]
        %v1210 = vld [vmem:[%s3 + $0xdc] sm:$0xf]
        %v1211 = vld [vmem:[%s3 + $0xe0] sm:$0xf]
        %v1212 = vld [vmem:[%s3 + $0xe4] sm:$0xf]
        %v1213 = vld [vmem:[%s3 + $0xe8] sm:$0xf]
        %v1214 = vld [vmem:[%s3 + $0xec] sm:$0xf]
        %v1215 = vld [vmem:[%s3 + $0xf0] sm:$0xf]
        %v1216 = vld [vmem:[%s3 + $0xf4] sm:$0xf]
        %v1217 = vld [vmem:[%s3 + $0xf8] sm:$0xf]
        %v1218 = vld [vmem:[%s3 + $0xfc] sm:$0xf]
        %v1219 = vld [vmem:[%s3 + $0x100] sm:$0xf]
        %v1220 = vld [vmem:[%s3 + $0x104] sm:$0xf]
        %v1221 = vld [vmem:[%s3 + $0x108] sm:$0xf]
        %v1222 = vld [vmem:[%s3 + $0x10c] sm:$0xf]
        %v1223 = vld [vmem:[%s3 + $0x110] sm:$0xf]
        %v1224 = vld [vmem:[%s3 + $0x114] sm:$0xf]
        %v1225 = vld [vmem:[%s3 + $0x118] sm:$0xf]
        %v1226 = vld [vmem:[%s3 + $0x11c] sm:$0xf]
        %v1227 = vld [vmem:[%s3 + $0x120] sm:$0xf]
        %v1228 = vld [vmem:[%s3 + $0x124] sm:$0xf]
        %v1229 = vld [vmem:[%s3 + $0x128] sm:$0xf]
        %v1230 = vld [vmem:[%s3 + $0x12c] sm:$0xf]
        %v1231 = vld [vmem:[%s3 + $0x130] sm:$0xf]
        %v1232 = vld [vmem:[%s3 + $0x134] sm:$0xf]
        %v1233 = vld [vmem:[%s3 + $0x138] sm:$0xf]
        %v1234 = vld [vmem:[%s3 + $0x13c] sm:$0xf]
        %v1235 = vld [vmem:[%s3 + $0x140] sm:$0xf]
        %v1236 = vld [vmem:[%s3 + $0x144] sm:$0xf]
        %v1237 = vld [vmem:[%s3 + $0x148] sm:$0xf]
        %v1238 = vld [vmem:[%s3 + $0x14c] sm:$0xf]
        %v1239 = vld [vmem:[%s3 + $0x150] sm:$0xf]
        %v1240 = vld [vmem:[%s3 + $0x154] sm:$0xf]
        %v1241 = vld [vmem:[%s3 + $0x158] sm:$0xf]
        %v1242 = vld [vmem:[%s3 + $0x15c] sm:$0xf]
        %v1243 = vld [vmem:[%s3 + $0x160] sm:$0xf]
        %v1244 = vld [vmem:[%s3 + $0x164] sm:$0xf]
        %v1245 = vld [vmem:[%s3 + $0x168] sm:$0xf]
        %v1246 = vld [vmem:[%s3 + $0x16c] sm:$0xf]
        %v1247 = vld [vmem:[%s3 + $0x170] sm:$0xf]
        %v1248 = vld [vmem:[%s3 + $0x174] sm:$0xf]
        %v1249 = vld [vmem:[%s3 + $0x178] sm:$0xf]
        %v1250 = vld [vmem:[%s3 + $0x17c] sm:$0xf]
        %v1254 = vcombine.high %v1152, %v1152
        %v1255 = vcombine.high %v1153, %v1153
        %v1256 = vcombine.high %v1154, %v1154
        %v1260 = vpack.c.bf16 %v1152, %v1152
        %v1261 = vpack.c.bf16 %v1254, %v1254
        %v1262 = vpack.c.bf16 %v1153, %v1153
        %v1263 = vpack.c.bf16 %v1255, %v1255
        %v1264 = vpack.c.bf16 %v1154, %v1154
        %v1265 = vpack.c.bf16 %v1256, %v1256
        %v1266 = vld [vmem:[%s5] sm:$0x1]
        %v1268 = vlaneseq
        %v1269 = vshrl.u32 %v1268, 7
        %v1270 = vsub.s32 0, %v1269
        %v1271 = vrot.slane %v1266, %v1270
        %v1369 = vunpack.c.l.b16 %v1155
        %v1370 = vunpack.c.l.b16 %v1156
        %v1371 = vunpack.c.l.b16 %v1157
        %v1372 = vunpack.c.l.b16 %v1158
        %v1373 = vunpack.c.l.b16 %v1159
        %v1374 = vunpack.c.l.b16 %v1160
        %v1375 = vunpack.c.l.b16 %v1161
        %v1376 = vunpack.c.l.b16 %v1162
        %v1377 = vunpack.c.l.b16 %v1163
        %v1378 = vunpack.c.l.b16 %v1164
        %v1379 = vunpack.c.l.b16 %v1165
        %v1380 = vunpack.c.l.b16 %v1166
        %v1381 = vunpack.c.l.b16 %v1167
        %v1382 = vunpack.c.l.b16 %v1168
        %v1383 = vunpack.c.l.b16 %v1169
        %v1384 = vunpack.c.l.b16 %v1170
        %v1385 = vunpack.c.l.b16 %v1171
        %v1386 = vunpack.c.l.b16 %v1172
        %v1387 = vunpack.c.l.b16 %v1173
        %v1388 = vunpack.c.l.b16 %v1174
        %v1389 = vunpack.c.l.b16 %v1175
        %v1390 = vunpack.c.l.b16 %v1176
        %v1391 = vunpack.c.l.b16 %v1177
        %v1392 = vunpack.c.l.b16 %v1178
        %v1393 = vunpack.c.l.b16 %v1179
        %v1394 = vunpack.c.l.b16 %v1180
        %v1395 = vunpack.c.l.b16 %v1181
        %v1396 = vunpack.c.l.b16 %v1182
        %v1397 = vunpack.c.l.b16 %v1183
        %v1398 = vunpack.c.l.b16 %v1184
        %v1399 = vunpack.c.l.b16 %v1185
        %v1400 = vunpack.c.l.b16 %v1186
        %v1401 = vunpack.c.l.b16 %v1187
        %v1402 = vunpack.c.l.b16 %v1188
        %v1403 = vunpack.c.l.b16 %v1189
        %v1404 = vunpack.c.l.b16 %v1190
        %v1405 = vunpack.c.l.b16 %v1191
        %v1406 = vunpack.c.l.b16 %v1192
        %v1407 = vunpack.c.l.b16 %v1193
        %v1408 = vunpack.c.l.b16 %v1194
        %v1409 = vunpack.c.l.b16 %v1195
        %v1410 = vunpack.c.l.b16 %v1196
        %v1411 = vunpack.c.l.b16 %v1197
        %v1412 = vunpack.c.l.b16 %v1198
        %v1413 = vunpack.c.l.b16 %v1199
        %v1414 = vunpack.c.l.b16 %v1200
        %v1415 = vunpack.c.l.b16 %v1201
        %v1416 = vunpack.c.l.b16 %v1202
        %v1417 = vunpack.c.l.b16 %v1203
        %v1418 = vunpack.c.l.b16 %v1204
        %v1419 = vunpack.c.l.b16 %v1205
        %v1420 = vunpack.c.l.b16 %v1206
        %v1421 = vunpack.c.l.b16 %v1207
        %v1422 = vunpack.c.l.b16 %v1208
        %v1423 = vunpack.c.l.b16 %v1209
        %v1424 = vunpack.c.l.b16 %v1210
        %v1425 = vunpack.c.l.b16 %v1211
        %v1426 = vunpack.c.l.b16 %v1212
        %v1427 = vunpack.c.l.b16 %v1213
        %v1428 = vunpack.c.l.b16 %v1214
        %v1429 = vunpack.c.l.b16 %v1215
        %v1430 = vunpack.c.l.b16 %v1216
        %v1431 = vunpack.c.l.b16 %v1217
        %v1432 = vunpack.c.l.b16 %v1218
        %v1433 = vunpack.c.l.b16 %v1219
        %v1434 = vunpack.c.l.b16 %v1220
        %v1435 = vunpack.c.l.b16 %v1221
        %v1436 = vunpack.c.l.b16 %v1222
        %v1437 = vunpack.c.l.b16 %v1223
        %v1438 = vunpack.c.l.b16 %v1224
        %v1439 = vunpack.c.l.b16 %v1225
        %v1440 = vunpack.c.l.b16 %v1226
        %v1441 = vunpack.c.l.b16 %v1227
        %v1442 = vunpack.c.l.b16 %v1228
        %v1443 = vunpack.c.l.b16 %v1229
        %v1444 = vunpack.c.l.b16 %v1230
        %v1445 = vunpack.c.l.b16 %v1231
        %v1446 = vunpack.c.l.b16 %v1232
        %v1447 = vunpack.c.l.b16 %v1233
        %v1448 = vunpack.c.l.b16 %v1234
        %v1449 = vunpack.c.l.b16 %v1235
        %v1450 = vunpack.c.l.b16 %v1236
        %v1451 = vunpack.c.l.b16 %v1237
        %v1452 = vunpack.c.l.b16 %v1238
        %v1453 = vunpack.c.l.b16 %v1239
        %v1454 = vunpack.c.l.b16 %v1240
        %v1455 = vunpack.c.l.b16 %v1241
        %v1456 = vunpack.c.l.b16 %v1242
        %v1457 = vunpack.c.l.b16 %v1243
        %v1458 = vunpack.c.l.b16 %v1244
        %v1459 = vunpack.c.l.b16 %v1245
        %v1460 = vunpack.c.l.b16 %v1246
        %v1461 = vunpack.c.l.b16 %v1247
        %v1462 = vunpack.c.l.b16 %v1248
        %v1463 = vunpack.c.l.b16 %v1249
        %v1464 = vunpack.c.l.b16 %v1250
        %v1465 = vpack.c.b16 %v1370, %v1369
        %v1466 = vpack.c.b16 %v1372, %v1371
        %v1467 = vpack.c.b16 %v1374, %v1373
        %v1468 = vpack.c.b16 %v1376, %v1375
        %v1469 = vpack.c.b16 %v1378, %v1377
        %v1470 = vpack.c.b16 %v1380, %v1379
        %v1471 = vpack.c.b16 %v1382, %v1381
        %v1472 = vpack.c.b16 %v1384, %v1383
        %v1473 = vpack.c.b16 %v1386, %v1385
        %v1474 = vpack.c.b16 %v1388, %v1387
        %v1475 = vpack.c.b16 %v1390, %v1389
        %v1476 = vpack.c.b16 %v1392, %v1391
        %v1477 = vpack.c.b16 %v1394, %v1393
        %v1478 = vpack.c.b16 %v1396, %v1395
        %v1479 = vpack.c.b16 %v1398, %v1397
        %v1480 = vpack.c.b16 %v1400, %v1399
        %v1481 = vpack.c.b16 %v1402, %v1401
        %v1482 = vpack.c.b16 %v1404, %v1403
        %v1483 = vpack.c.b16 %v1406, %v1405
        %v1484 = vpack.c.b16 %v1408, %v1407
        %v1485 = vpack.c.b16 %v1410, %v1409
        %v1486 = vpack.c.b16 %v1412, %v1411
        %v1487 = vpack.c.b16 %v1414, %v1413
        %v1488 = vpack.c.b16 %v1416, %v1415
        %v1489 = vpack.c.b16 %v1418, %v1417
        %v1490 = vpack.c.b16 %v1420, %v1419
        %v1491 = vpack.c.b16 %v1422, %v1421
        %v1492 = vpack.c.b16 %v1424, %v1423
        %v1493 = vpack.c.b16 %v1426, %v1425
        %v1494 = vpack.c.b16 %v1428, %v1427
        %v1495 = vpack.c.b16 %v1430, %v1429
        %v1496 = vpack.c.b16 %v1432, %v1431
        %v1497 = vpack.c.b16 %v1434, %v1433
        %v1498 = vpack.c.b16 %v1436, %v1435
        %v1499 = vpack.c.b16 %v1438, %v1437
        %v1500 = vpack.c.b16 %v1440, %v1439
        %v1501 = vpack.c.b16 %v1442, %v1441
        %v1502 = vpack.c.b16 %v1444, %v1443
        %v1503 = vpack.c.b16 %v1446, %v1445
        %v1504 = vpack.c.b16 %v1448, %v1447
        %v1505 = vpack.c.b16 %v1450, %v1449
        %v1506 = vpack.c.b16 %v1452, %v1451
        %v1507 = vpack.c.b16 %v1454, %v1453
        %v1508 = vpack.c.b16 %v1456, %v1455
        %v1509 = vpack.c.b16 %v1458, %v1457
        %v1510 = vpack.c.b16 %v1460, %v1459
        %v1511 = vpack.c.b16 %v1462, %v1461
        %v1512 = vpack.c.b16 %v1464, %v1463
        %1561 = vmatprep.subr.bf16.mxu0 0
        %1562 = vmatpush1.bf16.msra.mxu0 %v1472
        %1563 = vmatprep.subr.bf16.mxu0 0
        %1564 = vmatpush1.bf16.msra.mxu0 %v1471
        %1565 = vmatprep.subr.bf16.mxu0 0
        %1566 = vmatpush1.bf16.msra.mxu0 %v1470
        %1567 = vmatprep.subr.bf16.mxu0 0
        %1568 = vmatpush1.bf16.msra.mxu0 %v1469
        %1569 = vmatprep.subr.bf16.mxu0 0
        %1570 = vmatpush1.bf16.msra.mxu0 %v1468
        %1571 = vmatprep.subr.bf16.mxu0 0
        %1572 = vmatpush1.bf16.msra.mxu0 %v1467
        %1573 = vmatprep.subr.bf16.mxu0 0
        %1574 = vmatpush1.bf16.msra.mxu0 %v1466
        %1575 = vmatprep.subr.bf16.mxu0 0
        %1576 = vmatpush1.bf16.msra.mxu0 %v1465
        %1577 = vmatprep.subr.bf16.mxu0 0
        %1578 = vmatpush2.bf16.msra.mxu0 %v1480
        %1579 = vmatprep.subr.bf16.mxu0 0
        %1580 = vmatpush2.bf16.msra.mxu0 %v1479
        %1581 = vmatprep.subr.bf16.mxu0 0
        %1582 = vmatpush2.bf16.msra.mxu0 %v1478
        %1583 = vmatprep.subr.bf16.mxu0 0
        %1584 = vmatpush2.bf16.msra.mxu0 %v1477
        %1585 = vmatprep.subr.bf16.mxu0 0
        %1586 = vmatpush2.bf16.msra.mxu0 %v1476
        %1587 = vmatprep.subr.bf16.mxu0 0
        %1588 = vmatpush2.bf16.msra.mxu0 %v1475
        %1589 = vmatprep.subr.bf16.mxu0 0
        %1590 = vmatpush2.bf16.msra.mxu0 %v1474
        %1591 = vmatprep.subr.bf16.mxu0 0
        %1592 = vmatpush2.bf16.msra.mxu0 %v1473
        %1593 = vmatprep.mubr.bf16.mxu0 %v1261
        %1594 = vmatmul.mubr.bf16.gmra.mxu0 %v1260
        %v1595 = vpop.f32.mrf.mxu0
        %v1596 = vadd.f32 %v1271, %v1595
        %v1597 = vpop.f32.mrf.mxu0
        %v1598 = vpop.f32.mrf.mxu0
        %v1599 = vpop.f32.mrf.mxu0
        %1600 = vdwg.mxu0
        %1601 = vmatprep.subr.bf16.mxu0 0
        %1602 = vmatpush1.bf16.msra.mxu0 %v1488
        %1603 = vmatprep.subr.bf16.mxu0 0
        %1604 = vmatpush1.bf16.msra.mxu0 %v1487
        %1605 = vmatprep.subr.bf16.mxu0 0
        %1606 = vmatpush1.bf16.msra.mxu0 %v1486
        %1607 = vmatprep.subr.bf16.mxu0 0
        %1608 = vmatpush1.bf16.msra.mxu0 %v1485
        %1609 = vmatprep.subr.bf16.mxu0 0
        %1610 = vmatpush1.bf16.msra.mxu0 %v1484
        %1611 = vmatprep.subr.bf16.mxu0 0
        %1612 = vmatpush1.bf16.msra.mxu0 %v1483
        %1613 = vmatprep.subr.bf16.mxu0 0
        %1614 = vmatpush1.bf16.msra.mxu0 %v1482
        %1615 = vmatprep.subr.bf16.mxu0 0
        %1616 = vmatpush1.bf16.msra.mxu0 %v1481
        %1617 = vmatprep.subr.bf16.mxu0 0
        %1618 = vmatpush2.bf16.msra.mxu0 %v1496
        %1619 = vmatprep.subr.bf16.mxu0 0
        %1620 = vmatpush2.bf16.msra.mxu0 %v1495
        %1621 = vmatprep.subr.bf16.mxu0 0
        %1622 = vmatpush2.bf16.msra.mxu0 %v1494
        %1623 = vmatprep.subr.bf16.mxu0 0
        %1624 = vmatpush2.bf16.msra.mxu0 %v1493
        %1625 = vmatprep.subr.bf16.mxu0 0
        %1626 = vmatpush2.bf16.msra.mxu0 %v1492
        %1627 = vmatprep.subr.bf16.mxu0 0
        %1628 = vmatpush2.bf16.msra.mxu0 %v1491
        %1629 = vmatprep.subr.bf16.mxu0 0
        %1630 = vmatpush2.bf16.msra.mxu0 %v1490
        %1631 = vmatprep.subr.bf16.mxu0 0
        %1632 = vmatpush2.bf16.msra.mxu0 %v1489
        %1633 = vmatprep.mubr.bf16.mxu0 %v1263
        %1634 = vmatmul.mubr.bf16.gmra.mxu0 %v1262
        %v1635 = vpop.f32.mrf.mxu0
        %v1636 = vadd.f32 %v1596, %v1635
        %v1637 = vpop.f32.mrf.mxu0
        %v1638 = vpop.f32.mrf.mxu0
        %v1639 = vpop.f32.mrf.mxu0
        %1640 = vdwg.mxu0
        %1641 = vmatprep.subr.bf16.mxu0 0
        %1642 = vmatpush1.bf16.msra.mxu0 %v1504
        %1643 = vmatprep.subr.bf16.mxu0 0
        %1644 = vmatpush1.bf16.msra.mxu0 %v1503
        %1645 = vmatprep.subr.bf16.mxu0 0
        %1646 = vmatpush1.bf16.msra.mxu0 %v1502
        %1647 = vmatprep.subr.bf16.mxu0 0
        %1648 = vmatpush1.bf16.msra.mxu0 %v1501
        %1649 = vmatprep.subr.bf16.mxu0 0
        %1650 = vmatpush1.bf16.msra.mxu0 %v1500
        %1651 = vmatprep.subr.bf16.mxu0 0
        %1652 = vmatpush1.bf16.msra.mxu0 %v1499
        %1653 = vmatprep.subr.bf16.mxu0 0
        %1654 = vmatpush1.bf16.msra.mxu0 %v1498
        %1655 = vmatprep.subr.bf16.mxu0 0
        %1656 = vmatpush1.bf16.msra.mxu0 %v1497
        %1657 = vmatprep.subr.bf16.mxu0 0
        %1658 = vmatpush2.bf16.msra.mxu0 %v1512
        %1659 = vmatprep.subr.bf16.mxu0 0
        %1660 = vmatpush2.bf16.msra.mxu0 %v1511
        %1661 = vmatprep.subr.bf16.mxu0 0
        %1662 = vmatpush2.bf16.msra.mxu0 %v1510
        %1663 = vmatprep.subr.bf16.mxu0 0
        %1664 = vmatpush2.bf16.msra.mxu0 %v1509
        %1665 = vmatprep.subr.bf16.mxu0 0
        %1666 = vmatpush2.bf16.msra.mxu0 %v1508
        %1667 = vmatprep.subr.bf16.mxu0 0
        %1668 = vmatpush2.bf16.msra.mxu0 %v1507
        %1669 = vmatprep.subr.bf16.mxu0 0
        %1670 = vmatpush2.bf16.msra.mxu0 %v1506
        %1671 = vmatprep.subr.bf16.mxu0 0
        %1672 = vmatpush2.bf16.msra.mxu0 %v1505
        %1673 = vmatprep.mubr.bf16.mxu0 %v1265
        %1674 = vmatmul.mubr.bf16.gmra.mxu0 %v1264
        %v1675 = vpop.f32.mrf.mxu0
        %v1676 = vadd.f32 %v1636, %v1675
        %v1677 = vpop.f32.mrf.mxu0
        %v1678 = vpop.f32.mrf.mxu0
        %v1679 = vpop.f32.mrf.mxu0
        %1680 = vdwg.mxu0
        %v1681 = vld [vmem:[%s9] sm:$0xf]
        %v1682 = vadd.f32 %v1676, %v1681
        %v1683 = vld [vmem:[%s7] sm:$0x1]
        %vm1684 = vcmask 516096
        %1685 = vst.msk [vmem:[#allocation2] sm:$0x1] %vm1684, %v1683
        %vm1686 = vcmask 519168
        %1687 = vst.msk [vmem:[#allocation2 + $0x1] sm:$0xf] %vm1686, %v1682
      $region140: #{fsra_forward.1} parent=135 // pred_fallthru
        _
      %v1688 = vld [vmem:[#allocation2] sm:$0x1f]
      %v1689 = vld [vmem:[%s1096] sm:$0x1]
      %v1690 = vld [vmem:[%s1099] sm:$0x1]
      %vm1691 = vcmask 520192
      %v1692 = vsel %vm1691, %v1688, 0.0
      %1693 = vadd.xlane.f32.xlu0 %v1692
      %v1694 = vpop.xlane.xlu0 %1693
      %v1695 = vrcp.pop 64.0
      %v1696 = vmul.f32 %v1694, %v1695
      %v1697 = vsub.f32 %v1688, %v1696
      %v1698 = vmul.f32 %v1697, %v1697
      %v1699 = vsel %vm1691, %v1698, 0.0
      %1700 = vadd.xlane.f32.xlu0 %v1699
      %v1701 = vpop.xlane.xlu0 %1700
      %v1702 = vmul.f32 %v1701, %v1695
      %v1703 = vadd.f32 %v1702, 1e-06
      %v1704 = vrsqrt.pop %v1703
      %v1705 = vmul.f32 %v1697, %v1704
      %v1707 = vlaneseq
      %v1708 = vshrl.u32 %v1707, 7
      %v1709 = vsub.s32 0, %v1708
      %v1710 = vrot.slane %v1689, %v1709
      %v1712 = vmul.f32 %v1705, %v1710
      %v1714 = vlaneseq
      %v1715 = vshrl.u32 %v1714, 7
      %v1716 = vsub.s32 0, %v1715
      %v1717 = vrot.slane %v1690, %v1716
      %v1719 = vadd.f32 %v1712, %v1717
      %v1720 = vld [vmem:[%s1104] sm:$0xff]
      %v1721 = vld [vmem:[%s1104 + $0x8] sm:$0xff]
      %v1722 = vld [vmem:[%s1104 + $0x10] sm:$0xff]
      %v1723 = vld [vmem:[%s1104 + $0x18] sm:$0xff]
      %v1724 = vld [vmem:[%s1104 + $0x20] sm:$0xff]
      %v1725 = vld [vmem:[%s1104 + $0x28] sm:$0xff]
      %v1726 = vld [vmem:[%s1104 + $0x30] sm:$0xff]
      %v1727 = vld [vmem:[%s1104 + $0x38] sm:$0xff]
      %v1728 = vpack.c.bf16 %v1719, %v1719
      %v1729 = vld [vmem:[%s1108] sm:$0x3]
      %v1731 = vlaneseq
      %v1732 = vshrl.u32 %v1731, 7
      %v1733 = vsub.s32 0, %v1732
      %v1734 = vrot.slane %v1729, %v1733
      %v1735 = vlaneseq
      %v1736 = vshrl.u32 %v1735, 7
      %v1737 = vsub.s32 1, %v1736
      %v1738 = vrot.slane %v1729, %v1737
      %v1749 = vunpack.c.l.b16 %v1720
      %v1750 = vunpack.c.h.b16 %v1720
      %v1751 = vunpack.c.l.b16 %v1721
      %v1752 = vunpack.c.h.b16 %v1721
      %v1753 = vunpack.c.l.b16 %v1722
      %v1754 = vunpack.c.h.b16 %v1722
      %v1755 = vunpack.c.l.b16 %v1723
      %v1756 = vunpack.c.h.b16 %v1723
      %v1757 = vunpack.c.l.b16 %v1724
      %v1758 = vunpack.c.h.b16 %v1724
      %v1759 = vunpack.c.l.b16 %v1725
      %v1760 = vunpack.c.h.b16 %v1725
      %v1761 = vunpack.c.l.b16 %v1726
      %v1762 = vunpack.c.h.b16 %v1726
      %v1763 = vunpack.c.l.b16 %v1727
      %v1764 = vunpack.c.h.b16 %v1727
      %v1765 = vpack.c.b16 %v1751, %v1749
      %v1766 = vpack.c.b16 %v1752, %v1750
      %v1767 = vpack.c.b16 %v1755, %v1753
      %v1768 = vpack.c.b16 %v1756, %v1754
      %v1769 = vpack.c.b16 %v1759, %v1757
      %v1770 = vpack.c.b16 %v1760, %v1758
      %v1771 = vpack.c.b16 %v1763, %v1761
      %v1772 = vpack.c.b16 %v1764, %v1762
      %vm1781 = vcmask 523264
      %v1783 = vsel %vm1781, %v1728, 0
      %1785 = vmatprep.subr.bf16.mxu0 0
      %1786 = vmatpush1.bf16.msra.mxu0 0
      %1787 = vmatprep.subr.bf16.mxu0 0
      %1788 = vmatpush1.bf16.msra.mxu0 0
      %1789 = vmatprep.subr.bf16.mxu0 0
      %1790 = vmatpush1.bf16.msra.mxu0 0
      %1791 = vmatprep.subr.bf16.mxu0 0
      %1792 = vmatpush1.bf16.msra.mxu0 0
      %1793 = vmatprep.subr.bf16.mxu0 %v1772
      %1794 = vmatpush1.bf16.msra.mxu0 %v1771
      %1795 = vmatprep.subr.bf16.mxu0 %v1770
      %1796 = vmatpush1.bf16.msra.mxu0 %v1769
      %1797 = vmatprep.subr.bf16.mxu0 %v1768
      %1798 = vmatpush1.bf16.msra.mxu0 %v1767
      %1799 = vmatprep.subr.bf16.mxu0 %v1766
      %1800 = vmatpush1.bf16.msra.mxu0 %v1765
      %1801 = vmatprep.subr.bf16.mxu0 0
      %1802 = vmatpush2.bf16.msra.mxu0 0
      %1803 = vmatprep.subr.bf16.mxu0 0
      %1804 = vmatpush2.bf16.msra.mxu0 0
      %1805 = vmatprep.subr.bf16.mxu0 0
      %1806 = vmatpush2.bf16.msra.mxu0 0
      %1807 = vmatprep.subr.bf16.mxu0 0
      %1808 = vmatpush2.bf16.msra.mxu0 0
      %1809 = vmatprep.subr.bf16.mxu0 0
      %1810 = vmatpush2.bf16.msra.mxu0 0
      %1811 = vmatprep.subr.bf16.mxu0 0
      %1812 = vmatpush2.bf16.msra.mxu0 0
      %1813 = vmatprep.subr.bf16.mxu0 0
      %1814 = vmatpush2.bf16.msra.mxu0 0
      %1815 = vmatprep.subr.bf16.mxu0 0
      %1816 = vmatpush2.bf16.msra.mxu0 0
      %1817 = vmatprep.mubr.bf16.mxu0 0
      %1818 = vmatmul.mubr.bf16.gmra.mxu0 %v1783
      %v1819 = vpop.f32.mrf.mxu0
      %v1820 = vadd.f32 %v1734, %v1819
      %v1821 = vpop.f32.mrf.mxu0
      %v1822 = vadd.f32 %v1738, %v1821
      %v1823 = vpop.f32.mrf.mxu0
      %v1824 = vpop.f32.mrf.mxu0
      %1825 = vdwg.mxu0
      %v1826 = vld [vmem:[%s1113] sm:$0xf]
      %v1827 = vld [vmem:[%s1113 + $0x4] sm:$0xf]
      %v1828 = vld [vmem:[%s1113 + $0x8] sm:$0xf]
      %v1829 = vld [vmem:[%s1113 + $0xc] sm:$0xf]
      %v1830 = vld [vmem:[%s1113 + $0x10] sm:$0xf]
      %v1831 = vld [vmem:[%s1113 + $0x14] sm:$0xf]
      %v1832 = vld [vmem:[%s1113 + $0x18] sm:$0xf]
      %v1833 = vld [vmem:[%s1113 + $0x1c] sm:$0xf]
      %v1834 = vld [vmem:[%s1116] sm:$0x1]
      %v1835 = vpack.c.bf16 %v1820, %v1820
      %v1836 = vpack.c.bf16 %v1822, %v1822
      %1838 = vrot.lane.b32.xlu0 %v1835, 64
      %v1839 = vpop.permute.xlu0 %1838
      %vm1840 = vcmask 130048
      %v1842 = vsel %vm1840, %v1835, 0
      %v1845 = vsel %vm1840, %v1839, 0
      %1847 = vmatprep.subr.bf16.mxu0 0
      %1848 = vmatpush1.bf16.xpose.msra.mxu0 0
      %1849 = vmatprep.subr.bf16.mxu0 0
      %1850 = vmatpush1.bf16.xpose.msra.mxu0 0
      %1851 = vmatprep.subr.bf16.mxu0 0
      %1852 = vmatpush1.bf16.xpose.msra.mxu0 0
      %1853 = vmatprep.subr.bf16.mxu0 0
      %1854 = vmatpush1.bf16.xpose.msra.mxu0 0
      %1855 = vmatprep.subr.bf16.mxu0 0
      %1856 = vmatpush1.bf16.xpose.msra.mxu0 0
      %1857 = vmatprep.subr.bf16.mxu0 0
      %1858 = vmatpush1.bf16.xpose.msra.mxu0 0
      %1859 = vmatprep.subr.bf16.mxu0 0
      %1860 = vmatpush1.bf16.xpose.msra.mxu0 0
      %1861 = vmatprep.subr.bf16.mxu0 0
      %1862 = vmatpush1.bf16.xpose.msra.mxu0 %v1845
      %1863 = vmatprep.subr.bf16.mxu0 0
      %1864 = vmatpush2.bf16.xpose.msra.mxu0 0
      %1865 = vmatprep.subr.bf16.mxu0 0
      %1866 = vmatpush2.bf16.xpose.msra.mxu0 0
      %1867 = vmatprep.subr.bf16.mxu0 0
      %1868 = vmatpush2.bf16.xpose.msra.mxu0 0
      %1869 = vmatprep.subr.bf16.mxu0 0
      %1870 = vmatpush2.bf16.xpose.msra.mxu0 0
      %1871 = vmatprep.subr.bf16.mxu0 0
      %1872 = vmatpush2.bf16.xpose.msra.mxu0 0
      %1873 = vmatprep.subr.bf16.mxu0 0
      %1874 = vmatpush2.bf16.xpose.msra.mxu0 0
      %1875 = vmatprep.subr.bf16.mxu0 0
      %1876 = vmatpush2.bf16.xpose.msra.mxu0 0
      %1877 = vmatprep.subr.bf16.mxu0 0
      %1878 = vmatpush2.bf16.xpose.msra.mxu0 0
      %1879 = vmatprep.mubr.bf16.mxu0 0
      %1880 = vmatmul.mubr.bf16.gmra.mxu0 %v1842
      %v1881 = vpop.f32.mrf.mxu0
      %v1882 = vadd.f32 0.0, %v1881
      %v1883 = vpop.f32.mrf.mxu0
      %v1884 = vpop.f32.mrf.mxu0
      %v1885 = vpop.f32.mrf.mxu0
      %1886 = vdwg.mxu0
      %v1887 = vmul.f32 %v1882, 0.25
      %vm1888 = vcmask 36864
      %v1889 = vsel %vm1888, %v1887, -inf
      %1890 = vmax.xlane.f32.xlu0 %v1889
      %v1891 = vpop.xlane.xlu0 %1890
      %v1892 = vsub.f32 %v1887, %v1891
      %v1893 = vmul.f32 %v1892, 1.442695
      %v1894 = vpow.pop %v1893
      %v1895 = vsel %vm1888, %v1894, 0.0
      %1896 = vadd.xlane.f32.xlu0 %v1895
      %v1897 = vpop.xlane.xlu0 %1896
      %v1898 = vrcp.pop %v1897
      %v1899 = vmul.f32 %v1894, %v1898
      %v1900 = vpack.c.bf16 %v1899, %v1899
      %vm1901 = vcmask 39936
      %v1903 = vsel %vm1901, %v1900, 0
      %vm1905 = vcmask 1041408
      %vm1906 = vcmask 1042432
      %v1907 = vsel %vm1905, 4294967295, 65535
      %v1908 = vsel %vm1906, %v1907, 0
      %v1910 = vand.u32 %v1836, %v1908
      %1912 = vmatprep.subr.bf16.mxu0 0
      %1913 = vmatpush1.bf16.msra.mxu0 0
      %1914 = vmatprep.subr.bf16.mxu0 0
      %1915 = vmatpush1.bf16.msra.mxu0 0
      %1916 = vmatprep.subr.bf16.mxu0 0
      %1917 = vmatpush1.bf16.msra.mxu0 0
      %1918 = vmatprep.subr.bf16.mxu0 0
      %1919 = vmatpush1.bf16.msra.mxu0 0
      %1920 = vmatprep.subr.bf16.mxu0 0
      %1921 = vmatpush1.bf16.msra.mxu0 0
      %1922 = vmatprep.subr.bf16.mxu0 0
      %1923 = vmatpush1.bf16.msra.mxu0 0
      %1924 = vmatprep.subr.bf16.mxu0 0
      %1925 = vmatpush1.bf16.msra.mxu0 0
      %1926 = vmatprep.subr.bf16.mxu0 0
      %1927 = vmatpush1.bf16.msra.mxu0 %v1910
      %1928 = vmatprep.subr.bf16.mxu0 0
      %1929 = vmatpush2.bf16.msra.mxu0 0
      %1930 = vmatprep.subr.bf16.mxu0 0
      %1931 = vmatpush2.bf16.msra.mxu0 0
      %1932 = vmatprep.subr.bf16.mxu0 0
      %1933 = vmatpush2.bf16.msra.mxu0 0
      %1934 = vmatprep.subr.bf16.mxu0 0
      %1935 = vmatpush2.bf16.msra.mxu0 0
      %1936 = vmatprep.subr.bf16.mxu0 0
      %1937 = vmatpush2.bf16.msra.mxu0 0
      %1938 = vmatprep.subr.bf16.mxu0 0
      %1939 = vmatpush2.bf16.msra.mxu0 0
      %1940 = vmatprep.subr.bf16.mxu0 0
      %1941 = vmatpush2.bf16.msra.mxu0 0
      %1942 = vmatprep.subr.bf16.mxu0 0
      %1943 = vmatpush2.bf16.msra.mxu0 0
      %1944 = vmatprep.mubr.bf16.mxu0 0
      %1945 = vmatmul.mubr.bf16.gmra.mxu0 %v1903
      %v1946 = vpop.f32.mrf.mxu0
      %v1947 = vadd.f32 0.0, %v1946
      %v1948 = vpop.f32.mrf.mxu0
      %v1949 = vpop.f32.mrf.mxu0
      %v1950 = vpop.f32.mrf.mxu0
      %1951 = vdwg.mxu0
      %v1952 = vpack.c.bf16 %v1947, %v1947
      %v1955 = vunpack.c.l.b16 %v1826
      %v1956 = vunpack.c.l.b16 %v1827
      %v1957 = vpack.c.b16 %v1956, %v1955
      %v1960 = vsel %vm1840, %v1952, 0
      %1962 = vmatprep.subr.bf16.mxu0 0
      %1963 = vmatpush1.bf16.msra.mxu0 0
      %1964 = vmatprep.subr.bf16.mxu0 0
      %1965 = vmatpush1.bf16.msra.mxu0 0
      %1966 = vmatprep.subr.bf16.mxu0 0
      %1967 = vmatpush1.bf16.msra.mxu0 0
      %1968 = vmatprep.subr.bf16.mxu0 0
      %1969 = vmatpush1.bf16.msra.mxu0 0
      %1970 = vmatprep.subr.bf16.mxu0 0
      %1971 = vmatpush1.bf16.msra.mxu0 0
      %1972 = vmatprep.subr.bf16.mxu0 0
      %1973 = vmatpush1.bf16.msra.mxu0 0
      %1974 = vmatprep.subr.bf16.mxu0 0
      %1975 = vmatpush1.bf16.msra.mxu0 0
      %1976 = vmatprep.subr.bf16.mxu0 0
      %1977 = vmatpush1.bf16.msra.mxu0 %v1957
      %1978 = vmatprep.subr.bf16.mxu0 0
      %1979 = vmatpush2.bf16.msra.mxu0 0
      %1980 = vmatprep.subr.bf16.mxu0 0
      %1981 = vmatpush2.bf16.msra.mxu0 0
      %1982 = vmatprep.subr.bf16.mxu0 0
      %1983 = vmatpush2.bf16.msra.mxu0 0
      %1984 = vmatprep.subr.bf16.mxu0 0
      %1985 = vmatpush2.bf16.msra.mxu0 0
      %1986 = vmatprep.subr.bf16.mxu0 0
      %1987 = vmatpush2.bf16.msra.mxu0 0
      %1988 = vmatprep.subr.bf16.mxu0 0
      %1989 = vmatpush2.bf16.msra.mxu0 0
      %1990 = vmatprep.subr.bf16.mxu0 0
      %1991 = vmatpush2.bf16.msra.mxu0 0
      %1992 = vmatprep.subr.bf16.mxu0 0
      %1993 = vmatpush2.bf16.msra.mxu0 0
      %1994 = vmatprep.mubr.bf16.mxu0 0
      %1995 = vmatmul.mubr.bf16.gmra.mxu0 %v1960
      %v1996 = vpop.f32.mrf.mxu0
      %v1997 = vadd.f32 0.0, %v1996
      %v1998 = vpop.f32.mrf.mxu0
      %v1999 = vpop.f32.mrf.mxu0
      %v2000 = vpop.f32.mrf.mxu0
      %2001 = vdwg.mxu0
      %v2003 = vlaneseq
      %v2004 = vshrl.u32 %v2003, 7
      %v2005 = vsub.s32 0, %v2004
      %v2006 = vrot.slane %v1834, %v2005
      %v2008 = vadd.f32 %v2006, %v1997
      %2009 = vrot.lane.b32.xlu0 %v1835, 112
      %v2010 = vpop.permute.xlu0 %2009
      %2011 = vrot.lane.b32.xlu0 %v1835, 48
      %v2012 = vpop.permute.xlu0 %2011
      %v2014 = vsel %vm1840, %v2010, 0
      %v2017 = vsel %vm1840, %v2012, 0
      %2019 = vmatprep.subr.bf16.mxu0 0
      %2020 = vmatpush1.bf16.xpose.msra.mxu0 0
      %2021 = vmatprep.subr.bf16.mxu0 0
      %2022 = vmatpush1.bf16.xpose.msra.mxu0 0
      %2023 = vmatprep.subr.bf16.mxu0 0
      %2024 = vmatpush1.bf16.xpose.msra.mxu0 0
      %2025 = vmatprep.subr.bf16.mxu0 0
      %2026 = vmatpush1.bf16.xpose.msra.mxu0 0
      %2027 = vmatprep.subr.bf16.mxu0 0
      %2028 = vmatpush1.bf16.xpose.msra.mxu0 0
      %2029 = vmatprep.subr.bf16.mxu0 0
      %2030 = vmatpush1.bf16.xpose.msra.mxu0 0
      %2031 = vmatprep.subr.bf16.mxu0 0
      %2032 = vmatpush1.bf16.xpose.msra.mxu0 0
      %2033 = vmatprep.subr.bf16.mxu0 0
      %2034 = vmatpush1.bf16.xpose.msra.mxu0 %v2017
      %2035 = vmatprep.subr.bf16.mxu0 0
      %2036 = vmatpush2.bf16.xpose.msra.mxu0 0
      %2037 = vmatprep.subr.bf16.mxu0 0
      %2038 = vmatpush2.bf16.xpose.msra.mxu0 0
      %2039 = vmatprep.subr.bf16.mxu0 0
      %2040 = vmatpush2.bf16.xpose.msra.mxu0 0
      %2041 = vmatprep.subr.bf16.mxu0 0
      %2042 = vmatpush2.bf16.xpose.msra.mxu0 0
      %2043 = vmatprep.subr.bf16.mxu0 0
      %2044 = vmatpush2.bf16.xpose.msra.mxu0 0
      %2045 = vmatprep.subr.bf16.mxu0 0
      %2046 = vmatpush2.bf16.xpose.msra.mxu0 0
      %2047 = vmatprep.subr.bf16.mxu0 0
      %2048 = vmatpush2.bf16.xpose.msra.mxu0 0
      %2049 = vmatprep.subr.bf16.mxu0 0
      %2050 = vmatpush2.bf16.xpose.msra.mxu0 0
      %2051 = vmatprep.mubr.bf16.mxu0 0
      %2052 = vmatmul.mubr.bf16.gmra.mxu0 %v2014
      %v2053 = vpop.f32.mrf.mxu0
      %v2054 = vadd.f32 0.0, %v2053
      %v2055 = vpop.f32.mrf.mxu0
      %v2056 = vpop.f32.mrf.mxu0
      %v2057 = vpop.f32.mrf.mxu0
      %2058 = vdwg.mxu0
      %v2059 = vmul.f32 %v2054, 0.25
      %v2060 = vsel %vm1888, %v2059, -inf
      %2061 = vmax.xlane.f32.xlu0 %v2060
      %v2062 = vpop.xlane.xlu0 %2061
      %v2063 = vsub.f32 %v2059, %v2062
      %v2064 = vmul.f32 %v2063, 1.442695
      %v2065 = vpow.pop %v2064
      %v2066 = vsel %vm1888, %v2065, 0.0
      %2067 = vadd.xlane.f32.xlu0 %v2066
      %v2068 = vpop.xlane.xlu0 %2067
      %v2069 = vrcp.pop %v2068
      %v2070 = vmul.f32 %v2065, %v2069
      %v2071 = vpack.c.bf16 %v2070, %v2070
      %2073 = vrot.lane.b32.xlu0 %v1836, 112
      %v2074 = vpop.permute.xlu0 %2073
      %v2076 = vsel %vm1901, %v2071, 0
      %v2079 = vand.u32 %v2074, %v1908
      %2081 = vmatprep.subr.bf16.mxu0 0
      %2082 = vmatpush1.bf16.msra.mxu0 0
      %2083 = vmatprep.subr.bf16.mxu0 0
      %2084 = vmatpush1.bf16.msra.mxu0 0
      %2085 = vmatprep.subr.bf16.mxu0 0
      %2086 = vmatpush1.bf16.msra.mxu0 0
      %2087 = vmatprep.subr.bf16.mxu0 0
      %2088 = vmatpush1.bf16.msra.mxu0 0
      %2089 = vmatprep.subr.bf16.mxu0 0
      %2090 = vmatpush1.bf16.msra.mxu0 0
      %2091 = vmatprep.subr.bf16.mxu0 0
      %2092 = vmatpush1.bf16.msra.mxu0 0
      %2093 = vmatprep.subr.bf16.mxu0 0
      %2094 = vmatpush1.bf16.msra.mxu0 0
      %2095 = vmatprep.subr.bf16.mxu0 0
      %2096 = vmatpush1.bf16.msra.mxu0 %v2079
      %2097 = vmatprep.subr.bf16.mxu0 0
      %2098 = vmatpush2.bf16.msra.mxu0 0
      %2099 = vmatprep.subr.bf16.mxu0 0
      %2100 = vmatpush2.bf16.msra.mxu0 0
      %2101 = vmatprep.subr.bf16.mxu0 0
      %2102 = vmatpush2.bf16.msra.mxu0 0
      %2103 = vmatprep.subr.bf16.mxu0 0
      %2104 = vmatpush2.bf16.msra.mxu0 0
      %2105 = vmatprep.subr.bf16.mxu0 0
      %2106 = vmatpush2.bf16.msra.mxu0 0
      %2107 = vmatprep.subr.bf16.mxu0 0
      %2108 = vmatpush2.bf16.msra.mxu0 0
      %2109 = vmatprep.subr.bf16.mxu0 0
      %2110 = vmatpush2.bf16.msra.mxu0 0
      %2111 = vmatprep.subr.bf16.mxu0 0
      %2112 = vmatpush2.bf16.msra.mxu0 0
      %2113 = vmatprep.mubr.bf16.mxu0 0
      %2114 = vmatmul.mubr.bf16.gmra.mxu0 %v2076
      %v2115 = vpop.f32.mrf.mxu0
      %v2116 = vadd.f32 0.0, %v2115
      %v2117 = vpop.f32.mrf.mxu0
      %v2118 = vpop.f32.mrf.mxu0
      %v2119 = vpop.f32.mrf.mxu0
      %2120 = vdwg.mxu0
      %v2121 = vpack.c.bf16 %v2116, %v2116
      %v2124 = vunpack.c.l.b16 %v1828
      %v2125 = vunpack.c.l.b16 %v1829
      %v2126 = vpack.c.b16 %v2125, %v2124
      %v2129 = vsel %vm1840, %v2121, 0
      %2131 = vmatprep.subr.bf16.mxu0 0
      %2132 = vmatpush1.bf16.msra.mxu0 0
      %2133 = vmatprep.subr.bf16.mxu0 0
      %2134 = vmatpush1.bf16.msra.mxu0 0
      %2135 = vmatprep.subr.bf16.mxu0 0
      %2136 = vmatpush1.bf16.msra.mxu0 0
      %2137 = vmatprep.subr.bf16.mxu0 0
      %2138 = vmatpush1.bf16.msra.mxu0 0
      %2139 = vmatprep.subr.bf16.mxu0 0
      %2140 = vmatpush1.bf16.msra.mxu0 0
      %2141 = vmatprep.subr.bf16.mxu0 0
      %2142 = vmatpush1.bf16.msra.mxu0 0
      %2143 = vmatprep.subr.bf16.mxu0 0
      %2144 = vmatpush1.bf16.msra.mxu0 0
      %2145 = vmatprep.subr.bf16.mxu0 0
      %2146 = vmatpush1.bf16.msra.mxu0 %v2126
      %2147 = vmatprep.subr.bf16.mxu0 0
      %2148 = vmatpush2.bf16.msra.mxu0 0
      %2149 = vmatprep.subr.bf16.mxu0 0
      %2150 = vmatpush2.bf16.msra.mxu0 0
      %2151 = vmatprep.subr.bf16.mxu0 0
      %2152 = vmatpush2.bf16.msra.mxu0 0
      %2153 = vmatprep.subr.bf16.mxu0 0
      %2154 = vmatpush2.bf16.msra.mxu0 0
      %2155 = vmatprep.subr.bf16.mxu0 0
      %2156 = vmatpush2.bf16.msra.mxu0 0
      %2157 = vmatprep.subr.bf16.mxu0 0
      %2158 = vmatpush2.bf16.msra.mxu0 0
      %2159 = vmatprep.subr.bf16.mxu0 0
      %2160 = vmatpush2.bf16.msra.mxu0 0
      %2161 = vmatprep.subr.bf16.mxu0 0
      %2162 = vmatpush2.bf16.msra.mxu0 0
      %2163 = vmatprep.mubr.bf16.mxu0 0
      %2164 = vmatmul.mubr.bf16.gmra.mxu0 %v2129
      %v2165 = vpop.f32.mrf.mxu0
      %v2166 = vadd.f32 0.0, %v2165
      %v2167 = vpop.f32.mrf.mxu0
      %v2168 = vpop.f32.mrf.mxu0
      %v2169 = vpop.f32.mrf.mxu0
      %2170 = vdwg.mxu0
      %v2171 = vadd.f32 %v2008, %v2166
      %2172 = vrot.lane.b32.xlu0 %v1835, 96
      %v2173 = vpop.permute.xlu0 %2172
      %2174 = vrot.lane.b32.xlu0 %v1835, 32
      %v2175 = vpop.permute.xlu0 %2174
      %v2177 = vsel %vm1840, %v2173, 0
      %v2180 = vsel %vm1840, %v2175, 0
      %2182 = vmatprep.subr.bf16.mxu0 0
      %2183 = vmatpush1.bf16.xpose.msra.mxu0 0
      %2184 = vmatprep.subr.bf16.mxu0 0
      %2185 = vmatpush1.bf16.xpose.msra.mxu0 0
      %2186 = vmatprep.subr.bf16.mxu0 0
      %2187 = vmatpush1.bf16.xpose.msra.mxu0 0
      %2188 = vmatprep.subr.bf16.mxu0 0
      %2189 = vmatpush1.bf16.xpose.msra.mxu0 0
      %2190 = vmatprep.subr.bf16.mxu0 0
      %2191 = vmatpush1.bf16.xpose.msra.mxu0 0
      %2192 = vmatprep.subr.bf16.mxu0 0
      %2193 = vmatpush1.bf16.xpose.msra.mxu0 0
      %2194 = vmatprep.subr.bf16.mxu0 0
      %2195 = vmatpush1.bf16.xpose.msra.mxu0 0
      %2196 = vmatprep.subr.bf16.mxu0 0
      %2197 = vmatpush1.bf16.xpose.msra.mxu0 %v2180
      %2198 = vmatprep.subr.bf16.mxu0 0
      %2199 = vmatpush2.bf16.xpose.msra.mxu0 0
      %2200 = vmatprep.subr.bf16.mxu0 0
      %2201 = vmatpush2.bf16.xpose.msra.mxu0 0
      %2202 = vmatprep.subr.bf16.mxu0 0
      %2203 = vmatpush2.bf16.xpose.msra.mxu0 0
      %2204 = vmatprep.subr.bf16.mxu0 0
      %2205 = vmatpush2.bf16.xpose.msra.mxu0 0
      %2206 = vmatprep.subr.bf16.mxu0 0
      %2207 = vmatpush2.bf16.xpose.msra.mxu0 0
      %2208 = vmatprep.subr.bf16.mxu0 0
      %2209 = vmatpush2.bf16.xpose.msra.mxu0 0
      %2210 = vmatprep.subr.bf16.mxu0 0
      %2211 = vmatpush2.bf16.xpose.msra.mxu0 0
      %2212 = vmatprep.subr.bf16.mxu0 0
      %2213 = vmatpush2.bf16.xpose.msra.mxu0 0
      %2214 = vmatprep.mubr.bf16.mxu0 0
      %2215 = vmatmul.mubr.bf16.gmra.mxu0 %v2177
      %v2216 = vpop.f32.mrf.mxu0
      %v2217 = vadd.f32 0.0, %v2216
      %v2218 = vpop.f32.mrf.mxu0
      %v2219 = vpop.f32.mrf.mxu0
      %v2220 = vpop.f32.mrf.mxu0
      %2221 = vdwg.mxu0
      %v2222 = vmul.f32 %v2217, 0.25
      %v2223 = vsel %vm1888, %v2222, -inf
      %2224 = vmax.xlane.f32.xlu0 %v2223
      %v2225 = vpop.xlane.xlu0 %2224
      %v2226 = vsub.f32 %v2222, %v2225
      %v2227 = vmul.f32 %v2226, 1.442695
      %v2228 = vpow.pop %v2227
      %v2229 = vsel %vm1888, %v2228, 0.0
      %2230 = vadd.xlane.f32.xlu0 %v2229
      %v2231 = vpop.xlane.xlu0 %2230
      %v2232 = vrcp.pop %v2231
      %v2233 = vmul.f32 %v2228, %v2232
      %v2234 = vpack.c.bf16 %v2233, %v2233
      %2235 = vrot.lane.b32.xlu0 %v1836, 96
      %v2236 = vpop.permute.xlu0 %2235
      %v2238 = vsel %vm1901, %v2234, 0
      %v2241 = vand.u32 %v2236, %v1908
      %2243 = vmatprep.subr.bf16.mxu0 0
      %2244 = vmatpush1.bf16.msra.mxu0 0
      %2245 = vmatprep.subr.bf16.mxu0 0
      %2246 = vmatpush1.bf16.msra.mxu0 0
      %2247 = vmatprep.subr.bf16.mxu0 0
      %2248 = vmatpush1.bf16.msra.mxu0 0
      %2249 = vmatprep.subr.bf16.mxu0 0
      %2250 = vmatpush1.bf16.msra.mxu0 0
      %2251 = vmatprep.subr.bf16.mxu0 0
      %2252 = vmatpush1.bf16.msra.mxu0 0
      %2253 = vmatprep.subr.bf16.mxu0 0
      %2254 = vmatpush1.bf16.msra.mxu0 0
      %2255 = vmatprep.subr.bf16.mxu0 0
      %2256 = vmatpush1.bf16.msra.mxu0 0
      %2257 = vmatprep.subr.bf16.mxu0 0
      %2258 = vmatpush1.bf16.msra.mxu0 %v2241
      %2259 = vmatprep.subr.bf16.mxu0 0
      %2260 = vmatpush2.bf16.msra.mxu0 0
      %2261 = vmatprep.subr.bf16.mxu0 0
      %2262 = vmatpush2.bf16.msra.mxu0 0
      %2263 = vmatprep.subr.bf16.mxu0 0
      %2264 = vmatpush2.bf16.msra.mxu0 0
      %2265 = vmatprep.subr.bf16.mxu0 0
      %2266 = vmatpush2.bf16.msra.mxu0 0
      %2267 = vmatprep.subr.bf16.mxu0 0
      %2268 = vmatpush2.bf16.msra.mxu0 0
      %2269 = vmatprep.subr.bf16.mxu0 0
      %2270 = vmatpush2.bf16.msra.mxu0 0
      %2271 = vmatprep.subr.bf16.mxu0 0
      %2272 = vmatpush2.bf16.msra.mxu0 0
      %2273 = vmatprep.subr.bf16.mxu0 0
      %2274 = vmatpush2.bf16.msra.mxu0 0
      %2275 = vmatprep.mubr.bf16.mxu0 0
      %2276 = vmatmul.mubr.bf16.gmra.mxu0 %v2238
      %v2277 = vpop.f32.mrf.mxu0
      %v2278 = vadd.f32 0.0, %v2277
      %v2279 = vpop.f32.mrf.mxu0
      %v2280 = vpop.f32.mrf.mxu0
      %v2281 = vpop.f32.mrf.mxu0
      %2282 = vdwg.mxu0
      %v2283 = vpack.c.bf16 %v2278, %v2278
      %v2286 = vunpack.c.l.b16 %v1830
      %v2287 = vunpack.c.l.b16 %v1831
      %v2288 = vpack.c.b16 %v2287, %v2286
      %v2291 = vsel %vm1840, %v2283, 0
      %2293 = vmatprep.subr.bf16.mxu0 0
      %2294 = vmatpush1.bf16.msra.mxu0 0
      %2295 = vmatprep.subr.bf16.mxu0 0
      %2296 = vmatpush1.bf16.msra.mxu0 0
      %2297 = vmatprep.subr.bf16.mxu0 0
      %2298 = vmatpush1.bf16.msra.mxu0 0
      %2299 = vmatprep.subr.bf16.mxu0 0
      %2300 = vmatpush1.bf16.msra.mxu0 0
      %2301 = vmatprep.subr.bf16.mxu0 0
      %2302 = vmatpush1.bf16.msra.mxu0 0
      %2303 = vmatprep.subr.bf16.mxu0 0
      %2304 = vmatpush1.bf16.msra.mxu0 0
      %2305 = vmatprep.subr.bf16.mxu0 0
      %2306 = vmatpush1.bf16.msra.mxu0 0
      %2307 = vmatprep.subr.bf16.mxu0 0
      %2308 = vmatpush1.bf16.msra.mxu0 %v2288
      %2309 = vmatprep.subr.bf16.mxu0 0
      %2310 = vmatpush2.bf16.msra.mxu0 0
      %2311 = vmatprep.subr.bf16.mxu0 0
      %2312 = vmatpush2.bf16.msra.mxu0 0
      %2313 = vmatprep.subr.bf16.mxu0 0
      %2314 = vmatpush2.bf16.msra.mxu0 0
      %2315 = vmatprep.subr.bf16.mxu0 0
      %2316 = vmatpush2.bf16.msra.mxu0 0
      %2317 = vmatprep.subr.bf16.mxu0 0
      %2318 = vmatpush2.bf16.msra.mxu0 0
      %2319 = vmatprep.subr.bf16.mxu0 0
      %2320 = vmatpush2.bf16.msra.mxu0 0
      %2321 = vmatprep.subr.bf16.mxu0 0
      %2322 = vmatpush2.bf16.msra.mxu0 0
      %2323 = vmatprep.subr.bf16.mxu0 0
      %2324 = vmatpush2.bf16.msra.mxu0 0
      %2325 = vmatprep.mubr.bf16.mxu0 0
      %2326 = vmatmul.mubr.bf16.gmra.mxu0 %v2291
      %v2327 = vpop.f32.mrf.mxu0
      %v2328 = vadd.f32 0.0, %v2327
      %v2329 = vpop.f32.mrf.mxu0
      %v2330 = vpop.f32.mrf.mxu0
      %v2331 = vpop.f32.mrf.mxu0
      %2332 = vdwg.mxu0
      %v2333 = vadd.f32 %v2171, %v2328
      %2334 = vrot.lane.b32.xlu0 %v1835, 80
      %v2335 = vpop.permute.xlu0 %2334
      %2336 = vrot.lane.b32.xlu0 %v1835, 16
      %v2337 = vpop.permute.xlu0 %2336
      %v2339 = vsel %vm1840, %v2335, 0
      %v2342 = vsel %vm1840, %v2337, 0
      %2344 = vmatprep.subr.bf16.mxu0 0
      %2345 = vmatpush1.bf16.xpose.msra.mxu0 0
      %2346 = vmatprep.subr.bf16.mxu0 0
      %2347 = vmatpush1.bf16.xpose.msra.mxu0 0
      %2348 = vmatprep.subr.bf16.mxu0 0
      %2349 = vmatpush1.bf16.xpose.msra.mxu0 0
      %2350 = vmatprep.subr.bf16.mxu0 0
      %2351 = vmatpush1.bf16.xpose.msra.mxu0 0
      %2352 = vmatprep.subr.bf16.mxu0 0
      %2353 = vmatpush1.bf16.xpose.msra.mxu0 0
      %2354 = vmatprep.subr.bf16.mxu0 0
      %2355 = vmatpush1.bf16.xpose.msra.mxu0 0
      %2356 = vmatprep.subr.bf16.mxu0 0
      %2357 = vmatpush1.bf16.xpose.msra.mxu0 0
      %2358 = vmatprep.subr.bf16.mxu0 0
      %2359 = vmatpush1.bf16.xpose.msra.mxu0 %v2342
      %2360 = vmatprep.subr.bf16.mxu0 0
      %2361 = vmatpush2.bf16.xpose.msra.mxu0 0
      %2362 = vmatprep.subr.bf16.mxu0 0
      %2363 = vmatpush2.bf16.xpose.msra.mxu0 0
      %2364 = vmatprep.subr.bf16.mxu0 0
      %2365 = vmatpush2.bf16.xpose.msra.mxu0 0
      %2366 = vmatprep.subr.bf16.mxu0 0
      %2367 = vmatpush2.bf16.xpose.msra.mxu0 0
      %2368 = vmatprep.subr.bf16.mxu0 0
      %2369 = vmatpush2.bf16.xpose.msra.mxu0 0
      %2370 = vmatprep.subr.bf16.mxu0 0
      %2371 = vmatpush2.bf16.xpose.msra.mxu0 0
      %2372 = vmatprep.subr.bf16.mxu0 0
      %2373 = vmatpush2.bf16.xpose.msra.mxu0 0
      %2374 = vmatprep.subr.bf16.mxu0 0
      %2375 = vmatpush2.bf16.xpose.msra.mxu0 0
      %2376 = vmatprep.mubr.bf16.mxu0 0
      %2377 = vmatmul.mubr.bf16.gmra.mxu0 %v2339
      %v2378 = vpop.f32.mrf.mxu0
      %v2379 = vadd.f32 0.0, %v2378
      %v2380 = vpop.f32.mrf.mxu0
      %v2381 = vpop.f32.mrf.mxu0
      %v2382 = vpop.f32.mrf.mxu0
      %2383 = vdwg.mxu0
      %v2384 = vmul.f32 %v2379, 0.25
      %v2385 = vsel %vm1888, %v2384, -inf
      %2386 = vmax.xlane.f32.xlu0 %v2385
      %v2387 = vpop.xlane.xlu0 %2386
      %v2388 = vsub.f32 %v2384, %v2387
      %v2389 = vmul.f32 %v2388, 1.442695
      %v2390 = vpow.pop %v2389
      %v2391 = vsel %vm1888, %v2390, 0.0
      %2392 = vadd.xlane.f32.xlu0 %v2391
      %v2393 = vpop.xlane.xlu0 %2392
      %v2394 = vrcp.pop %v2393
      %v2395 = vmul.f32 %v2390, %v2394
      %v2396 = vpack.c.bf16 %v2395, %v2395
      %2397 = vrot.lane.b32.xlu0 %v1836, 80
      %v2398 = vpop.permute.xlu0 %2397
      %v2400 = vsel %vm1901, %v2396, 0
      %v2403 = vand.u32 %v2398, %v1908
      %2405 = vmatprep.subr.bf16.mxu0 0
      %2406 = vmatpush1.bf16.msra.mxu0 0
      %2407 = vmatprep.subr.bf16.mxu0 0
      %2408 = vmatpush1.bf16.msra.mxu0 0
      %2409 = vmatprep.subr.bf16.mxu0 0
      %2410 = vmatpush1.bf16.msra.mxu0 0
      %2411 = vmatprep.subr.bf16.mxu0 0
      %2412 = vmatpush1.bf16.msra.mxu0 0
      %2413 = vmatprep.subr.bf16.mxu0 0
      %2414 = vmatpush1.bf16.msra.mxu0 0
      %2415 = vmatprep.subr.bf16.mxu0 0
      %2416 = vmatpush1.bf16.msra.mxu0 0
      %2417 = vmatprep.subr.bf16.mxu0 0
      %2418 = vmatpush1.bf16.msra.mxu0 0
      %2419 = vmatprep.subr.bf16.mxu0 0
      %2420 = vmatpush1.bf16.msra.mxu0 %v2403
      %2421 = vmatprep.subr.bf16.mxu0 0
      %2422 = vmatpush2.bf16.msra.mxu0 0
      %2423 = vmatprep.subr.bf16.mxu0 0
      %2424 = vmatpush2.bf16.msra.mxu0 0
      %2425 = vmatprep.subr.bf16.mxu0 0
      %2426 = vmatpush2.bf16.msra.mxu0 0
      %2427 = vmatprep.subr.bf16.mxu0 0
      %2428 = vmatpush2.bf16.msra.mxu0 0
      %2429 = vmatprep.subr.bf16.mxu0 0
      %2430 = vmatpush2.bf16.msra.mxu0 0
      %2431 = vmatprep.subr.bf16.mxu0 0
      %2432 = vmatpush2.bf16.msra.mxu0 0
      %2433 = vmatprep.subr.bf16.mxu0 0
      %2434 = vmatpush2.bf16.msra.mxu0 0
      %2435 = vmatprep.subr.bf16.mxu0 0
      %2436 = vmatpush2.bf16.msra.mxu0 0
      %2437 = vmatprep.mubr.bf16.mxu0 0
      %2438 = vmatmul.mubr.bf16.gmra.mxu0 %v2400
      %v2439 = vpop.f32.mrf.mxu0
      %v2440 = vadd.f32 0.0, %v2439
      %v2441 = vpop.f32.mrf.mxu0
      %v2442 = vpop.f32.mrf.mxu0
      %v2443 = vpop.f32.mrf.mxu0
      %2444 = vdwg.mxu0
      %v2445 = vpack.c.bf16 %v2440, %v2440
      %v2448 = vunpack.c.l.b16 %v1832
      %v2449 = vunpack.c.l.b16 %v1833
      %v2450 = vpack.c.b16 %v2449, %v2448
      %v2453 = vsel %vm1840, %v2445, 0
      %2455 = vmatprep.subr.bf16.mxu0 0
      %2456 = vmatpush1.bf16.msra.mxu0 0
      %2457 = vmatprep.subr.bf16.mxu0 0
      %2458 = vmatpush1.bf16.msra.mxu0 0
      %2459 = vmatprep.subr.bf16.mxu0 0
      %2460 = vmatpush1.bf16.msra.mxu0 0
      %2461 = vmatprep.subr.bf16.mxu0 0
      %2462 = vmatpush1.bf16.msra.mxu0 0
      %2463 = vmatprep.subr.bf16.mxu0 0
      %2464 = vmatpush1.bf16.msra.mxu0 0
      %2465 = vmatprep.subr.bf16.mxu0 0
      %2466 = vmatpush1.bf16.msra.mxu0 0
      %2467 = vmatprep.subr.bf16.mxu0 0
      %2468 = vmatpush1.bf16.msra.mxu0 0
      %2469 = vmatprep.subr.bf16.mxu0 0
      %2470 = vmatpush1.bf16.msra.mxu0 %v2450
      %2471 = vmatprep.subr.bf16.mxu0 0
      %2472 = vmatpush2.bf16.msra.mxu0 0
      %2473 = vmatprep.subr.bf16.mxu0 0
      %2474 = vmatpush2.bf16.msra.mxu0 0
      %2475 = vmatprep.subr.bf16.mxu0 0
      %2476 = vmatpush2.bf16.msra.mxu0 0
      %2477 = vmatprep.subr.bf16.mxu0 0
      %2478 = vmatpush2.bf16.msra.mxu0 0
      %2479 = vmatprep.subr.bf16.mxu0 0
      %2480 = vmatpush2.bf16.msra.mxu0 0
      %2481 = vmatprep.subr.bf16.mxu0 0
      %2482 = vmatpush2.bf16.msra.mxu0 0
      %2483 = vmatprep.subr.bf16.mxu0 0
      %2484 = vmatpush2.bf16.msra.mxu0 0
      %2485 = vmatprep.subr.bf16.mxu0 0
      %2486 = vmatpush2.bf16.msra.mxu0 0
      %2487 = vmatprep.mubr.bf16.mxu0 0
      %2488 = vmatmul.mubr.bf16.gmra.mxu0 %v2453
      %v2489 = vpop.f32.mrf.mxu0
      %v2490 = vadd.f32 0.0, %v2489
      %v2491 = vpop.f32.mrf.mxu0
      %v2492 = vpop.f32.mrf.mxu0
      %v2493 = vpop.f32.mrf.mxu0
      %2494 = vdwg.mxu0
      %v2495 = vadd.f32 %v2333, %v2490
      %v2496 = vadd.f32 %v1688, %v2495
      %v2497 = vld [vmem:[%s1119] sm:$0x1]
      %v2498 = vld [vmem:[%s1122] sm:$0x1]
      %v2499 = vsel %vm1691, %v2496, 0.0
      %2500 = vadd.xlane.f32.xlu0 %v2499
      %v2501 = vpop.xlane.xlu0 %2500
      %v2502 = vmul.f32 %v2501, %v1695
      %v2503 = vsub.f32 %v2496, %v2502
      %v2504 = vmul.f32 %v2503, %v2503
      %v2505 = vsel %vm1691, %v2504, 0.0
      %2506 = vadd.xlane.f32.xlu0 %v2505
      %v2507 = vpop.xlane.xlu0 %2506
      %v2508 = vmul.f32 %v2507, %v1695
      %v2509 = vadd.f32 %v2508, 1e-06
      %v2510 = vrsqrt.pop %v2509
      %v2511 = vmul.f32 %v2503, %v2510
      %v2513 = vlaneseq
      %v2514 = vshrl.u32 %v2513, 7
      %v2515 = vsub.s32 0, %v2514
      %v2516 = vrot.slane %v2497, %v2515
      %v2518 = vmul.f32 %v2511, %v2516
      %v2520 = vlaneseq
      %v2521 = vshrl.u32 %v2520, 7
      %v2522 = vsub.s32 0, %v2521
      %v2523 = vrot.slane %v2498, %v2522
      %v2525 = vadd.f32 %v2518, %v2523
      %v2526 = vld [vmem:[%s1127] sm:$0xf]
      %v2527 = vld [vmem:[%s1127 + $0x4] sm:$0xf]
      %v2528 = vld [vmem:[%s1127 + $0x8] sm:$0xf]
      %v2529 = vld [vmem:[%s1127 + $0xc] sm:$0xf]
      %v2530 = vld [vmem:[%s1127 + $0x10] sm:$0xf]
      %v2531 = vld [vmem:[%s1127 + $0x14] sm:$0xf]
      %v2532 = vld [vmem:[%s1127 + $0x18] sm:$0xf]
      %v2533 = vld [vmem:[%s1127 + $0x1c] sm:$0xf]
      %v2534 = vpack.c.bf16 %v2525, %v2525
      %v2535 = vld [vmem:[%s1130] sm:$0x1]
      %v2537 = vlaneseq
      %v2538 = vshrl.u32 %v2537, 7
      %v2539 = vsub.s32 0, %v2538
      %v2540 = vrot.slane %v2535, %v2539
      %v2550 = vunpack.c.l.b16 %v2526
      %v2551 = vunpack.c.l.b16 %v2527
      %v2552 = vunpack.c.l.b16 %v2528
      %v2553 = vunpack.c.l.b16 %v2529
      %v2554 = vunpack.c.l.b16 %v2530
      %v2555 = vunpack.c.l.b16 %v2531
      %v2556 = vunpack.c.l.b16 %v2532
      %v2557 = vunpack.c.l.b16 %v2533
      %v2558 = vpack.c.b16 %v2551, %v2550
      %v2559 = vpack.c.b16 %v2553, %v2552
      %v2560 = vpack.c.b16 %v2555, %v2554
      %v2561 = vpack.c.b16 %v2557, %v2556
      %v2567 = vsel %vm1781, %v2534, 0
      %2569 = vmatprep.subr.bf16.mxu0 0
      %2570 = vmatpush1.bf16.msra.mxu0 0
      %2571 = vmatprep.subr.bf16.mxu0 0
      %2572 = vmatpush1.bf16.msra.mxu0 0
      %2573 = vmatprep.subr.bf16.mxu0 0
      %2574 = vmatpush1.bf16.msra.mxu0 0
      %2575 = vmatprep.subr.bf16.mxu0 0
      %2576 = vmatpush1.bf16.msra.mxu0 0
      %2577 = vmatprep.subr.bf16.mxu0 0
      %2578 = vmatpush1.bf16.msra.mxu0 %v2561
      %2579 = vmatprep.subr.bf16.mxu0 0
      %2580 = vmatpush1.bf16.msra.mxu0 %v2560
      %2581 = vmatprep.subr.bf16.mxu0 0
      %2582 = vmatpush1.bf16.msra.mxu0 %v2559
      %2583 = vmatprep.subr.bf16.mxu0 0
      %2584 = vmatpush1.bf16.msra.mxu0 %v2558
      %2585 = vmatprep.subr.bf16.mxu0 0
      %2586 = vmatpush2.bf16.msra.mxu0 0
      %2587 = vmatprep.subr.bf16.mxu0 0
      %2588 = vmatpush2.bf16.msra.mxu0 0
      %2589 = vmatprep.subr.bf16.mxu0 0
      %2590 = vmatpush2.bf16.msra.mxu0 0
      %2591 = vmatprep.subr.bf16.mxu0 0
      %2592 = vmatpush2.bf16.msra.mxu0 0
      %2593 = vmatprep.subr.bf16.mxu0 0
      %2594 = vmatpush2.bf16.msra.mxu0 0
      %2595 = vmatprep.subr.bf16.mxu0 0
      %2596 = vmatpush2.bf16.msra.mxu0 0
      %2597 = vmatprep.subr.bf16.mxu0 0
      %2598 = vmatpush2.bf16.msra.mxu0 0
      %2599 = vmatprep.subr.bf16.mxu0 0
      %2600 = vmatpush2.bf16.msra.mxu0 0
      %2601 = vmatprep.mubr.bf16.mxu0 0
      %2602 = vmatmul.mubr.bf16.gmra.mxu0 %v2567
      %v2603 = vpop.f32.mrf.mxu0
      %v2604 = vadd.f32 %v2540, %v2603
      %v2605 = vpop.f32.mrf.mxu0
      %v2606 = vpop.f32.mrf.mxu0
      %v2607 = vpop.f32.mrf.mxu0
      %2608 = vdwg.mxu0
      %v2609 = vmul.f32 %v2604, %v2604
      %v2610 = vmul.f32 %v2604, %v2609
      %v2611 = vmul.f32 %v2610, 0.044715
      %v2612 = vadd.f32 %v2604, %v2611
      %v2613 = vmul.f32 %v2612, 0.7978846
      %v2614 = vtanh.pop %v2613
      %v2615 = vadd.f32 %v2614, 1.0
      %v2616 = vmul.f32 %v2615, 0.5
      %v2617 = vmul.f32 %v2604, %v2616
      %v2618 = vld [vmem:[%s1135] sm:$0xf]
      %v2619 = vld [vmem:[%s1135 + $0x4] sm:$0xf]
      %v2620 = vld [vmem:[%s1135 + $0x8] sm:$0xf]
      %v2621 = vld [vmem:[%s1135 + $0xc] sm:$0xf]
      %v2622 = vld [vmem:[%s1135 + $0x10] sm:$0xf]
      %v2623 = vld [vmem:[%s1135 + $0x14] sm:$0xf]
      %v2624 = vld [vmem:[%s1135 + $0x18] sm:$0xf]
      %v2625 = vld [vmem:[%s1135 + $0x1c] sm:$0xf]
      %v2626 = vld [vmem:[%s1135 + $0x20] sm:$0xf]
      %v2627 = vld [vmem:[%s1135 + $0x24] sm:$0xf]
      %v2628 = vld [vmem:[%s1135 + $0x28] sm:$0xf]
      %v2629 = vld [vmem:[%s1135 + $0x2c] sm:$0xf]
      %v2630 = vld [vmem:[%s1135 + $0x30] sm:$0xf]
      %v2631 = vld [vmem:[%s1135 + $0x34] sm:$0xf]
      %v2632 = vld [vmem:[%s1135 + $0x38] sm:$0xf]
      %v2633 = vld [vmem:[%s1135 + $0x3c] sm:$0xf]
      %v2634 = vpack.c.bf16 %v2617, %v2617
      %v2651 = vunpack.c.l.b16 %v2618
      %v2652 = vunpack.c.l.b16 %v2619
      %v2653 = vunpack.c.l.b16 %v2620
      %v2654 = vunpack.c.l.b16 %v2621
      %v2655 = vunpack.c.l.b16 %v2622
      %v2656 = vunpack.c.l.b16 %v2623
      %v2657 = vunpack.c.l.b16 %v2624
      %v2658 = vunpack.c.l.b16 %v2625
      %v2659 = vunpack.c.l.b16 %v2626
      %v2660 = vunpack.c.l.b16 %v2627
      %v2661 = vunpack.c.l.b16 %v2628
      %v2662 = vunpack.c.l.b16 %v2629
      %v2663 = vunpack.c.l.b16 %v2630
      %v2664 = vunpack.c.l.b16 %v2631
      %v2665 = vunpack.c.l.b16 %v2632
      %v2666 = vunpack.c.l.b16 %v2633
      %v2667 = vpack.c.b16 %v2652, %v2651
      %v2668 = vpack.c.b16 %v2654, %v2653
      %v2669 = vpack.c.b16 %v2656, %v2655
      %v2670 = vpack.c.b16 %v2658, %v2657
      %v2671 = vpack.c.b16 %v2660, %v2659
      %v2672 = vpack.c.b16 %v2662, %v2661
      %v2673 = vpack.c.b16 %v2664, %v2663
      %v2674 = vpack.c.b16 %v2666, %v2665
      %2683 = vmatprep.subr.bf16.mxu0 0
      %2684 = vmatpush1.bf16.msra.mxu0 %v2674
      %2685 = vmatprep.subr.bf16.mxu0 0
      %2686 = vmatpush1.bf16.msra.mxu0 %v2673
      %2687 = vmatprep.subr.bf16.mxu0 0
      %2688 = vmatpush1.bf16.msra.mxu0 %v2672
      %2689 = vmatprep.subr.bf16.mxu0 0
      %2690 = vmatpush1.bf16.msra.mxu0 %v2671
      %2691 = vmatprep.subr.bf16.mxu0 0
      %2692 = vmatpush1.bf16.msra.mxu0 %v2670
      %2693 = vmatprep.subr.bf16.mxu0 0
      %2694 = vmatpush1.bf16.msra.mxu0 %v2669
      %2695 = vmatprep.subr.bf16.mxu0 0
      %2696 = vmatpush1.bf16.msra.mxu0 %v2668
      %2697 = vmatprep.subr.bf16.mxu0 0
      %2698 = vmatpush1.bf16.msra.mxu0 %v2667
      %2699 = vmatprep.subr.bf16.mxu0 0
      %2700 = vmatpush2.bf16.msra.mxu0 0
      %2701 = vmatprep.subr.bf16.mxu0 0
      %2702 = vmatpush2.bf16.msra.mxu0 0
      %2703 = vmatprep.subr.bf16.mxu0 0
      %2704 = vmatpush2.bf16.msra.mxu0 0
      %2705 = vmatprep.subr.bf16.mxu0 0
      %2706 = vmatpush2.bf16.msra.mxu0 0
      %2707 = vmatprep.subr.bf16.mxu0 0
      %2708 = vmatpush2.bf16.msra.mxu0 0
      %2709 = vmatprep.subr.bf16.mxu0 0
      %2710 = vmatpush2.bf16.msra.mxu0 0
      %2711 = vmatprep.subr.bf16.mxu0 0
      %2712 = vmatpush2.bf16.msra.mxu0 0
      %2713 = vmatprep.subr.bf16.mxu0 0
      %2714 = vmatpush2.bf16.msra.mxu0 0
      %2715 = vmatprep.mubr.bf16.mxu0 0
      %2716 = vmatmul.mubr.bf16.gmra.mxu0 %v2634
      %v2717 = vpop.f32.mrf.mxu0
      %v2718 = vadd.f32 0.0, %v2717
      %v2719 = vpop.f32.mrf.mxu0
      %v2720 = vpop.f32.mrf.mxu0
      %v2721 = vpop.f32.mrf.mxu0
      %2722 = vdwg.mxu0
      %v2723 = vadd.f32 %v2496, %v2718
      %v2724 = vld [vmem:[%s1138] sm:$0x1]
      %v2726 = vlaneseq
      %v2727 = vshrl.u32 %v2726, 7
      %v2728 = vsub.s32 0, %v2727
      %v2729 = vrot.slane %v2724, %v2728
      %v2731 = vadd.f32 %v2723, %v2729
      %2732 = vst.msk [vmem:[#allocation2] sm:$0x1f] %vm1691, %v2731
      %p2733 = scmp.eq.s32.totalorder %s78, 1
      // Predicated region
      $region141: #{fsra_forward.1} parent=135 // pred_check
        %p2734 = pneg %p2733
      $region142: #{fsra_forward.1} parent=135 // pred_check_branch
        %2736 = sbr.rel (%p2734) target = $region144
      $region143: #{fsra_forward.1} parent=135 // pred_region
        %v2737 = vld [vmem:[%s35] sm:$0x1]
        %v2738 = vld [vmem:[%s37] sm:$0x1]
        %v2739 = vsel %vm1691, %v2731, 0.0
        %2740 = vadd.xlane.f32.xlu0 %v2739
        %v2741 = vpop.xlane.xlu0 %2740
        %v2742 = vmul.f32 %v2741, %v1695
        %v2743 = vsub.f32 %v2731, %v2742
        %v2744 = vmul.f32 %v2743, %v2743
        %v2745 = vsel %vm1691, %v2744, 0.0
        %2746 = vadd.xlane.f32.xlu0 %v2745
        %v2747 = vpop.xlane.xlu0 %2746
        %v2748 = vmul.f32 %v2747, %v1695
        %v2749 = vadd.f32 %v2748, 1e-06
        %v2750 = vrsqrt.pop %v2749
        %v2751 = vmul.f32 %v2743, %v2750
        %v2753 = vlaneseq
        %v2754 = vshrl.u32 %v2753, 7
        %v2755 = vsub.s32 0, %v2754
        %v2756 = vrot.slane %v2737, %v2755
        %v2758 = vmul.f32 %v2751, %v2756
        %v2760 = vlaneseq
        %v2761 = vshrl.u32 %v2760, 7
        %v2762 = vsub.s32 0, %v2761
        %v2763 = vrot.slane %v2738, %v2762
        %v2765 = vadd.f32 %v2758, %v2763
        %vm2766 = vcmask 516096
        %2767 = vst.msk [vmem:[#allocation3] sm:$0x1] %vm2766, %v2765
        %v2768 = vadd.f32 %v2765, 0.0
        %vm2769 = vcmask 517121
        %2770 = vst.msk [vmem:[#allocation3] sm:$0x2] %vm2769, %v2768
        %vm2771 = vcmask 518146
        %2772 = vst.msk [vmem:[#allocation3] sm:$0x4] %vm2771, %v2768
        %vm2773 = vcmask 519171
        %2774 = vst.msk [vmem:[#allocation3] sm:$0x8] %vm2773, %v2768
        %vm2775 = vcmask 520196
        %2776 = vst.msk [vmem:[#allocation3] sm:$0x10] %vm2775, %v2768
        %v2777 = vld [vmem:[%s41] sm:$0x1]
        %v2778 = vld [vmem:[#allocation3] sm:$0x1]
        %v2779 = vld [vmem:[%s39] sm:$0xf]
        %v2780 = vld [vmem:[%s39 + $0x4] sm:$0xf]
        %v2781 = vld [vmem:[%s39 + $0x8] sm:$0xf]
        %v2782 = vld [vmem:[%s39 + $0xc] sm:$0xf]
        %v2783 = vld [vmem:[%s39 + $0x10] sm:$0xf]
        %v2784 = vld [vmem:[%s39 + $0x14] sm:$0xf]
        %v2785 = vld [vmem:[%s39 + $0x18] sm:$0xf]
        %v2786 = vld [vmem:[%s39 + $0x1c] sm:$0xf]
        %v2787 = vpack.c.bf16 %v2778, %v2778
        %v2796 = vunpack.c.l.b16 %v2779
        %v2797 = vunpack.c.l.b16 %v2780
        %v2798 = vunpack.c.l.b16 %v2781
        %v2799 = vunpack.c.l.b16 %v2782
        %v2800 = vunpack.c.l.b16 %v2783
        %v2801 = vunpack.c.l.b16 %v2784
        %v2802 = vunpack.c.l.b16 %v2785
        %v2803 = vunpack.c.l.b16 %v2786
        %v2804 = vpack.c.b16 %v2797, %v2796
        %v2805 = vpack.c.b16 %v2799, %v2798
        %v2806 = vpack.c.b16 %v2801, %v2800
        %v2807 = vpack.c.b16 %v2803, %v2802
        %v2813 = vsel %vm1781, %v2787, 0
        %2815 = vmatprep.subr.bf16.mxu0 0
        %2816 = vmatpush1.bf16.msra.mxu0 0
        %2817 = vmatprep.subr.bf16.mxu0 0
        %2818 = vmatpush1.bf16.msra.mxu0 0
        %2819 = vmatprep.subr.bf16.mxu0 0
        %2820 = vmatpush1.bf16.msra.mxu0 0
        %2821 = vmatprep.subr.bf16.mxu0 0
        %2822 = vmatpush1.bf16.msra.mxu0 0
        %2823 = vmatprep.subr.bf16.mxu0 0
        %2824 = vmatpush1.bf16.msra.mxu0 %v2807
        %2825 = vmatprep.subr.bf16.mxu0 0
        %2826 = vmatpush1.bf16.msra.mxu0 %v2806
        %2827 = vmatprep.subr.bf16.mxu0 0
        %2828 = vmatpush1.bf16.msra.mxu0 %v2805
        %2829 = vmatprep.subr.bf16.mxu0 0
        %2830 = vmatpush1.bf16.msra.mxu0 %v2804
        %2831 = vmatprep.subr.bf16.mxu0 0
        %2832 = vmatpush2.bf16.msra.mxu0 0
        %2833 = vmatprep.subr.bf16.mxu0 0
        %2834 = vmatpush2.bf16.msra.mxu0 0
        %2835 = vmatprep.subr.bf16.mxu0 0
        %2836 = vmatpush2.bf16.msra.mxu0 0
        %2837 = vmatprep.subr.bf16.mxu0 0
        %2838 = vmatpush2.bf16.msra.mxu0 0
        %2839 = vmatprep.subr.bf16.mxu0 0
        %2840 = vmatpush2.bf16.msra.mxu0 0
        %2841 = vmatprep.subr.bf16.mxu0 0
        %2842 = vmatpush2.bf16.msra.mxu0 0
        %2843 = vmatprep.subr.bf16.mxu0 0
        %2844 = vmatpush2.bf16.msra.mxu0 0
        %2845 = vmatprep.subr.bf16.mxu0 0
        %2846 = vmatpush2.bf16.msra.mxu0 0
        %2847 = vmatprep.mubr.bf16.mxu0 0
        %2848 = vmatmul.mubr.bf16.gmra.mxu0 %v2813
        %v2849 = vpop.f32.mrf.mxu0
        %v2850 = vadd.f32 0.0, %v2849
        %v2851 = vpop.f32.mrf.mxu0
        %v2852 = vpop.f32.mrf.mxu0
        %v2853 = vpop.f32.mrf.mxu0
        %2854 = vdwg.mxu0
        %v2855 = vadd.f32 %v2777, %v2850
        %v2856 = vld [vmem:[#allocation3 + $0x1] sm:$0x1]
        %s2857 = scalar_lea.vmem %s39, 32
        %v2858 = vld [vmem:[%s2857] sm:$0xf]
        %v2859 = vld [vmem:[%s2857 + $0x4] sm:$0xf]
        %v2860 = vld [vmem:[%s2857 + $0x8] sm:$0xf]
        %v2861 = vld [vmem:[%s2857 + $0xc] sm:$0xf]
        %v2862 = vld [vmem:[%s2857 + $0x10] sm:$0xf]
        %v2863 = vld [vmem:[%s2857 + $0x14] sm:$0xf]
        %v2864 = vld [vmem:[%s2857 + $0x18] sm:$0xf]
        %v2865 = vld [vmem:[%s2857 + $0x1c] sm:$0xf]
        %v2866 = vpack.c.bf16 %v2856, %v2856
        %v2875 = vunpack.c.l.b16 %v2858
        %v2876 = vunpack.c.l.b16 %v2859
        %v2877 = vunpack.c.l.b16 %v2860
        %v2878 = vunpack.c.l.b16 %v2861
        %v2879 = vunpack.c.l.b16 %v2862
        %v2880 = vunpack.c.l.b16 %v2863
        %v2881 = vunpack.c.l.b16 %v2864
        %v2882 = vunpack.c.l.b16 %v2865
        %v2883 = vpack.c.b16 %v2876, %v2875
        %v2884 = vpack.c.b16 %v2878, %v2877
        %v2885 = vpack.c.b16 %v2880, %v2879
        %v2886 = vpack.c.b16 %v2882, %v2881
        %v2892 = vsel %vm1781, %v2866, 0
        %2894 = vmatprep.subr.bf16.mxu0 0
        %2895 = vmatpush1.bf16.msra.mxu0 0
        %2896 = vmatprep.subr.bf16.mxu0 0
        %2897 = vmatpush1.bf16.msra.mxu0 0
        %2898 = vmatprep.subr.bf16.mxu0 0
        %2899 = vmatpush1.bf16.msra.mxu0 0
        %2900 = vmatprep.subr.bf16.mxu0 0
        %2901 = vmatpush1.bf16.msra.mxu0 0
        %2902 = vmatprep.subr.bf16.mxu0 0
        %2903 = vmatpush1.bf16.msra.mxu0 %v2886
        %2904 = vmatprep.subr.bf16.mxu0 0
        %2905 = vmatpush1.bf16.msra.mxu0 %v2885
        %2906 = vmatprep.subr.bf16.mxu0 0
        %2907 = vmatpush1.bf16.msra.mxu0 %v2884
        %2908 = vmatprep.subr.bf16.mxu0 0
        %2909 = vmatpush1.bf16.msra.mxu0 %v2883
        %2910 = vmatprep.subr.bf16.mxu0 0
        %2911 = vmatpush2.bf16.msra.mxu0 0
        %2912 = vmatprep.subr.bf16.mxu0 0
        %2913 = vmatpush2.bf16.msra.mxu0 0
        %2914 = vmatprep.subr.bf16.mxu0 0
        %2915 = vmatpush2.bf16.msra.mxu0 0
        %2916 = vmatprep.subr.bf16.mxu0 0
        %2917 = vmatpush2.bf16.msra.mxu0 0
        %2918 = vmatprep.subr.bf16.mxu0 0
        %2919 = vmatpush2.bf16.msra.mxu0 0
        %2920 = vmatprep.subr.bf16.mxu0 0
        %2921 = vmatpush2.bf16.msra.mxu0 0
        %2922 = vmatprep.subr.bf16.mxu0 0
        %2923 = vmatpush2.bf16.msra.mxu0 0
        %2924 = vmatprep.subr.bf16.mxu0 0
        %2925 = vmatpush2.bf16.msra.mxu0 0
        %2926 = vmatprep.mubr.bf16.mxu0 0
        %2927 = vmatmul.mubr.bf16.gmra.mxu0 %v2892
        %v2928 = vpop.f32.mrf.mxu0
        %v2929 = vadd.f32 0.0, %v2928
        %v2930 = vpop.f32.mrf.mxu0
        %v2931 = vpop.f32.mrf.mxu0
        %v2932 = vpop.f32.mrf.mxu0
        %2933 = vdwg.mxu0
        %v2934 = vadd.f32 %v2855, %v2929
        %v2935 = vld [vmem:[#allocation3 + $0x2] sm:$0x1]
        %s2936 = scalar_lea.vmem %s39, 64
        %v2937 = vld [vmem:[%s2936] sm:$0xf]
        %v2938 = vld [vmem:[%s2936 + $0x4] sm:$0xf]
        %v2939 = vld [vmem:[%s2936 + $0x8] sm:$0xf]
        %v2940 = vld [vmem:[%s2936 + $0xc] sm:$0xf]
        %v2941 = vld [vmem:[%s2936 + $0x10] sm:$0xf]
        %v2942 = vld [vmem:[%s2936 + $0x14] sm:$0xf]
        %v2943 = vld [vmem:[%s2936 + $0x18] sm:$0xf]
        %v2944 = vld [vmem:[%s2936 + $0x1c] sm:$0xf]
        %v2945 = vpack.c.bf16 %v2935, %v2935
        %v2954 = vunpack.c.l.b16 %v2937
        %v2955 = vunpack.c.l.b16 %v2938
        %v2956 = vunpack.c.l.b16 %v2939
        %v2957 = vunpack.c.l.b16 %v2940
        %v2958 = vunpack.c.l.b16 %v2941
        %v2959 = vunpack.c.l.b16 %v2942
        %v2960 = vunpack.c.l.b16 %v2943
        %v2961 = vunpack.c.l.b16 %v2944
        %v2962 = vpack.c.b16 %v2955, %v2954
        %v2963 = vpack.c.b16 %v2957, %v2956
        %v2964 = vpack.c.b16 %v2959, %v2958
        %v2965 = vpack.c.b16 %v2961, %v2960
        %v2971 = vsel %vm1781, %v2945, 0
        %2973 = vmatprep.subr.bf16.mxu0 0
        %2974 = vmatpush1.bf16.msra.mxu0 0
        %2975 = vmatprep.subr.bf16.mxu0 0
        %2976 = vmatpush1.bf16.msra.mxu0 0
        %2977 = vmatprep.subr.bf16.mxu0 0
        %2978 = vmatpush1.bf16.msra.mxu0 0
        %2979 = vmatprep.subr.bf16.mxu0 0
        %2980 = vmatpush1.bf16.msra.mxu0 0
        %2981 = vmatprep.subr.bf16.mxu0 0
        %2982 = vmatpush1.bf16.msra.mxu0 %v2965
        %2983 = vmatprep.subr.bf16.mxu0 0
        %2984 = vmatpush1.bf16.msra.mxu0 %v2964
        %2985 = vmatprep.subr.bf16.mxu0 0
        %2986 = vmatpush1.bf16.msra.mxu0 %v2963
        %2987 = vmatprep.subr.bf16.mxu0 0
        %2988 = vmatpush1.bf16.msra.mxu0 %v2962
        %2989 = vmatprep.subr.bf16.mxu0 0
        %2990 = vmatpush2.bf16.msra.mxu0 0
        %2991 = vmatprep.subr.bf16.mxu0 0
        %2992 = vmatpush2.bf16.msra.mxu0 0
        %2993 = vmatprep.subr.bf16.mxu0 0
        %2994 = vmatpush2.bf16.msra.mxu0 0
        %2995 = vmatprep.subr.bf16.mxu0 0
        %2996 = vmatpush2.bf16.msra.mxu0 0
        %2997 = vmatprep.subr.bf16.mxu0 0
        %2998 = vmatpush2.bf16.msra.mxu0 0
        %2999 = vmatprep.subr.bf16.mxu0 0
        %3000 = vmatpush2.bf16.msra.mxu0 0
        %3001 = vmatprep.subr.bf16.mxu0 0
        %3002 = vmatpush2.bf16.msra.mxu0 0
        %3003 = vmatprep.subr.bf16.mxu0 0
        %3004 = vmatpush2.bf16.msra.mxu0 0
        %3005 = vmatprep.mubr.bf16.mxu0 0
        %3006 = vmatmul.mubr.bf16.gmra.mxu0 %v2971
        %v3007 = vpop.f32.mrf.mxu0
        %v3008 = vadd.f32 0.0, %v3007
        %v3009 = vpop.f32.mrf.mxu0
        %v3010 = vpop.f32.mrf.mxu0
        %v3011 = vpop.f32.mrf.mxu0
        %3012 = vdwg.mxu0
        %v3013 = vadd.f32 %v2934, %v3008
        %v3014 = vld [vmem:[#allocation3 + $0x3] sm:$0x1]
        %s3015 = scalar_lea.vmem %s39, 96
        %v3016 = vld [vmem:[%s3015] sm:$0xf]
        %v3017 = vld [vmem:[%s3015 + $0x4] sm:$0xf]
        %v3018 = vld [vmem:[%s3015 + $0x8] sm:$0xf]
        %v3019 = vld [vmem:[%s3015 + $0xc] sm:$0xf]
        %v3020 = vld [vmem:[%s3015 + $0x10] sm:$0xf]
        %v3021 = vld [vmem:[%s3015 + $0x14] sm:$0xf]
        %v3022 = vld [vmem:[%s3015 + $0x18] sm:$0xf]
        %v3023 = vld [vmem:[%s3015 + $0x1c] sm:$0xf]
        %v3024 = vpack.c.bf16 %v3014, %v3014
        %v3033 = vunpack.c.l.b16 %v3016
        %v3034 = vunpack.c.l.b16 %v3017
        %v3035 = vunpack.c.l.b16 %v3018
        %v3036 = vunpack.c.l.b16 %v3019
        %v3037 = vunpack.c.l.b16 %v3020
        %v3038 = vunpack.c.l.b16 %v3021
        %v3039 = vunpack.c.l.b16 %v3022
        %v3040 = vunpack.c.l.b16 %v3023
        %v3041 = vpack.c.b16 %v3034, %v3033
        %v3042 = vpack.c.b16 %v3036, %v3035
        %v3043 = vpack.c.b16 %v3038, %v3037
        %v3044 = vpack.c.b16 %v3040, %v3039
        %v3050 = vsel %vm1781, %v3024, 0
        %3052 = vmatprep.subr.bf16.mxu0 0
        %3053 = vmatpush1.bf16.msra.mxu0 0
        %3054 = vmatprep.subr.bf16.mxu0 0
        %3055 = vmatpush1.bf16.msra.mxu0 0
        %3056 = vmatprep.subr.bf16.mxu0 0
        %3057 = vmatpush1.bf16.msra.mxu0 0
        %3058 = vmatprep.subr.bf16.mxu0 0
        %3059 = vmatpush1.bf16.msra.mxu0 0
        %3060 = vmatprep.subr.bf16.mxu0 0
        %3061 = vmatpush1.bf16.msra.mxu0 %v3044
        %3062 = vmatprep.subr.bf16.mxu0 0
        %3063 = vmatpush1.bf16.msra.mxu0 %v3043
        %3064 = vmatprep.subr.bf16.mxu0 0
        %3065 = vmatpush1.bf16.msra.mxu0 %v3042
        %3066 = vmatprep.subr.bf16.mxu0 0
        %3067 = vmatpush1.bf16.msra.mxu0 %v3041
        %3068 = vmatprep.subr.bf16.mxu0 0
        %3069 = vmatpush2.bf16.msra.mxu0 0
        %3070 = vmatprep.subr.bf16.mxu0 0
        %3071 = vmatpush2.bf16.msra.mxu0 0
        %3072 = vmatprep.subr.bf16.mxu0 0
        %3073 = vmatpush2.bf16.msra.mxu0 0
        %3074 = vmatprep.subr.bf16.mxu0 0
        %3075 = vmatpush2.bf16.msra.mxu0 0
        %3076 = vmatprep.subr.bf16.mxu0 0
        %3077 = vmatpush2.bf16.msra.mxu0 0
        %3078 = vmatprep.subr.bf16.mxu0 0
        %3079 = vmatpush2.bf16.msra.mxu0 0
        %3080 = vmatprep.subr.bf16.mxu0 0
        %3081 = vmatpush2.bf16.msra.mxu0 0
        %3082 = vmatprep.subr.bf16.mxu0 0
        %3083 = vmatpush2.bf16.msra.mxu0 0
        %3084 = vmatprep.mubr.bf16.mxu0 0
        %3085 = vmatmul.mubr.bf16.gmra.mxu0 %v3050
        %v3086 = vpop.f32.mrf.mxu0
        %v3087 = vadd.f32 0.0, %v3086
        %v3088 = vpop.f32.mrf.mxu0
        %v3089 = vpop.f32.mrf.mxu0
        %v3090 = vpop.f32.mrf.mxu0
        %3091 = vdwg.mxu0
        %v3092 = vadd.f32 %v3013, %v3087
        %v3093 = vld [vmem:[#allocation3 + $0x4] sm:$0x1]
        %s3094 = scalar_lea.vmem %s39, 128
        %v3095 = vld [vmem:[%s3094] sm:$0xf]
        %v3096 = vld [vmem:[%s3094 + $0x4] sm:$0xf]
        %v3097 = vld [vmem:[%s3094 + $0x8] sm:$0xf]
        %v3098 = vld [vmem:[%s3094 + $0xc] sm:$0xf]
        %v3099 = vld [vmem:[%s3094 + $0x10] sm:$0xf]
        %v3100 = vld [vmem:[%s3094 + $0x14] sm:$0xf]
        %v3101 = vld [vmem:[%s3094 + $0x18] sm:$0xf]
        %v3102 = vld [vmem:[%s3094 + $0x1c] sm:$0xf]
        %v3103 = vpack.c.bf16 %v3093, %v3093
        %v3112 = vunpack.c.l.b16 %v3095
        %v3113 = vunpack.c.l.b16 %v3096
        %v3114 = vunpack.c.l.b16 %v3097
        %v3115 = vunpack.c.l.b16 %v3098
        %v3116 = vunpack.c.l.b16 %v3099
        %v3117 = vunpack.c.l.b16 %v3100
        %v3118 = vunpack.c.l.b16 %v3101
        %v3119 = vunpack.c.l.b16 %v3102
        %v3120 = vpack.c.b16 %v3113, %v3112
        %v3121 = vpack.c.b16 %v3115, %v3114
        %v3122 = vpack.c.b16 %v3117, %v3116
        %v3123 = vpack.c.b16 %v3119, %v3118
        %v3129 = vsel %vm1781, %v3103, 0
        %3131 = vmatprep.subr.bf16.mxu0 0
        %3132 = vmatpush1.bf16.msra.mxu0 0
        %3133 = vmatprep.subr.bf16.mxu0 0
        %3134 = vmatpush1.bf16.msra.mxu0 0
        %3135 = vmatprep.subr.bf16.mxu0 0
        %3136 = vmatpush1.bf16.msra.mxu0 0
        %3137 = vmatprep.subr.bf16.mxu0 0
        %3138 = vmatpush1.bf16.msra.mxu0 0
        %3139 = vmatprep.subr.bf16.mxu0 0
        %3140 = vmatpush1.bf16.msra.mxu0 %v3123
        %3141 = vmatprep.subr.bf16.mxu0 0
        %3142 = vmatpush1.bf16.msra.mxu0 %v3122
        %3143 = vmatprep.subr.bf16.mxu0 0
        %3144 = vmatpush1.bf16.msra.mxu0 %v3121
        %3145 = vmatprep.subr.bf16.mxu0 0
        %3146 = vmatpush1.bf16.msra.mxu0 %v3120
        %3147 = vmatprep.subr.bf16.mxu0 0
        %3148 = vmatpush2.bf16.msra.mxu0 0
        %3149 = vmatprep.subr.bf16.mxu0 0
        %3150 = vmatpush2.bf16.msra.mxu0 0
        %3151 = vmatprep.subr.bf16.mxu0 0
        %3152 = vmatpush2.bf16.msra.mxu0 0
        %3153 = vmatprep.subr.bf16.mxu0 0
        %3154 = vmatpush2.bf16.msra.mxu0 0
        %3155 = vmatprep.subr.bf16.mxu0 0
        %3156 = vmatpush2.bf16.msra.mxu0 0
        %3157 = vmatprep.subr.bf16.mxu0 0
        %3158 = vmatpush2.bf16.msra.mxu0 0
        %3159 = vmatprep.subr.bf16.mxu0 0
        %3160 = vmatpush2.bf16.msra.mxu0 0
        %3161 = vmatprep.subr.bf16.mxu0 0
        %3162 = vmatpush2.bf16.msra.mxu0 0
        %3163 = vmatprep.mubr.bf16.mxu0 0
        %3164 = vmatmul.mubr.bf16.gmra.mxu0 %v3129
        %v3165 = vpop.f32.mrf.mxu0
        %v3166 = vadd.f32 0.0, %v3165
        %v3167 = vpop.f32.mrf.mxu0
        %v3168 = vpop.f32.mrf.mxu0
        %v3169 = vpop.f32.mrf.mxu0
        %3170 = vdwg.mxu0
        %v3171 = vadd.f32 %v3092, %v3166
        %v3172 = vld [vmem:[%s43] sm:$0x1]
        %v3173 = vmul.f32 %v3171, %v3172
        %v3174 = vld [vmem:[%s45] sm:$0x1]
        %v3175 = vadd.f32 %v3173, %v3174
        %v3176 = vmax.f32 %v3175, 0.0
        %3177 = vst.msk [vmem:[#allocation3 + $0x5] sm:$0x1] %vm2766, %v3176
        %v3178 = vld [vmem:[#allocation3] sm:$0x3f]
        %vm3179 = vcmask 521216
        %3180 = vst.msk [vmem:[%s1142] sm:$0x3f] %vm3179, %v3178
        %v3181 = vld [vmem:[#allocation3] sm:$0x1]
        %v3182 = vld [vmem:[%s47] sm:$0xf]
        %v3183 = vld [vmem:[%s47 + $0x4] sm:$0xf]
        %v3184 = vld [vmem:[%s47 + $0x8] sm:$0xf]
        %v3185 = vld [vmem:[%s47 + $0xc] sm:$0xf]
        %v3186 = vld [vmem:[%s47 + $0x10] sm:$0xf]
        %v3187 = vld [vmem:[%s47 + $0x14] sm:$0xf]
        %v3188 = vld [vmem:[%s47 + $0x18] sm:$0xf]
        %v3189 = vld [vmem:[%s47 + $0x1c] sm:$0xf]
        %v3190 = vpack.c.bf16 %v3181, %v3181
        %v3191 = vld [vmem:[%s49] sm:$0x1]
        %v3200 = vunpack.c.l.b16 %v3182
        %v3201 = vunpack.c.l.b16 %v3183
        %v3202 = vunpack.c.l.b16 %v3184
        %v3203 = vunpack.c.l.b16 %v3185
        %v3204 = vunpack.c.l.b16 %v3186
        %v3205 = vunpack.c.l.b16 %v3187
        %v3206 = vunpack.c.l.b16 %v3188
        %v3207 = vunpack.c.l.b16 %v3189
        %v3208 = vpack.c.b16 %v3201, %v3200
        %v3209 = vpack.c.b16 %v3203, %v3202
        %v3210 = vpack.c.b16 %v3205, %v3204
        %v3211 = vpack.c.b16 %v3207, %v3206
        %v3217 = vsel %vm1781, %v3190, 0
        %3219 = vmatprep.subr.bf16.mxu0 0
        %3220 = vmatpush1.bf16.msra.mxu0 0
        %3221 = vmatprep.subr.bf16.mxu0 0
        %3222 = vmatpush1.bf16.msra.mxu0 0
        %3223 = vmatprep.subr.bf16.mxu0 0
        %3224 = vmatpush1.bf16.msra.mxu0 0
        %3225 = vmatprep.subr.bf16.mxu0 0
        %3226 = vmatpush1.bf16.msra.mxu0 0
        %3227 = vmatprep.subr.bf16.mxu0 0
        %3228 = vmatpush1.bf16.msra.mxu0 %v3211
        %3229 = vmatprep.subr.bf16.mxu0 0
        %3230 = vmatpush1.bf16.msra.mxu0 %v3210
        %3231 = vmatprep.subr.bf16.mxu0 0
        %3232 = vmatpush1.bf16.msra.mxu0 %v3209
        %3233 = vmatprep.subr.bf16.mxu0 0
        %3234 = vmatpush1.bf16.msra.mxu0 %v3208
        %3235 = vmatprep.subr.bf16.mxu0 0
        %3236 = vmatpush2.bf16.msra.mxu0 0
        %3237 = vmatprep.subr.bf16.mxu0 0
        %3238 = vmatpush2.bf16.msra.mxu0 0
        %3239 = vmatprep.subr.bf16.mxu0 0
        %3240 = vmatpush2.bf16.msra.mxu0 0
        %3241 = vmatprep.subr.bf16.mxu0 0
        %3242 = vmatpush2.bf16.msra.mxu0 0
        %3243 = vmatprep.subr.bf16.mxu0 0
        %3244 = vmatpush2.bf16.msra.mxu0 0
        %3245 = vmatprep.subr.bf16.mxu0 0
        %3246 = vmatpush2.bf16.msra.mxu0 0
        %3247 = vmatprep.subr.bf16.mxu0 0
        %3248 = vmatpush2.bf16.msra.mxu0 0
        %3249 = vmatprep.subr.bf16.mxu0 0
        %3250 = vmatpush2.bf16.msra.mxu0 0
        %3251 = vmatprep.mubr.bf16.mxu0 0
        %3252 = vmatmul.mubr.bf16.gmra.mxu0 %v3217
        %v3253 = vpop.f32.mrf.mxu0
        %v3254 = vadd.f32 %v3191, %v3253
        %v3255 = vpop.f32.mrf.mxu0
        %v3256 = vpop.f32.mrf.mxu0
        %v3257 = vpop.f32.mrf.mxu0
        %3258 = vdwg.mxu0
        %v3259 = vld [vmem:[%s51] sm:$0x1]
        %v3260 = vmul.f32 %v3254, %v3259
        %v3261 = vld [vmem:[%s53] sm:$0x1]
        %v3262 = vadd.f32 %v3260, %v3261
        %v3263 = vld [vmem:[%s55] sm:$0xf]
        %v3264 = vld [vmem:[%s55 + $0x4] sm:$0xf]
        %v3265 = vld [vmem:[%s55 + $0x8] sm:$0xf]
        %v3266 = vld [vmem:[%s55 + $0xc] sm:$0xf]
        %v3267 = vpack.c.bf16 %v3262, %v3262
        %v3268 = vld [vmem:[%s57] sm:$0x1]
        %v3273 = vunpack.c.l.b16 %v3263
        %v3274 = vunpack.c.l.b16 %v3264
        %v3275 = vunpack.c.l.b16 %v3265
        %v3276 = vunpack.c.l.b16 %v3266
        %v3277 = vpack.c.b16 %v3274, %v3273
        %v3278 = vpack.c.b16 %v3276, %v3275
        %vm3281 = vcmask 261120
        %v3283 = vsel %vm3281, %v3267, 0
        %3285 = vmatprep.subr.bf16.mxu0 0
        %3286 = vmatpush1.bf16.msra.mxu0 0
        %3287 = vmatprep.subr.bf16.mxu0 0
        %3288 = vmatpush1.bf16.msra.mxu0 0
        %3289 = vmatprep.subr.bf16.mxu0 0
        %3290 = vmatpush1.bf16.msra.mxu0 0
        %3291 = vmatprep.subr.bf16.mxu0 0
        %3292 = vmatpush1.bf16.msra.mxu0 0
        %3293 = vmatprep.subr.bf16.mxu0 0
        %3294 = vmatpush1.bf16.msra.mxu0 0
        %3295 = vmatprep.subr.bf16.mxu0 0
        %3296 = vmatpush1.bf16.msra.mxu0 0
        %3297 = vmatprep.subr.bf16.mxu0 0
        %3298 = vmatpush1.bf16.msra.mxu0 %v3278
        %3299 = vmatprep.subr.bf16.mxu0 0
        %3300 = vmatpush1.bf16.msra.mxu0 %v3277
        %3301 = vmatprep.subr.bf16.mxu0 0
        %3302 = vmatpush2.bf16.msra.mxu0 0
        %3303 = vmatprep.subr.bf16.mxu0 0
        %3304 = vmatpush2.bf16.msra.mxu0 0
        %3305 = vmatprep.subr.bf16.mxu0 0
        %3306 = vmatpush2.bf16.msra.mxu0 0
        %3307 = vmatprep.subr.bf16.mxu0 0
        %3308 = vmatpush2.bf16.msra.mxu0 0
        %3309 = vmatprep.subr.bf16.mxu0 0
        %3310 = vmatpush2.bf16.msra.mxu0 0
        %3311 = vmatprep.subr.bf16.mxu0 0
        %3312 = vmatpush2.bf16.msra.mxu0 0
        %3313 = vmatprep.subr.bf16.mxu0 0
        %3314 = vmatpush2.bf16.msra.mxu0 0
        %3315 = vmatprep.subr.bf16.mxu0 0
        %3316 = vmatpush2.bf16.msra.mxu0 0
        %3317 = vmatprep.mubr.bf16.mxu0 0
        %3318 = vmatmul.mubr.bf16.gmra.mxu0 %v3283
        %v3319 = vpop.f32.mrf.mxu0
        %v3320 = vadd.f32 %v3268, %v3319
        %v3321 = vpop.f32.mrf.mxu0
        %v3322 = vpop.f32.mrf.mxu0
        %v3323 = vpop.f32.mrf.mxu0
        %3324 = vdwg.mxu0
        %vm3325 = vcmask 73728
        %3326 = vst.msk [vmem:[#allocation4] sm:$0x1] %vm3325, %v3320
        %v3327 = vld [vmem:[#allocation3 + $0x1] sm:$0x1]
        %s3328 = scalar_lea.vmem %s47, 32
        %v3329 = vld [vmem:[%s3328] sm:$0xf]
        %v3330 = vld [vmem:[%s3328 + $0x4] sm:$0xf]
        %v3331 = vld [vmem:[%s3328 + $0x8] sm:$0xf]
        %v3332 = vld [vmem:[%s3328 + $0xc] sm:$0xf]
        %v3333 = vld [vmem:[%s3328 + $0x10] sm:$0xf]
        %v3334 = vld [vmem:[%s3328 + $0x14] sm:$0xf]
        %v3335 = vld [vmem:[%s3328 + $0x18] sm:$0xf]
        %v3336 = vld [vmem:[%s3328 + $0x1c] sm:$0xf]
        %v3337 = vpack.c.bf16 %v3327, %v3327
        %s3338 = scalar_lea.vmem %s49, 1
        %v3339 = vld [vmem:[%s3338] sm:$0x1]
        %v3348 = vunpack.c.l.b16 %v3329
        %v3349 = vunpack.c.l.b16 %v3330
        %v3350 = vunpack.c.l.b16 %v3331
        %v3351 = vunpack.c.l.b16 %v3332
        %v3352 = vunpack.c.l.b16 %v3333
        %v3353 = vunpack.c.l.b16 %v3334
        %v3354 = vunpack.c.l.b16 %v3335
        %v3355 = vunpack.c.l.b16 %v3336
        %v3356 = vpack.c.b16 %v3349, %v3348
        %v3357 = vpack.c.b16 %v3351, %v3350
        %v3358 = vpack.c.b16 %v3353, %v3352
        %v3359 = vpack.c.b16 %v3355, %v3354
        %v3365 = vsel %vm1781, %v3337, 0
        %3367 = vmatprep.subr.bf16.mxu0 0
        %3368 = vmatpush1.bf16.msra.mxu0 0
        %3369 = vmatprep.subr.bf16.mxu0 0
        %3370 = vmatpush1.bf16.msra.mxu0 0
        %3371 = vmatprep.subr.bf16.mxu0 0
        %3372 = vmatpush1.bf16.msra.mxu0 0
        %3373 = vmatprep.subr.bf16.mxu0 0
        %3374 = vmatpush1.bf16.msra.mxu0 0
        %3375 = vmatprep.subr.bf16.mxu0 0
        %3376 = vmatpush1.bf16.msra.mxu0 %v3359
        %3377 = vmatprep.subr.bf16.mxu0 0
        %3378 = vmatpush1.bf16.msra.mxu0 %v3358
        %3379 = vmatprep.subr.bf16.mxu0 0
        %3380 = vmatpush1.bf16.msra.mxu0 %v3357
        %3381 = vmatprep.subr.bf16.mxu0 0
        %3382 = vmatpush1.bf16.msra.mxu0 %v3356
        %3383 = vmatprep.subr.bf16.mxu0 0
        %3384 = vmatpush2.bf16.msra.mxu0 0
        %3385 = vmatprep.subr.bf16.mxu0 0
        %3386 = vmatpush2.bf16.msra.mxu0 0
        %3387 = vmatprep.subr.bf16.mxu0 0
        %3388 = vmatpush2.bf16.msra.mxu0 0
        %3389 = vmatprep.subr.bf16.mxu0 0
        %3390 = vmatpush2.bf16.msra.mxu0 0
        %3391 = vmatprep.subr.bf16.mxu0 0
        %3392 = vmatpush2.bf16.msra.mxu0 0
        %3393 = vmatprep.subr.bf16.mxu0 0
        %3394 = vmatpush2.bf16.msra.mxu0 0
        %3395 = vmatprep.subr.bf16.mxu0 0
        %3396 = vmatpush2.bf16.msra.mxu0 0
        %3397 = vmatprep.subr.bf16.mxu0 0
        %3398 = vmatpush2.bf16.msra.mxu0 0
        %3399 = vmatprep.mubr.bf16.mxu0 0
        %3400 = vmatmul.mubr.bf16.gmra.mxu0 %v3365
        %v3401 = vpop.f32.mrf.mxu0
        %v3402 = vadd.f32 %v3339, %v3401
        %v3403 = vpop.f32.mrf.mxu0
        %v3404 = vpop.f32.mrf.mxu0
        %v3405 = vpop.f32.mrf.mxu0
        %3406 = vdwg.mxu0
        %s3407 = scalar_lea.vmem %s51, 1
        %v3408 = vld [vmem:[%s3407] sm:$0x1]
        %v3409 = vmul.f32 %v3402, %v3408
        %s3410 = scalar_lea.vmem %s53, 1
        %v3411 = vld [vmem:[%s3410] sm:$0x1]
        %v3412 = vadd.f32 %v3409, %v3411
        %s3413 = scalar_lea.vmem %s55, 16
        %v3414 = vld [vmem:[%s3413] sm:$0xf]
        %v3415 = vld [vmem:[%s3413 + $0x4] sm:$0xf]
        %v3416 = vld [vmem:[%s3413 + $0x8] sm:$0xf]
        %v3417 = vld [vmem:[%s3413 + $0xc] sm:$0xf]
        %v3418 = vpack.c.bf16 %v3412, %v3412
        %s3419 = scalar_lea.vmem %s57, 1
        %v3420 = vld [vmem:[%s3419] sm:$0x1]
        %v3425 = vunpack.c.l.b16 %v3414
        %v3426 = vunpack.c.l.b16 %v3415
        %v3427 = vunpack.c.l.b16 %v3416
        %v3428 = vunpack.c.l.b16 %v3417
        %v3429 = vpack.c.b16 %v3426, %v3425
        %v3430 = vpack.c.b16 %v3428, %v3427
        %v3434 = vsel %vm3281, %v3418, 0
        %3436 = vmatprep.subr.bf16.mxu0 0
        %3437 = vmatpush1.bf16.msra.mxu0 0
        %3438 = vmatprep.subr.bf16.mxu0 0
        %3439 = vmatpush1.bf16.msra.mxu0 0
        %3440 = vmatprep.subr.bf16.mxu0 0
        %3441 = vmatpush1.bf16.msra.mxu0 0
        %3442 = vmatprep.subr.bf16.mxu0 0
        %3443 = vmatpush1.bf16.msra.mxu0 0
        %3444 = vmatprep.subr.bf16.mxu0 0
        %3445 = vmatpush1.bf16.msra.mxu0 0
        %3446 = vmatprep.subr.bf16.mxu0 0
        %3447 = vmatpush1.bf16.msra.mxu0 0
        %3448 = vmatprep.subr.bf16.mxu0 0
        %3449 = vmatpush1.bf16.msra.mxu0 %v3430
        %3450 = vmatprep.subr.bf16.mxu0 0
        %3451 = vmatpush1.bf16.msra.mxu0 %v3429
        %3452 = vmatprep.subr.bf16.mxu0 0
        %3453 = vmatpush2.bf16.msra.mxu0 0
        %3454 = vmatprep.subr.bf16.mxu0 0
        %3455 = vmatpush2.bf16.msra.mxu0 0
        %3456 = vmatprep.subr.bf16.mxu0 0
        %3457 = vmatpush2.bf16.msra.mxu0 0
        %3458 = vmatprep.subr.bf16.mxu0 0
        %3459 = vmatpush2.bf16.msra.mxu0 0
        %3460 = vmatprep.subr.bf16.mxu0 0
        %3461 = vmatpush2.bf16.msra.mxu0 0
        %3462 = vmatprep.subr.bf16.mxu0 0
        %3463 = vmatpush2.bf16.msra.mxu0 0
        %3464 = vmatprep.subr.bf16.mxu0 0
        %3465 = vmatpush2.bf16.msra.mxu0 0
        %3466 = vmatprep.subr.bf16.mxu0 0
        %3467 = vmatpush2.bf16.msra.mxu0 0
        %3468 = vmatprep.mubr.bf16.mxu0 0
        %3469 = vmatmul.mubr.bf16.gmra.mxu0 %v3434
        %v3470 = vpop.f32.mrf.mxu0
        %v3471 = vadd.f32 %v3420, %v3470
        %v3472 = vpop.f32.mrf.mxu0
        %v3473 = vpop.f32.mrf.mxu0
        %v3474 = vpop.f32.mrf.mxu0
        %3475 = vdwg.mxu0
        %3476 = vst.msk [vmem:[#allocation4 + $0x1] sm:$0x1] %vm3325, %v3471
        %v3477 = vld [vmem:[#allocation3 + $0x2] sm:$0x1]
        %s3478 = scalar_lea.vmem %s47, 64
        %v3479 = vld [vmem:[%s3478] sm:$0xf]
        %v3480 = vld [vmem:[%s3478 + $0x4] sm:$0xf]
        %v3481 = vld [vmem:[%s3478 + $0x8] sm:$0xf]
        %v3482 = vld [vmem:[%s3478 + $0xc] sm:$0xf]
        %v3483 = vld [vmem:[%s3478 + $0x10] sm:$0xf]
        %v3484 = vld [vmem:[%s3478 + $0x14] sm:$0xf]
        %v3485 = vld [vmem:[%s3478 + $0x18] sm:$0xf]
        %v3486 = vld [vmem:[%s3478 + $0x1c] sm:$0xf]
        %v3487 = vpack.c.bf16 %v3477, %v3477
        %s3488 = scalar_lea.vmem %s49, 2
        %v3489 = vld [vmem:[%s3488] sm:$0x1]
        %v3498 = vunpack.c.l.b16 %v3479
        %v3499 = vunpack.c.l.b16 %v3480
        %v3500 = vunpack.c.l.b16 %v3481
        %v3501 = vunpack.c.l.b16 %v3482
        %v3502 = vunpack.c.l.b16 %v3483
        %v3503 = vunpack.c.l.b16 %v3484
        %v3504 = vunpack.c.l.b16 %v3485
        %v3505 = vunpack.c.l.b16 %v3486
        %v3506 = vpack.c.b16 %v3499, %v3498
        %v3507 = vpack.c.b16 %v3501, %v3500
        %v3508 = vpack.c.b16 %v3503, %v3502
        %v3509 = vpack.c.b16 %v3505, %v3504
        %v3515 = vsel %vm1781, %v3487, 0
        %3517 = vmatprep.subr.bf16.mxu0 0
        %3518 = vmatpush1.bf16.msra.mxu0 0
        %3519 = vmatprep.subr.bf16.mxu0 0
        %3520 = vmatpush1.bf16.msra.mxu0 0
        %3521 = vmatprep.subr.bf16.mxu0 0
        %3522 = vmatpush1.bf16.msra.mxu0 0
        %3523 = vmatprep.subr.bf16.mxu0 0
        %3524 = vmatpush1.bf16.msra.mxu0 0
        %3525 = vmatprep.subr.bf16.mxu0 0
        %3526 = vmatpush1.bf16.msra.mxu0 %v3509
        %3527 = vmatprep.subr.bf16.mxu0 0
        %3528 = vmatpush1.bf16.msra.mxu0 %v3508
        %3529 = vmatprep.subr.bf16.mxu0 0
        %3530 = vmatpush1.bf16.msra.mxu0 %v3507
        %3531 = vmatprep.subr.bf16.mxu0 0
        %3532 = vmatpush1.bf16.msra.mxu0 %v3506
        %3533 = vmatprep.subr.bf16.mxu0 0
        %3534 = vmatpush2.bf16.msra.mxu0 0
        %3535 = vmatprep.subr.bf16.mxu0 0
        %3536 = vmatpush2.bf16.msra.mxu0 0
        %3537 = vmatprep.subr.bf16.mxu0 0
        %3538 = vmatpush2.bf16.msra.mxu0 0
        %3539 = vmatprep.subr.bf16.mxu0 0
        %3540 = vmatpush2.bf16.msra.mxu0 0
        %3541 = vmatprep.subr.bf16.mxu0 0
        %3542 = vmatpush2.bf16.msra.mxu0 0
        %3543 = vmatprep.subr.bf16.mxu0 0
        %3544 = vmatpush2.bf16.msra.mxu0 0
        %3545 = vmatprep.subr.bf16.mxu0 0
        %3546 = vmatpush2.bf16.msra.mxu0 0
        %3547 = vmatprep.subr.bf16.mxu0 0
        %3548 = vmatpush2.bf16.msra.mxu0 0
        %3549 = vmatprep.mubr.bf16.mxu0 0
        %3550 = vmatmul.mubr.bf16.gmra.mxu0 %v3515
        %v3551 = vpop.f32.mrf.mxu0
        %v3552 = vadd.f32 %v3489, %v3551
        %v3553 = vpop.f32.mrf.mxu0
        %v3554 = vpop.f32.mrf.mxu0
        %v3555 = vpop.f32.mrf.mxu0
        %3556 = vdwg.mxu0
        %s3557 = scalar_lea.vmem %s51, 2
        %v3558 = vld [vmem:[%s3557] sm:$0x1]
        %v3559 = vmul.f32 %v3552, %v3558
        %s3560 = scalar_lea.vmem %s53, 2
        %v3561 = vld [vmem:[%s3560] sm:$0x1]
        %v3562 = vadd.f32 %v3559, %v3561
        %s3563 = scalar_lea.vmem %s55, 32
        %v3564 = vld [vmem:[%s3563] sm:$0xf]
        %v3565 = vld [vmem:[%s3563 + $0x4] sm:$0xf]
        %v3566 = vld [vmem:[%s3563 + $0x8] sm:$0xf]
        %v3567 = vld [vmem:[%s3563 + $0xc] sm:$0xf]
        %v3568 = vpack.c.bf16 %v3562, %v3562
        %s3569 = scalar_lea.vmem %s57, 2
        %v3570 = vld [vmem:[%s3569] sm:$0x1]
        %v3575 = vunpack.c.l.b16 %v3564
        %v3576 = vunpack.c.l.b16 %v3565
        %v3577 = vunpack.c.l.b16 %v3566
        %v3578 = vunpack.c.l.b16 %v3567
        %v3579 = vpack.c.b16 %v3576, %v3575
        %v3580 = vpack.c.b16 %v3578, %v3577
        %v3584 = vsel %vm3281, %v3568, 0
        %3586 = vmatprep.subr.bf16.mxu0 0
        %3587 = vmatpush1.bf16.msra.mxu0 0
        %3588 = vmatprep.subr.bf16.mxu0 0
        %3589 = vmatpush1.bf16.msra.mxu0 0
        %3590 = vmatprep.subr.bf16.mxu0 0
        %3591 = vmatpush1.bf16.msra.mxu0 0
        %3592 = vmatprep.subr.bf16.mxu0 0
        %3593 = vmatpush1.bf16.msra.mxu0 0
        %3594 = vmatprep.subr.bf16.mxu0 0
        %3595 = vmatpush1.bf16.msra.mxu0 0
        %3596 = vmatprep.subr.bf16.mxu0 0
        %3597 = vmatpush1.bf16.msra.mxu0 0
        %3598 = vmatprep.subr.bf16.mxu0 0
        %3599 = vmatpush1.bf16.msra.mxu0 %v3580
        %3600 = vmatprep.subr.bf16.mxu0 0
        %3601 = vmatpush1.bf16.msra.mxu0 %v3579
        %3602 = vmatprep.subr.bf16.mxu0 0
        %3603 = vmatpush2.bf16.msra.mxu0 0
        %3604 = vmatprep.subr.bf16.mxu0 0
        %3605 = vmatpush2.bf16.msra.mxu0 0
        %3606 = vmatprep.subr.bf16.mxu0 0
        %3607 = vmatpush2.bf16.msra.mxu0 0
        %3608 = vmatprep.subr.bf16.mxu0 0
        %3609 = vmatpush2.bf16.msra.mxu0 0
        %3610 = vmatprep.subr.bf16.mxu0 0
        %3611 = vmatpush2.bf16.msra.mxu0 0
        %3612 = vmatprep.subr.bf16.mxu0 0
        %3613 = vmatpush2.bf16.msra.mxu0 0
        %3614 = vmatprep.subr.bf16.mxu0 0
        %3615 = vmatpush2.bf16.msra.mxu0 0
        %3616 = vmatprep.subr.bf16.mxu0 0
        %3617 = vmatpush2.bf16.msra.mxu0 0
        %3618 = vmatprep.mubr.bf16.mxu0 0
        %3619 = vmatmul.mubr.bf16.gmra.mxu0 %v3584
        %v3620 = vpop.f32.mrf.mxu0
        %v3621 = vadd.f32 %v3570, %v3620
        %v3622 = vpop.f32.mrf.mxu0
        %v3623 = vpop.f32.mrf.mxu0
        %v3624 = vpop.f32.mrf.mxu0
        %3625 = vdwg.mxu0
        %3626 = vst.msk [vmem:[#allocation4 + $0x2] sm:$0x1] %vm3325, %v3621
        %v3627 = vld [vmem:[#allocation3 + $0x3] sm:$0x1]
        %s3628 = scalar_lea.vmem %s47, 96
        %v3629 = vld [vmem:[%s3628] sm:$0xf]
        %v3630 = vld [vmem:[%s3628 + $0x4] sm:$0xf]
        %v3631 = vld [vmem:[%s3628 + $0x8] sm:$0xf]
        %v3632 = vld [vmem:[%s3628 + $0xc] sm:$0xf]
        %v3633 = vld [vmem:[%s3628 + $0x10] sm:$0xf]
        %v3634 = vld [vmem:[%s3628 + $0x14] sm:$0xf]
        %v3635 = vld [vmem:[%s3628 + $0x18] sm:$0xf]
        %v3636 = vld [vmem:[%s3628 + $0x1c] sm:$0xf]
        %v3637 = vpack.c.bf16 %v3627, %v3627
        %s3638 = scalar_lea.vmem %s49, 3
        %v3639 = vld [vmem:[%s3638] sm:$0x1]
        %v3648 = vunpack.c.l.b16 %v3629
        %v3649 = vunpack.c.l.b16 %v3630
        %v3650 = vunpack.c.l.b16 %v3631
        %v3651 = vunpack.c.l.b16 %v3632
        %v3652 = vunpack.c.l.b16 %v3633
        %v3653 = vunpack.c.l.b16 %v3634
        %v3654 = vunpack.c.l.b16 %v3635
        %v3655 = vunpack.c.l.b16 %v3636
        %v3656 = vpack.c.b16 %v3649, %v3648
        %v3657 = vpack.c.b16 %v3651, %v3650
        %v3658 = vpack.c.b16 %v3653, %v3652
        %v3659 = vpack.c.b16 %v3655, %v3654
        %v3665 = vsel %vm1781, %v3637, 0
        %3667 = vmatprep.subr.bf16.mxu0 0
        %3668 = vmatpush1.bf16.msra.mxu0 0
        %3669 = vmatprep.subr.bf16.mxu0 0
        %3670 = vmatpush1.bf16.msra.mxu0 0
        %3671 = vmatprep.subr.bf16.mxu0 0
        %3672 = vmatpush1.bf16.msra.mxu0 0
        %3673 = vmatprep.subr.bf16.mxu0 0
        %3674 = vmatpush1.bf16.msra.mxu0 0
        %3675 = vmatprep.subr.bf16.mxu0 0
        %3676 = vmatpush1.bf16.msra.mxu0 %v3659
        %3677 = vmatprep.subr.bf16.mxu0 0
        %3678 = vmatpush1.bf16.msra.mxu0 %v3658
        %3679 = vmatprep.subr.bf16.mxu0 0
        %3680 = vmatpush1.bf16.msra.mxu0 %v3657
        %3681 = vmatprep.subr.bf16.mxu0 0
        %3682 = vmatpush1.bf16.msra.mxu0 %v3656
        %3683 = vmatprep.subr.bf16.mxu0 0
        %3684 = vmatpush2.bf16.msra.mxu0 0
        %3685 = vmatprep.subr.bf16.mxu0 0
        %3686 = vmatpush2.bf16.msra.mxu0 0
        %3687 = vmatprep.subr.bf16.mxu0 0
        %3688 = vmatpush2.bf16.msra.mxu0 0
        %3689 = vmatprep.subr.bf16.mxu0 0
        %3690 = vmatpush2.bf16.msra.mxu0 0
        %3691 = vmatprep.subr.bf16.mxu0 0
        %3692 = vmatpush2.bf16.msra.mxu0 0
        %3693 = vmatprep.subr.bf16.mxu0 0
        %3694 = vmatpush2.bf16.msra.mxu0 0
        %3695 = vmatprep.subr.bf16.mxu0 0
        %3696 = vmatpush2.bf16.msra.mxu0 0
        %3697 = vmatprep.subr.bf16.mxu0 0
        %3698 = vmatpush2.bf16.msra.mxu0 0
        %3699 = vmatprep.mubr.bf16.mxu0 0
        %3700 = vmatmul.mubr.bf16.gmra.mxu0 %v3665
        %v3701 = vpop.f32.mrf.mxu0
        %v3702 = vadd.f32 %v3639, %v3701
        %v3703 = vpop.f32.mrf.mxu0
        %v3704 = vpop.f32.mrf.mxu0
        %v3705 = vpop.f32.mrf.mxu0
        %3706 = vdwg.mxu0
        %s3707 = scalar_lea.vmem %s51, 3
        %v3708 = vld [vmem:[%s3707] sm:$0x1]
        %v3709 = vmul.f32 %v3702, %v3708
        %s3710 = scalar_lea.vmem %s53, 3
        %v3711 = vld [vmem:[%s3710] sm:$0x1]
        %v3712 = vadd.f32 %v3709, %v3711
        %s3713 = scalar_lea.vmem %s55, 48
        %v3714 = vld [vmem:[%s3713] sm:$0xf]
        %v3715 = vld [vmem:[%s3713 + $0x4] sm:$0xf]
        %v3716 = vld [vmem:[%s3713 + $0x8] sm:$0xf]
        %v3717 = vld [vmem:[%s3713 + $0xc] sm:$0xf]
        %v3718 = vpack.c.bf16 %v3712, %v3712
        %s3719 = scalar_lea.vmem %s57, 3
        %v3720 = vld [vmem:[%s3719] sm:$0x1]
        %v3725 = vunpack.c.l.b16 %v3714
        %v3726 = vunpack.c.l.b16 %v3715
        %v3727 = vunpack.c.l.b16 %v3716
        %v3728 = vunpack.c.l.b16 %v3717
        %v3729 = vpack.c.b16 %v3726, %v3725
        %v3730 = vpack.c.b16 %v3728, %v3727
        %v3734 = vsel %vm3281, %v3718, 0
        %3736 = vmatprep.subr.bf16.mxu0 0
        %3737 = vmatpush1.bf16.msra.mxu0 0
        %3738 = vmatprep.subr.bf16.mxu0 0
        %3739 = vmatpush1.bf16.msra.mxu0 0
        %3740 = vmatprep.subr.bf16.mxu0 0
        %3741 = vmatpush1.bf16.msra.mxu0 0
        %3742 = vmatprep.subr.bf16.mxu0 0
        %3743 = vmatpush1.bf16.msra.mxu0 0
        %3744 = vmatprep.subr.bf16.mxu0 0
        %3745 = vmatpush1.bf16.msra.mxu0 0
        %3746 = vmatprep.subr.bf16.mxu0 0
        %3747 = vmatpush1.bf16.msra.mxu0 0
        %3748 = vmatprep.subr.bf16.mxu0 0
        %3749 = vmatpush1.bf16.msra.mxu0 %v3730
        %3750 = vmatprep.subr.bf16.mxu0 0
        %3751 = vmatpush1.bf16.msra.mxu0 %v3729
        %3752 = vmatprep.subr.bf16.mxu0 0
        %3753 = vmatpush2.bf16.msra.mxu0 0
        %3754 = vmatprep.subr.bf16.mxu0 0
        %3755 = vmatpush2.bf16.msra.mxu0 0
        %3756 = vmatprep.subr.bf16.mxu0 0
        %3757 = vmatpush2.bf16.msra.mxu0 0
        %3758 = vmatprep.subr.bf16.mxu0 0
        %3759 = vmatpush2.bf16.msra.mxu0 0
        %3760 = vmatprep.subr.bf16.mxu0 0
        %3761 = vmatpush2.bf16.msra.mxu0 0
        %3762 = vmatprep.subr.bf16.mxu0 0
        %3763 = vmatpush2.bf16.msra.mxu0 0
        %3764 = vmatprep.subr.bf16.mxu0 0
        %3765 = vmatpush2.bf16.msra.mxu0 0
        %3766 = vmatprep.subr.bf16.mxu0 0
        %3767 = vmatpush2.bf16.msra.mxu0 0
        %3768 = vmatprep.mubr.bf16.mxu0 0
        %3769 = vmatmul.mubr.bf16.gmra.mxu0 %v3734
        %v3770 = vpop.f32.mrf.mxu0
        %v3771 = vadd.f32 %v3720, %v3770
        %v3772 = vpop.f32.mrf.mxu0
        %v3773 = vpop.f32.mrf.mxu0
        %v3774 = vpop.f32.mrf.mxu0
        %3775 = vdwg.mxu0
        %3776 = vst.msk [vmem:[#allocation4 + $0x3] sm:$0x1] %vm3325, %v3771
        %v3777 = vld [vmem:[#allocation3 + $0x4] sm:$0x1]
        %s3778 = scalar_lea.vmem %s47, 128
        %v3779 = vld [vmem:[%s3778] sm:$0xf]
        %v3780 = vld [vmem:[%s3778 + $0x4] sm:$0xf]
        %v3781 = vld [vmem:[%s3778 + $0x8] sm:$0xf]
        %v3782 = vld [vmem:[%s3778 + $0xc] sm:$0xf]
        %v3783 = vld [vmem:[%s3778 + $0x10] sm:$0xf]
        %v3784 = vld [vmem:[%s3778 + $0x14] sm:$0xf]
        %v3785 = vld [vmem:[%s3778 + $0x18] sm:$0xf]
        %v3786 = vld [vmem:[%s3778 + $0x1c] sm:$0xf]
        %v3787 = vpack.c.bf16 %v3777, %v3777
        %s3788 = scalar_lea.vmem %s49, 4
        %v3789 = vld [vmem:[%s3788] sm:$0x1]
        %v3798 = vunpack.c.l.b16 %v3779
        %v3799 = vunpack.c.l.b16 %v3780
        %v3800 = vunpack.c.l.b16 %v3781
        %v3801 = vunpack.c.l.b16 %v3782
        %v3802 = vunpack.c.l.b16 %v3783
        %v3803 = vunpack.c.l.b16 %v3784
        %v3804 = vunpack.c.l.b16 %v3785
        %v3805 = vunpack.c.l.b16 %v3786
        %v3806 = vpack.c.b16 %v3799, %v3798
        %v3807 = vpack.c.b16 %v3801, %v3800
        %v3808 = vpack.c.b16 %v3803, %v3802
        %v3809 = vpack.c.b16 %v3805, %v3804
        %v3815 = vsel %vm1781, %v3787, 0
        %3817 = vmatprep.subr.bf16.mxu0 0
        %3818 = vmatpush1.bf16.msra.mxu0 0
        %3819 = vmatprep.subr.bf16.mxu0 0
        %3820 = vmatpush1.bf16.msra.mxu0 0
        %3821 = vmatprep.subr.bf16.mxu0 0
        %3822 = vmatpush1.bf16.msra.mxu0 0
        %3823 = vmatprep.subr.bf16.mxu0 0
        %3824 = vmatpush1.bf16.msra.mxu0 0
        %3825 = vmatprep.subr.bf16.mxu0 0
        %3826 = vmatpush1.bf16.msra.mxu0 %v3809
        %3827 = vmatprep.subr.bf16.mxu0 0
        %3828 = vmatpush1.bf16.msra.mxu0 %v3808
        %3829 = vmatprep.subr.bf16.mxu0 0
        %3830 = vmatpush1.bf16.msra.mxu0 %v3807
        %3831 = vmatprep.subr.bf16.mxu0 0
        %3832 = vmatpush1.bf16.msra.mxu0 %v3806
        %3833 = vmatprep.subr.bf16.mxu0 0
        %3834 = vmatpush2.bf16.msra.mxu0 0
        %3835 = vmatprep.subr.bf16.mxu0 0
        %3836 = vmatpush2.bf16.msra.mxu0 0
        %3837 = vmatprep.subr.bf16.mxu0 0
        %3838 = vmatpush2.bf16.msra.mxu0 0
        %3839 = vmatprep.subr.bf16.mxu0 0
        %3840 = vmatpush2.bf16.msra.mxu0 0
        %3841 = vmatprep.subr.bf16.mxu0 0
        %3842 = vmatpush2.bf16.msra.mxu0 0
        %3843 = vmatprep.subr.bf16.mxu0 0
        %3844 = vmatpush2.bf16.msra.mxu0 0
        %3845 = vmatprep.subr.bf16.mxu0 0
        %3846 = vmatpush2.bf16.msra.mxu0 0
        %3847 = vmatprep.subr.bf16.mxu0 0
        %3848 = vmatpush2.bf16.msra.mxu0 0
        %3849 = vmatprep.mubr.bf16.mxu0 0
        %3850 = vmatmul.mubr.bf16.gmra.mxu0 %v3815
        %v3851 = vpop.f32.mrf.mxu0
        %v3852 = vadd.f32 %v3789, %v3851
        %v3853 = vpop.f32.mrf.mxu0
        %v3854 = vpop.f32.mrf.mxu0
        %v3855 = vpop.f32.mrf.mxu0
        %3856 = vdwg.mxu0
        %s3857 = scalar_lea.vmem %s51, 4
        %v3858 = vld [vmem:[%s3857] sm:$0x1]
        %v3859 = vmul.f32 %v3852, %v3858
        %s3860 = scalar_lea.vmem %s53, 4
        %v3861 = vld [vmem:[%s3860] sm:$0x1]
        %v3862 = vadd.f32 %v3859, %v3861
        %s3863 = scalar_lea.vmem %s55, 64
        %v3864 = vld [vmem:[%s3863] sm:$0xf]
        %v3865 = vld [vmem:[%s3863 + $0x4] sm:$0xf]
        %v3866 = vld [vmem:[%s3863 + $0x8] sm:$0xf]
        %v3867 = vld [vmem:[%s3863 + $0xc] sm:$0xf]
        %v3868 = vpack.c.bf16 %v3862, %v3862
        %s3869 = scalar_lea.vmem %s57, 4
        %v3870 = vld [vmem:[%s3869] sm:$0x1]
        %v3875 = vunpack.c.l.b16 %v3864
        %v3876 = vunpack.c.l.b16 %v3865
        %v3877 = vunpack.c.l.b16 %v3866
        %v3878 = vunpack.c.l.b16 %v3867
        %v3879 = vpack.c.b16 %v3876, %v3875
        %v3880 = vpack.c.b16 %v3878, %v3877
        %v3884 = vsel %vm3281, %v3868, 0
        %3886 = vmatprep.subr.bf16.mxu0 0
        %3887 = vmatpush1.bf16.msra.mxu0 0
        %3888 = vmatprep.subr.bf16.mxu0 0
        %3889 = vmatpush1.bf16.msra.mxu0 0
        %3890 = vmatprep.subr.bf16.mxu0 0
        %3891 = vmatpush1.bf16.msra.mxu0 0
        %3892 = vmatprep.subr.bf16.mxu0 0
        %3893 = vmatpush1.bf16.msra.mxu0 0
        %3894 = vmatprep.subr.bf16.mxu0 0
        %3895 = vmatpush1.bf16.msra.mxu0 0
        %3896 = vmatprep.subr.bf16.mxu0 0
        %3897 = vmatpush1.bf16.msra.mxu0 0
        %3898 = vmatprep.subr.bf16.mxu0 0
        %3899 = vmatpush1.bf16.msra.mxu0 %v3880
        %3900 = vmatprep.subr.bf16.mxu0 0
        %3901 = vmatpush1.bf16.msra.mxu0 %v3879
        %3902 = vmatprep.subr.bf16.mxu0 0
        %3903 = vmatpush2.bf16.msra.mxu0 0
        %3904 = vmatprep.subr.bf16.mxu0 0
        %3905 = vmatpush2.bf16.msra.mxu0 0
        %3906 = vmatprep.subr.bf16.mxu0 0
        %3907 = vmatpush2.bf16.msra.mxu0 0
        %3908 = vmatprep.subr.bf16.mxu0 0
        %3909 = vmatpush2.bf16.msra.mxu0 0
        %3910 = vmatprep.subr.bf16.mxu0 0
        %3911 = vmatpush2.bf16.msra.mxu0 0
        %3912 = vmatprep.subr.bf16.mxu0 0
        %3913 = vmatpush2.bf16.msra.mxu0 0
        %3914 = vmatprep.subr.bf16.mxu0 0
        %3915 = vmatpush2.bf16.msra.mxu0 0
        %3916 = vmatprep.subr.bf16.mxu0 0
        %3917 = vmatpush2.bf16.msra.mxu0 0
        %3918 = vmatprep.mubr.bf16.mxu0 0
        %3919 = vmatmul.mubr.bf16.gmra.mxu0 %v3884
        %v3920 = vpop.f32.mrf.mxu0
        %v3921 = vadd.f32 %v3870, %v3920
        %v3922 = vpop.f32.mrf.mxu0
        %v3923 = vpop.f32.mrf.mxu0
        %v3924 = vpop.f32.mrf.mxu0
        %3925 = vdwg.mxu0
        %3926 = vst.msk [vmem:[#allocation4 + $0x4] sm:$0x1] %vm3325, %v3921
        %v3927 = vld [vmem:[#allocation3 + $0x5] sm:$0x1]
        %s3928 = scalar_lea.vmem %s47, 160
        %v3929 = vld [vmem:[%s3928] sm:$0xf]
        %v3930 = vld [vmem:[%s3928 + $0x4] sm:$0xf]
        %v3931 = vld [vmem:[%s3928 + $0x8] sm:$0xf]
        %v3932 = vld [vmem:[%s3928 + $0xc] sm:$0xf]
        %v3933 = vld [vmem:[%s3928 + $0x10] sm:$0xf]
        %v3934 = vld [vmem:[%s3928 + $0x14] sm:$0xf]
        %v3935 = vld [vmem:[%s3928 + $0x18] sm:$0xf]
        %v3936 = vld [vmem:[%s3928 + $0x1c] sm:$0xf]
        %v3937 = vpack.c.bf16 %v3927, %v3927
        %s3938 = scalar_lea.vmem %s49, 5
        %v3939 = vld [vmem:[%s3938] sm:$0x1]
        %v3948 = vunpack.c.l.b16 %v3929
        %v3949 = vunpack.c.l.b16 %v3930
        %v3950 = vunpack.c.l.b16 %v3931
        %v3951 = vunpack.c.l.b16 %v3932
        %v3952 = vunpack.c.l.b16 %v3933
        %v3953 = vunpack.c.l.b16 %v3934
        %v3954 = vunpack.c.l.b16 %v3935
        %v3955 = vunpack.c.l.b16 %v3936
        %v3956 = vpack.c.b16 %v3949, %v3948
        %v3957 = vpack.c.b16 %v3951, %v3950
        %v3958 = vpack.c.b16 %v3953, %v3952
        %v3959 = vpack.c.b16 %v3955, %v3954
        %v3965 = vsel %vm1781, %v3937, 0
        %3967 = vmatprep.subr.bf16.mxu0 0
        %3968 = vmatpush1.bf16.msra.mxu0 0
        %3969 = vmatprep.subr.bf16.mxu0 0
        %3970 = vmatpush1.bf16.msra.mxu0 0
        %3971 = vmatprep.subr.bf16.mxu0 0
        %3972 = vmatpush1.bf16.msra.mxu0 0
        %3973 = vmatprep.subr.bf16.mxu0 0
        %3974 = vmatpush1.bf16.msra.mxu0 0
        %3975 = vmatprep.subr.bf16.mxu0 0
        %3976 = vmatpush1.bf16.msra.mxu0 %v3959
        %3977 = vmatprep.subr.bf16.mxu0 0
        %3978 = vmatpush1.bf16.msra.mxu0 %v3958
        %3979 = vmatprep.subr.bf16.mxu0 0
        %3980 = vmatpush1.bf16.msra.mxu0 %v3957
        %3981 = vmatprep.subr.bf16.mxu0 0
        %3982 = vmatpush1.bf16.msra.mxu0 %v3956
        %3983 = vmatprep.subr.bf16.mxu0 0
        %3984 = vmatpush2.bf16.msra.mxu0 0
        %3985 = vmatprep.subr.bf16.mxu0 0
        %3986 = vmatpush2.bf16.msra.mxu0 0
        %3987 = vmatprep.subr.bf16.mxu0 0
        %3988 = vmatpush2.bf16.msra.mxu0 0
        %3989 = vmatprep.subr.bf16.mxu0 0
        %3990 = vmatpush2.bf16.msra.mxu0 0
        %3991 = vmatprep.subr.bf16.mxu0 0
        %3992 = vmatpush2.bf16.msra.mxu0 0
        %3993 = vmatprep.subr.bf16.mxu0 0
        %3994 = vmatpush2.bf16.msra.mxu0 0
        %3995 = vmatprep.subr.bf16.mxu0 0
        %3996 = vmatpush2.bf16.msra.mxu0 0
        %3997 = vmatprep.subr.bf16.mxu0 0
        %3998 = vmatpush2.bf16.msra.mxu0 0
        %3999 = vmatprep.mubr.bf16.mxu0 0
        %4000 = vmatmul.mubr.bf16.gmra.mxu0 %v3965
        %v4001 = vpop.f32.mrf.mxu0
        %v4002 = vadd.f32 %v3939, %v4001
        %v4003 = vpop.f32.mrf.mxu0
        %v4004 = vpop.f32.mrf.mxu0
        %v4005 = vpop.f32.mrf.mxu0
        %4006 = vdwg.mxu0
        %s4007 = scalar_lea.vmem %s51, 5
        %v4008 = vld [vmem:[%s4007] sm:$0x1]
        %v4009 = vmul.f32 %v4002, %v4008
        %s4010 = scalar_lea.vmem %s53, 5
        %v4011 = vld [vmem:[%s4010] sm:$0x1]
        %v4012 = vadd.f32 %v4009, %v4011
        %s4013 = scalar_lea.vmem %s55, 80
        %v4014 = vld [vmem:[%s4013] sm:$0xf]
        %v4015 = vld [vmem:[%s4013 + $0x4] sm:$0xf]
        %v4016 = vld [vmem:[%s4013 + $0x8] sm:$0xf]
        %v4017 = vld [vmem:[%s4013 + $0xc] sm:$0xf]
        %v4018 = vpack.c.bf16 %v4012, %v4012
        %s4019 = scalar_lea.vmem %s57, 5
        %v4020 = vld [vmem:[%s4019] sm:$0x1]
        %v4025 = vunpack.c.l.b16 %v4014
        %v4026 = vunpack.c.l.b16 %v4015
        %v4027 = vunpack.c.l.b16 %v4016
        %v4028 = vunpack.c.l.b16 %v4017
        %v4029 = vpack.c.b16 %v4026, %v4025
        %v4030 = vpack.c.b16 %v4028, %v4027
        %v4034 = vsel %vm3281, %v4018, 0
        %4036 = vmatprep.subr.bf16.mxu0 0
        %4037 = vmatpush1.bf16.msra.mxu0 0
        %4038 = vmatprep.subr.bf16.mxu0 0
        %4039 = vmatpush1.bf16.msra.mxu0 0
        %4040 = vmatprep.subr.bf16.mxu0 0
        %4041 = vmatpush1.bf16.msra.mxu0 0
        %4042 = vmatprep.subr.bf16.mxu0 0
        %4043 = vmatpush1.bf16.msra.mxu0 0
        %4044 = vmatprep.subr.bf16.mxu0 0
        %4045 = vmatpush1.bf16.msra.mxu0 0
        %4046 = vmatprep.subr.bf16.mxu0 0
        %4047 = vmatpush1.bf16.msra.mxu0 0
        %4048 = vmatprep.subr.bf16.mxu0 0
        %4049 = vmatpush1.bf16.msra.mxu0 %v4030
        %4050 = vmatprep.subr.bf16.mxu0 0
        %4051 = vmatpush1.bf16.msra.mxu0 %v4029
        %4052 = vmatprep.subr.bf16.mxu0 0
        %4053 = vmatpush2.bf16.msra.mxu0 0
        %4054 = vmatprep.subr.bf16.mxu0 0
        %4055 = vmatpush2.bf16.msra.mxu0 0
        %4056 = vmatprep.subr.bf16.mxu0 0
        %4057 = vmatpush2.bf16.msra.mxu0 0
        %4058 = vmatprep.subr.bf16.mxu0 0
        %4059 = vmatpush2.bf16.msra.mxu0 0
        %4060 = vmatprep.subr.bf16.mxu0 0
        %4061 = vmatpush2.bf16.msra.mxu0 0
        %4062 = vmatprep.subr.bf16.mxu0 0
        %4063 = vmatpush2.bf16.msra.mxu0 0
        %4064 = vmatprep.subr.bf16.mxu0 0
        %4065 = vmatpush2.bf16.msra.mxu0 0
        %4066 = vmatprep.subr.bf16.mxu0 0
        %4067 = vmatpush2.bf16.msra.mxu0 0
        %4068 = vmatprep.mubr.bf16.mxu0 0
        %4069 = vmatmul.mubr.bf16.gmra.mxu0 %v4034
        %v4070 = vpop.f32.mrf.mxu0
        %v4071 = vadd.f32 %v4020, %v4070
        %v4072 = vpop.f32.mrf.mxu0
        %v4073 = vpop.f32.mrf.mxu0
        %v4074 = vpop.f32.mrf.mxu0
        %4075 = vdwg.mxu0
        %4076 = vst.msk [vmem:[#allocation4 + $0x5] sm:$0x1] %vm3325, %v4071
        %v4077 = vld [vmem:[#allocation4] sm:$0x3f]
        %vm4078 = vcmask 78848
        %4079 = vst.msk [vmem:[%s1146] sm:$0x3f] %vm4078, %v4077
      $region144: #{fsra_forward.1} parent=135 // pred_fallthru
        _
      %p4080 = scmp.lt.s32.totalorder %s77, 3
      %s4081 = scalar_select %p4080, %s77, 3
      %s4082 = smul.addr %s4081, 8
      %s4083 = scalar_lea.vmem %s59, %s4082
      %p4084 = scmp.lt.s32.totalorder %s77, 3
      %s4085 = scalar_select %p4084, %s77, 3
      %s4086 = smul.addr %s4085, 8
      %s4087 = scalar_lea.vmem %s61, %s4086
      // Predicated region
      $region145: #{fsra_forward.1} parent=135 // pred_check
        %p4088 = pneg %p777
      $region146: #{fsra_forward.1} parent=135 // pred_check_branch
        %4090 = sbr.rel (%p4088) target = $region148
      $region147: #{fsra_forward.1} parent=135 // pred_region
        _
      $region148: #{fsra_forward.1} parent=135 // pred_fallthru
        _
      // Predicated region
      $region149: #{fsra_forward.1} parent=135 // pred_check
        %p4091 = pneg %p803
      $region150: #{fsra_forward.1} parent=135 // pred_check_branch
        %4093 = sbr.rel (%p4091) target = $region152
      $region151: #{fsra_forward.1} parent=135 // pred_region
        _
      $region152: #{fsra_forward.1} parent=135 // pred_fallthru
        _
    $region136: #{fsra_forward.1} parent=5 // pred_fallthru
      _
    %p4094 = scmp.le.s32.totalorder 2, %s68
    // Predicated region
    $region153: #{fsra_forward.1} parent=5 // pred_check
      %p4095 = pneg %p4094
    $region154: #{fsra_forward.1} parent=5 // pred_check_branch
      %4097 = sbr.rel (%p4095) target = $region156
    $region155: #{fsra_forward.1} parent=5 // pred_region
      %s4098 = ssub.s32 %s68, 2
      // Predicated region
      $region157: #{fsra_forward.1} parent=155 // pred_check
        %p4099 = pneg %p783
      $region158: #{fsra_forward.1} parent=155 // pred_check_branch
        %4101 = sbr.rel (%p4099) target = $region160
      $region159: #{fsra_forward.1} parent=155 // pred_region
        %p4102 = scmp.lt.s32.totalorder %s79, 3
        %s4103 = scalar_select %p4102, %s79, 3
        %s4104 = smul.addr %s4103, 8
        %s4105 = scalar_lea.vmem %s59, %s4104
      $region160: #{fsra_forward.1} parent=155 // pred_fallthru
        _
      // Predicated region
      $region161: #{fsra_forward.1} parent=155 // pred_check
        %p4106 = pneg %p809
      $region162: #{fsra_forward.1} parent=155 // pred_check_branch
        %4108 = sbr.rel (%p4106) target = $region164
      $region163: #{fsra_forward.1} parent=155 // pred_region
        %p4109 = scmp.lt.s32.totalorder %s79, 3
        %s4110 = scalar_select %p4109, %s79, 3
        %s4111 = smul.addr %s4110, 8
        %s4112 = scalar_lea.vmem %s61, %s4111
      $region164: #{fsra_forward.1} parent=155 // pred_fallthru
        _
    $region156: #{fsra_forward.1} parent=5 // pred_fallthru
      _
  $region6: #{fsra_forward.1} parent=0 // loop_footer
    %s72 = sadd.s32 1, %s68
  $region7: #{fsra_forward.1} parent=0 // loop_footer_branch
    %67 = sbr.rel target = $region3
  $region8: #{fsra_forward.1} parent=0 // loop_exit
    _

</llo_original>
